<compile_context>
chip_gen: v7x
topology: tpu7x:2x2x1
jax: 0.10.0
libtpu: 0.0.40
codegen_flags: <defaults>
</compile_context>

<pallas_src>
import jax
import jax.numpy as jnp
from jax import lax
from jax.experimental import pallas as pl
from jax.experimental.pallas import tpu as pltpu


# ----------------------------- Pallas kernel --------------------------------
def res_layer_kernel(x_ref, w1_ref, b1_ref, w2_ref, b2_ref, o_ref):
    # x_ref: (1, H, W, C) f32; w1_ref: (C, Cm) bf16; b1_ref: (1, Cm) f32
    # w2_ref: (9, Cm, C) bf16 (HWIO taps flattened, t = ky*3 + kx)
    # b2_ref: (1, C) f32; o_ref: (1, H, W, C) f32
    x = x_ref[0]                                        # (H, W, C) f32
    H, W, C = x.shape
    Cm = w1_ref.shape[1]

    # --- layer1: 1x1 conv (+folded BN) + LeakyReLU(0.1) ---------------------
    xf = x.reshape(H * W, C)                            # tile-aligned reshape
    y = jnp.dot(xf.astype(jnp.bfloat16), w1_ref[...],
                preferred_element_type=jnp.float32)     # (H*W, Cm) f32
    y = y + b1_ref[...]
    y = jnp.where(y >= 0.0, y, 0.1 * y)                 # LeakyReLU(0.1)
    y3 = y.reshape(H, W, Cm).astype(jnp.bfloat16)       # bf16 MXU operand

    # --- layer2: 3x3 "same" conv (+folded BN) + LeakyReLU(0.1) --------------
    # out[h, w, o] = sum_{ky,kx,c} w2[ky,kx,c,o] * y3[h+ky-1, w+kx-1, c]
    zero_col = jnp.zeros((H, 1, Cm), jnp.bfloat16)
    y3w = jnp.concatenate([zero_col, y3, zero_col], axis=1)   # (H, W+2, Cm)
    zero_row = jnp.zeros((1, W, Cm), jnp.bfloat16)

    acc = jnp.zeros((H * W, C), jnp.float32)
    for kx in range(3):                                  # W (sublane) tap
        sw = y3w[:, kx:kx + W, :]                        # (H, W, Cm)
        swp = jnp.concatenate([zero_row, sw, zero_row], axis=0)  # (H+2, W, Cm)
        for ky in range(3):                              # H (major) tap
            tap = swp[ky:ky + H]                         # (H, W, Cm)
            acc = acc + jnp.dot(tap.reshape(H * W, Cm),
                                w2_ref[ky * 3 + kx],
                                preferred_element_type=jnp.float32)
    z = acc + b2_ref[...]
    z = jnp.where(z >= 0.0, z, 0.1 * z)                  # LeakyReLU(0.1)

    # --- residual add (exact, f32) ------------------------------------------
    o_ref[0] = (xf + z).reshape(H, W, C).astype(o_ref.dtype)


# ----------------------------- wrapper ---------------------------------------
def res_layer_pallas(x_nhwc, w1, b1, w2_hwio, b2):
    """ResLayer forward.  x_nhwc: (N, H, W, C) f32 (channels-last, TPU native).

    w1: (C, C//2) bf16, b1: (1, C//2) f32   -- conv1 with BN folded in
    w2_hwio: (3, 3, C//2, C) bf16, b2: (1, C) f32 -- conv2 with BN folded in
    Returns (N, H, W, C) f32.  (An NCHW adapter would just transpose here.)
    """
    N, H, W, C = x_nhwc.shape
    Cm = w1.shape[1]
    w2t = w2_hwio.reshape(9, Cm, C)                      # tap-major layout

    return pl.pallas_call(
        res_layer_kernel,
        out_shape=jax.ShapeDtypeStruct((N, H, W, C), jnp.float32),
        grid_spec=pltpu.PrefetchScalarGridSpec(
            num_scalar_prefetch=0,
            grid=(N,),
            in_specs=[
                pl.BlockSpec((1, H, W, C), lambda n: (n, 0, 0, 0)),
                pl.BlockSpec((C, Cm), lambda n: (0, 0)),
                pl.BlockSpec((1, Cm), lambda n: (0, 0)),
                pl.BlockSpec((9, Cm, C), lambda n: (0, 0, 0)),
                pl.BlockSpec((1, C), lambda n: (0, 0)),
            ],
            out_specs=pl.BlockSpec((1, H, W, C), lambda n: (n, 0, 0, 0)),
        ),
        compiler_params=pltpu.CompilerParams(
            dimension_semantics=("parallel",),
            vmem_limit_bytes=48 * 1024 * 1024),
    )(x_nhwc, w1, b1, w2t, b2)


# ----------------------------- reference (plain JAX, NHWC) -------------------
def res_layer_ref(x, w1, b1, w2_hwio, b2):
    w1f = w1.astype(jnp.float32)
    w2f = w2_hwio.astype(jnp.float32)
    y = jnp.einsum('nhwc,cm->nhwm', x, w1f,
                   precision=lax.Precision.HIGHEST) + b1.reshape(1, 1, 1, -1)
    y = jnp.where(y >= 0.0, y, 0.1 * y)
    z = lax.conv_general_dilated(
        y, w2f, window_strides=(1, 1), padding='SAME',
        dimension_numbers=('NHWC', 'HWIO', 'NHWC'),
        precision=lax.Precision.HIGHEST)
    z = z + b2.reshape(1, 1, 1, -1)
    z = jnp.where(z >= 0.0, z, 0.1 * z)
    return x + z


# ----------------------------- parameter setup -------------------------------
def make_params(key, in_channels):
    """Synthetic ResLayer params with eval-mode BatchNorm folded into conv w/b.

    Weights are returned in bf16 (MXU operand dtype); biases stay f32.
    """
    mid = in_channels // 2
    eps = 1e-5
    ks = jax.random.split(key, 10)

    # layer1: 1x1 conv (no bias) + BN
    w1_raw = (1.0 / jnp.sqrt(in_channels)) * jax.random.normal(
        ks[0], (in_channels, mid), jnp.float32)
    g1 = 1.0 + 0.1 * jax.random.normal(ks[1], (mid,), jnp.float32)
    beta1 = 0.1 * jax.random.normal(ks[2], (mid,), jnp.float32)
    mu1 = 0.1 * jax.random.normal(ks[3], (mid,), jnp.float32)
    var1 = jax.random.uniform(ks[4], (mid,), jnp.float32, 0.5, 1.5)
    s1 = g1 / jnp.sqrt(var1 + eps)
    w1 = (w1_raw * s1[None, :]).astype(jnp.bfloat16)
    b1 = (beta1 - mu1 * s1).reshape(1, mid)

    # layer2: 3x3 conv (no bias) + BN, HWIO layout (ky, kx, cin, cout)
    fan2 = 9 * mid
    w2_raw = (1.0 / jnp.sqrt(fan2)) * jax.random.normal(
        ks[5], (3, 3, mid, in_channels), jnp.float32)
    g2 = 1.0 + 0.1 * jax.random.normal(ks[6], (in_channels,), jnp.float32)
    beta2 = 0.1 * jax.random.normal(ks[7], (in_channels,), jnp.float32)
    mu2 = 0.1 * jax.random.normal(ks[8], (in_channels,), jnp.float32)
    var2 = jax.random.uniform(ks[9], (in_channels,), jnp.float32, 0.5, 1.5)
    s2 = g2 / jnp.sqrt(var2 + eps)
    w2 = (w2_raw * s2[None, None, None, :]).astype(jnp.bfloat16)
    b2 = (beta2 - mu2 * s2).reshape(1, in_channels)

    return w1, b1, w2, b2


if __name__ == "__main__":
    # Small but lane/sublane-aligned: C=256 (Cmid=128) multiples of 128, W=16.
    N, H, W, Cin = 2, 16, 16, 256

    key = jax.random.PRNGKey(0)
    kx, kp = jax.random.split(key)
    x = jax.random.normal(kx, (N, H, W, Cin), jnp.float32)     # NHWC
    w1, b1, w2, b2 = make_params(kp, Cin)

    out = res_layer_pallas(x, w1, b1, w2, b2)
    out = jax.block_until_ready(out)

    ref = res_layer_ref(x, w1, b1, w2, b2)
    assert out.shape == (N, H, W, Cin)
    max_err = float(jnp.max(jnp.abs(out - ref)))
    # bf16 MXU operands vs f32 reference -> loose tolerance
    assert jnp.allclose(out, ref, atol=5e-2, rtol=5e-2), max_err

    print("KERNEL_OK")
</pallas_src>

<mosaic_0001>
module attributes {stable_mosaic.version = 11 : i64} {
  func.func @res_layer_kernel(%arg0: i32, %arg1: memref<1x16x16x256xf32, #tpu.memory_space<vmem>>, %arg2: memref<256x128xbf16, #tpu.memory_space<vmem>>, %arg3: memref<1x128xf32, #tpu.memory_space<vmem>>, %arg4: memref<9x128x256xbf16, #tpu.memory_space<vmem>>, %arg5: memref<1x256xf32, #tpu.memory_space<vmem>>, %arg6: memref<1x16x16x256xf32, #tpu.memory_space<vmem>>) attributes {dimension_semantics = [#tpu.dimension_semantics<parallel>], iteration_bounds = array<i64: 2>, scalar_prefetch = 0 : i64, scratch_operands = 0 : i64, tpu.core_type = #tpu.core_type<tc>, window_params = [{transform_indices = @transform_0, window_bounds = array<i64: 1, 16, 16, 256>}, {pipeline_mode = #tpu.pipeline_mode<synchronous>, transform_indices = @transform_1, window_bounds = array<i64: 256, 128>}, {pipeline_mode = #tpu.pipeline_mode<synchronous>, transform_indices = @transform_2, window_bounds = array<i64: 1, 128>}, {pipeline_mode = #tpu.pipeline_mode<synchronous>, transform_indices = @transform_3, window_bounds = array<i64: 9, 128, 256>}, {pipeline_mode = #tpu.pipeline_mode<synchronous>, transform_indices = @transform_4, window_bounds = array<i64: 1, 256>}, {transform_indices = @transform_5, window_bounds = array<i64: 1, 16, 16, 256>}]} {
    %c0 = arith.constant 0 : index
    %c0_0 = arith.constant 0 : index
    %c0_1 = arith.constant 0 : index
    %c0_2 = arith.constant 0 : index
    %0 = vector.load %arg1[%c0, %c0_0, %c0_1, %c0_2] : memref<1x16x16x256xf32, #tpu.memory_space<vmem>>, vector<1x16x16x256xf32>
    %1 = vector.shape_cast %0 : vector<1x16x16x256xf32> to vector<16x16x256xf32>
    %2 = vector.shape_cast %1 : vector<16x16x256xf32> to vector<256x256xf32>
    %3 = arith.truncf %2 : vector<256x256xf32> to vector<256x256xbf16>
    %c0_3 = arith.constant 0 : index
    %c0_4 = arith.constant 0 : index
    %4 = vector.load %arg2[%c0_3, %c0_4] : memref<256x128xbf16, #tpu.memory_space<vmem>>, vector<256x128xbf16>
    %cst = arith.constant dense<0.000000e+00> : vector<256x128xf32>
    %5 = tpu.matmul %3, %4, %cst {dimension_numbers = #tpu.dot_dimension_numbers<[1], [0], [0], [1], [0, 0, 1, 1], [], []>} : vector<256x256xbf16>, vector<256x128xbf16>, vector<256x128xf32> -> vector<256x128xf32>
    %c0_5 = arith.constant 0 : index
    %c0_6 = arith.constant 0 : index
    %6 = vector.load %arg3[%c0_5, %c0_6] : memref<1x128xf32, #tpu.memory_space<vmem>>, vector<1x128xf32>
    %7 = vector.broadcast %6 : vector<1x128xf32> to vector<256x128xf32>
    %8 = arith.addf %5, %7 : vector<256x128xf32>
    %cst_7 = arith.constant 0.000000e+00 : f32
    %9 = vector.broadcast %cst_7 : f32 to vector<256x128xf32>
    %10 = arith.cmpf oge, %8, %9 : vector<256x128xf32>
    %cst_8 = arith.constant 1.000000e-01 : f32
    %11 = vector.broadcast %cst_8 : f32 to vector<256x128xf32>
    %12 = arith.mulf %11, %8 : vector<256x128xf32>
    %13 = arith.select %10, %8, %12 : vector<256x128xi1>, vector<256x128xf32>
    %14 = vector.shape_cast %13 : vector<256x128xf32> to vector<16x16x128xf32>
    %15 = arith.truncf %14 : vector<16x16x128xf32> to vector<16x16x128xbf16>
    %cst_9 = arith.constant 0.000000e+00 : bf16
    %16 = vector.broadcast %cst_9 : bf16 to vector<16x1x128xbf16>
    %17 = tpu.concatenate %16, %15, %16 in 1 : vector<16x1x128xbf16>, vector<16x16x128xbf16>, vector<16x1x128xbf16> -> vector<16x18x128xbf16>
    %cst_10 = arith.constant 0.000000e+00 : bf16
    %18 = vector.broadcast %cst_10 : bf16 to vector<1x16x128xbf16>
    %cst_11 = arith.constant 0.000000e+00 : f32
    %19 = vector.broadcast %cst_11 : f32 to vector<256x256xf32>
    %20 = vector.extract_strided_slice %17 {offsets = [0, 0, 0], sizes = [16, 16, 128], strides = [1, 1, 1]} : vector<16x18x128xbf16> to vector<16x16x128xbf16>
    %21 = tpu.concatenate %18, %20, %18 in 0 : vector<1x16x128xbf16>, vector<16x16x128xbf16>, vector<1x16x128xbf16> -> vector<18x16x128xbf16>
    %22 = vector.extract_strided_slice %21 {offsets = [0, 0, 0], sizes = [16, 16, 128], strides = [1, 1, 1]} : vector<18x16x128xbf16> to vector<16x16x128xbf16>
    %23 = vector.shape_cast %22 : vector<16x16x128xbf16> to vector<256x128xbf16>
    %c0_12 = arith.constant 0 : index
    %c0_13 = arith.constant 0 : index
    %c0_14 = arith.constant 0 : index
    %24 = vector.load %arg4[%c0_12, %c0_13, %c0_14] : memref<9x128x256xbf16, #tpu.memory_space<vmem>>, vector<1x128x256xbf16>
    %25 = vector.shape_cast %24 : vector<1x128x256xbf16> to vector<128x256xbf16>
    %cst_15 = arith.constant dense<0.000000e+00> : vector<256x256xf32>
    %26 = tpu.matmul %23, %25, %cst_15 {dimension_numbers = #tpu.dot_dimension_numbers<[1], [0], [0], [1], [0, 0, 1, 1], [], []>} : vector<256x128xbf16>, vector<128x256xbf16>, vector<256x256xf32> -> vector<256x256xf32>
    %27 = arith.addf %19, %26 : vector<256x256xf32>
    %28 = vector.extract_strided_slice %21 {offsets = [1, 0, 0], sizes = [16, 16, 128], strides = [1, 1, 1]} : vector<18x16x128xbf16> to vector<16x16x128xbf16>
    %29 = vector.shape_cast %28 : vector<16x16x128xbf16> to vector<256x128xbf16>
    %c3 = arith.constant 3 : index
    %c0_16 = arith.constant 0 : index
    %c0_17 = arith.constant 0 : index
    %30 = vector.load %arg4[%c3, %c0_16, %c0_17] : memref<9x128x256xbf16, #tpu.memory_space<vmem>>, vector<1x128x256xbf16>
    %31 = vector.shape_cast %30 : vector<1x128x256xbf16> to vector<128x256xbf16>
    %cst_18 = arith.constant dense<0.000000e+00> : vector<256x256xf32>
    %32 = tpu.matmul %29, %31, %cst_18 {dimension_numbers = #tpu.dot_dimension_numbers<[1], [0], [0], [1], [0, 0, 1, 1], [], []>} : vector<256x128xbf16>, vector<128x256xbf16>, vector<256x256xf32> -> vector<256x256xf32>
    %33 = arith.addf %27, %32 : vector<256x256xf32>
    %34 = vector.extract_strided_slice %21 {offsets = [2, 0, 0], sizes = [16, 16, 128], strides = [1, 1, 1]} : vector<18x16x128xbf16> to vector<16x16x128xbf16>
    %35 = vector.shape_cast %34 : vector<16x16x128xbf16> to vector<256x128xbf16>
    %c6 = arith.constant 6 : index
    %c0_19 = arith.constant 0 : index
    %c0_20 = arith.constant 0 : index
    %36 = vector.load %arg4[%c6, %c0_19, %c0_20] : memref<9x128x256xbf16, #tpu.memory_space<vmem>>, vector<1x128x256xbf16>
    %37 = vector.shape_cast %36 : vector<1x128x256xbf16> to vector<128x256xbf16>
    %cst_21 = arith.constant dense<0.000000e+00> : vector<256x256xf32>
    %38 = tpu.matmul %35, %37, %cst_21 {dimension_numbers = #tpu.dot_dimension_numbers<[1], [0], [0], [1], [0, 0, 1, 1], [], []>} : vector<256x128xbf16>, vector<128x256xbf16>, vector<256x256xf32> -> vector<256x256xf32>
    %39 = arith.addf %33, %38 : vector<256x256xf32>
    %40 = vector.extract_strided_slice %17 {offsets = [0, 1, 0], sizes = [16, 16, 128], strides = [1, 1, 1]} : vector<16x18x128xbf16> to vector<16x16x128xbf16>
    %41 = tpu.concatenate %18, %40, %18 in 0 : vector<1x16x128xbf16>, vector<16x16x128xbf16>, vector<1x16x128xbf16> -> vector<18x16x128xbf16>
    %42 = vector.extract_strided_slice %41 {offsets = [0, 0, 0], sizes = [16, 16, 128], strides = [1, 1, 1]} : vector<18x16x128xbf16> to vector<16x16x128xbf16>
    %43 = vector.shape_cast %42 : vector<16x16x128xbf16> to vector<256x128xbf16>
    %c1 = arith.constant 1 : index
    %c0_22 = arith.constant 0 : index
    %c0_23 = arith.constant 0 : index
    %44 = vector.load %arg4[%c1, %c0_22, %c0_23] : memref<9x128x256xbf16, #tpu.memory_space<vmem>>, vector<1x128x256xbf16>
    %45 = vector.shape_cast %44 : vector<1x128x256xbf16> to vector<128x256xbf16>
    %cst_24 = arith.constant dense<0.000000e+00> : vector<256x256xf32>
    %46 = tpu.matmul %43, %45, %cst_24 {dimension_numbers = #tpu.dot_dimension_numbers<[1], [0], [0], [1], [0, 0, 1, 1], [], []>} : vector<256x128xbf16>, vector<128x256xbf16>, vector<256x256xf32> -> vector<256x256xf32>
    %47 = arith.addf %39, %46 : vector<256x256xf32>
    %48 = vector.extract_strided_slice %41 {offsets = [1, 0, 0], sizes = [16, 16, 128], strides = [1, 1, 1]} : vector<18x16x128xbf16> to vector<16x16x128xbf16>
    %49 = vector.shape_cast %48 : vector<16x16x128xbf16> to vector<256x128xbf16>
    %c4 = arith.constant 4 : index
    %c0_25 = arith.constant 0 : index
    %c0_26 = arith.constant 0 : index
    %50 = vector.load %arg4[%c4, %c0_25, %c0_26] : memref<9x128x256xbf16, #tpu.memory_space<vmem>>, vector<1x128x256xbf16>
    %51 = vector.shape_cast %50 : vector<1x128x256xbf16> to vector<128x256xbf16>
    %cst_27 = arith.constant dense<0.000000e+00> : vector<256x256xf32>
    %52 = tpu.matmul %49, %51, %cst_27 {dimension_numbers = #tpu.dot_dimension_numbers<[1], [0], [0], [1], [0, 0, 1, 1], [], []>} : vector<256x128xbf16>, vector<128x256xbf16>, vector<256x256xf32> -> vector<256x256xf32>
    %53 = arith.addf %47, %52 : vector<256x256xf32>
    %54 = vector.extract_strided_slice %41 {offsets = [2, 0, 0], sizes = [16, 16, 128], strides = [1, 1, 1]} : vector<18x16x128xbf16> to vector<16x16x128xbf16>
    %55 = vector.shape_cast %54 : vector<16x16x128xbf16> to vector<256x128xbf16>
    %c7 = arith.constant 7 : index
    %c0_28 = arith.constant 0 : index
    %c0_29 = arith.constant 0 : index
    %56 = vector.load %arg4[%c7, %c0_28, %c0_29] : memref<9x128x256xbf16, #tpu.memory_space<vmem>>, vector<1x128x256xbf16>
    %57 = vector.shape_cast %56 : vector<1x128x256xbf16> to vector<128x256xbf16>
    %cst_30 = arith.constant dense<0.000000e+00> : vector<256x256xf32>
    %58 = tpu.matmul %55, %57, %cst_30 {dimension_numbers = #tpu.dot_dimension_numbers<[1], [0], [0], [1], [0, 0, 1, 1], [], []>} : vector<256x128xbf16>, vector<128x256xbf16>, vector<256x256xf32> -> vector<256x256xf32>
    %59 = arith.addf %53, %58 : vector<256x256xf32>
    %60 = vector.extract_strided_slice %17 {offsets = [0, 2, 0], sizes = [16, 16, 128], strides = [1, 1, 1]} : vector<16x18x128xbf16> to vector<16x16x128xbf16>
    %61 = tpu.concatenate %18, %60, %18 in 0 : vector<1x16x128xbf16>, vector<16x16x128xbf16>, vector<1x16x128xbf16> -> vector<18x16x128xbf16>
    %62 = vector.extract_strided_slice %61 {offsets = [0, 0, 0], sizes = [16, 16, 128], strides = [1, 1, 1]} : vector<18x16x128xbf16> to vector<16x16x128xbf16>
    %63 = vector.shape_cast %62 : vector<16x16x128xbf16> to vector<256x128xbf16>
    %c2 = arith.constant 2 : index
    %c0_31 = arith.constant 0 : index
    %c0_32 = arith.constant 0 : index
    %64 = vector.load %arg4[%c2, %c0_31, %c0_32] : memref<9x128x256xbf16, #tpu.memory_space<vmem>>, vector<1x128x256xbf16>
    %65 = vector.shape_cast %64 : vector<1x128x256xbf16> to vector<128x256xbf16>
    %cst_33 = arith.constant dense<0.000000e+00> : vector<256x256xf32>
    %66 = tpu.matmul %63, %65, %cst_33 {dimension_numbers = #tpu.dot_dimension_numbers<[1], [0], [0], [1], [0, 0, 1, 1], [], []>} : vector<256x128xbf16>, vector<128x256xbf16>, vector<256x256xf32> -> vector<256x256xf32>
    %67 = arith.addf %59, %66 : vector<256x256xf32>
    %68 = vector.extract_strided_slice %61 {offsets = [1, 0, 0], sizes = [16, 16, 128], strides = [1, 1, 1]} : vector<18x16x128xbf16> to vector<16x16x128xbf16>
    %69 = vector.shape_cast %68 : vector<16x16x128xbf16> to vector<256x128xbf16>
    %c5 = arith.constant 5 : index
    %c0_34 = arith.constant 0 : index
    %c0_35 = arith.constant 0 : index
    %70 = vector.load %arg4[%c5, %c0_34, %c0_35] : memref<9x128x256xbf16, #tpu.memory_space<vmem>>, vector<1x128x256xbf16>
    %71 = vector.shape_cast %70 : vector<1x128x256xbf16> to vector<128x256xbf16>
    %cst_36 = arith.constant dense<0.000000e+00> : vector<256x256xf32>
    %72 = tpu.matmul %69, %71, %cst_36 {dimension_numbers = #tpu.dot_dimension_numbers<[1], [0], [0], [1], [0, 0, 1, 1], [], []>} : vector<256x128xbf16>, vector<128x256xbf16>, vector<256x256xf32> -> vector<256x256xf32>
    %73 = arith.addf %67, %72 : vector<256x256xf32>
    %74 = vector.extract_strided_slice %61 {offsets = [2, 0, 0], sizes = [16, 16, 128], strides = [1, 1, 1]} : vector<18x16x128xbf16> to vector<16x16x128xbf16>
    %75 = vector.shape_cast %74 : vector<16x16x128xbf16> to vector<256x128xbf16>
    %c8 = arith.constant 8 : index
    %c0_37 = arith.constant 0 : index
    %c0_38 = arith.constant 0 : index
    %76 = vector.load %arg4[%c8, %c0_37, %c0_38] : memref<9x128x256xbf16, #tpu.memory_space<vmem>>, vector<1x128x256xbf16>
    %77 = vector.shape_cast %76 : vector<1x128x256xbf16> to vector<128x256xbf16>
    %cst_39 = arith.constant dense<0.000000e+00> : vector<256x256xf32>
    %78 = tpu.matmul %75, %77, %cst_39 {dimension_numbers = #tpu.dot_dimension_numbers<[1], [0], [0], [1], [0, 0, 1, 1], [], []>} : vector<256x128xbf16>, vector<128x256xbf16>, vector<256x256xf32> -> vector<256x256xf32>
    %79 = arith.addf %73, %78 : vector<256x256xf32>
    %c0_40 = arith.constant 0 : index
    %c0_41 = arith.constant 0 : index
    %80 = vector.load %arg5[%c0_40, %c0_41] : memref<1x256xf32, #tpu.memory_space<vmem>>, vector<1x256xf32>
    %81 = vector.broadcast %80 : vector<1x256xf32> to vector<256x256xf32>
    %82 = arith.addf %79, %81 : vector<256x256xf32>
    %cst_42 = arith.constant 0.000000e+00 : f32
    %83 = vector.broadcast %cst_42 : f32 to vector<256x256xf32>
    %84 = arith.cmpf oge, %82, %83 : vector<256x256xf32>
    %cst_43 = arith.constant 1.000000e-01 : f32
    %85 = vector.broadcast %cst_43 : f32 to vector<256x256xf32>
    %86 = arith.mulf %85, %82 : vector<256x256xf32>
    %87 = arith.select %84, %82, %86 : vector<256x256xi1>, vector<256x256xf32>
    %88 = arith.addf %2, %87 : vector<256x256xf32>
    %89 = vector.shape_cast %88 : vector<256x256xf32> to vector<16x16x256xf32>
    %c0_44 = arith.constant 0 : index
    %c0_45 = arith.constant 0 : index
    %c0_46 = arith.constant 0 : index
    %c0_47 = arith.constant 0 : index
    %90 = vector.load %arg6[%c0_44, %c0_45, %c0_46, %c0_47] : memref<1x16x16x256xf32, #tpu.memory_space<vmem>>, vector<1x16x16x256xf32>
    %91 = vector.shape_cast %90 : vector<1x16x16x256xf32> to vector<16x16x256xf32>
    %92 = vector.shape_cast %89 : vector<16x16x256xf32> to vector<1x16x16x256xf32>
    tpu.vector_store %arg6[%c0_44, %c0_45, %c0_46, %c0_47], %92 {strides = array<i32>} : memref<1x16x16x256xf32, #tpu.memory_space<vmem>>, vector<1x16x16x256xf32>,
    return
  }
  func.func @transform_0(%arg0: i32) -> (i32, i32, i32, i32) {
    %c0_i32 = arith.constant 0 : i32
    %c0_i32_0 = arith.constant 0 : i32
    %c0_i32_1 = arith.constant 0 : i32
    %c0_i32_2 = arith.constant 0 : i32
    return %arg0, %c0_i32, %c0_i32_0, %c0_i32_1 : i32, i32, i32, i32
  }
  func.func @transform_1(%arg0: i32) -> (i32, i32) {
    %c0_i32 = arith.constant 0 : i32
    %c0_i32_0 = arith.constant 0 : i32
    %c0_i32_1 = arith.constant 0 : i32
    return %c0_i32, %c0_i32_0 : i32, i32
  }
  func.func @transform_2(%arg0: i32) -> (i32, i32) {
    %c0_i32 = arith.constant 0 : i32
    %c0_i32_0 = arith.constant 0 : i32
    %c0_i32_1 = arith.constant 0 : i32
    return %c0_i32, %c0_i32_0 : i32, i32
  }
  func.func @transform_3(%arg0: i32) -> (i32, i32, i32) {
    %c0_i32 = arith.constant 0 : i32
    %c0_i32_0 = arith.constant 0 : i32
    %c0_i32_1 = arith.constant 0 : i32
    %c0_i32_2 = arith.constant 0 : i32
    return %c0_i32, %c0_i32_0, %c0_i32_1 : i32, i32, i32
  }
  func.func @transform_4(%arg0: i32) -> (i32, i32) {
    %c0_i32 = arith.constant 0 : i32
    %c0_i32_0 = arith.constant 0 : i32
    %c0_i32_1 = arith.constant 0 : i32
    return %c0_i32, %c0_i32_0 : i32, i32
  }
  func.func @transform_5(%arg0: i32) -> (i32, i32, i32, i32) {
    %c0_i32 = arith.constant 0 : i32
    %c0_i32_0 = arith.constant 0 : i32
    %c0_i32_1 = arith.constant 0 : i32
    %c0_i32_2 = arith.constant 0 : i32
    return %arg0, %c0_i32, %c0_i32_0, %c0_i32_1 : i32, i32, i32, i32
  }
}

</mosaic_0001>

<llo_original>
// kernel: tpu_custom_call.1
$region0: #{tpu_custom_call.1}
  #allocation0 [shape = 'u32[]', space=smem, size = 0x4, offset = 0x4, fixed_abs, tag = 'smem constant byte address 0x4 - core index']
  #allocation1 [shape = 'u32[144,128]{1,0:T(1,128)}', space=vmem, size = 0x12000, scoped, tag = 'internal scratch']
  %s0 = inlined_call_operand.hbm [shape: f32[2,16,16,256], index: 0, kind: input, shape index: {}]
  %s1 = inlined_call_operand.hbm [shape: bf16[256,128], index: 1, kind: input, shape index: {}]
  %s2 = inlined_call_operand.vmem [shape: f32[1,128], index: 2, kind: input, shape index: {}]
  %s3 = inlined_call_operand.hbm [shape: bf16[9,128,256], index: 3, kind: input, shape index: {}]
  %s4 = inlined_call_operand.vmem [shape: f32[1,256], index: 4, kind: input, shape index: {}]
  %s5 = inlined_call_operand.hbm [shape: f32[2,16,16,256], index: 5, kind: output, shape index: {}]
  %s6 = sld [smem:[#allocation0]]
  $region65: #{tpu_custom_call.1} parent=0
    _
  %s8 = ssub.s32 1, %s6
  %s9 = scalar_select 0, %s8, %s6
  $region1: #{tpu_custom_call.1} parent=0
    #allocation2 [shape = 'u8[524288]{0}', space=vmem, size = 0x80000, scoped, tag = 'input window, operand 0']
    #allocation3 [shape = 's32[2]{0}', space=sflag, size = 0x8, scoped, tag = 'scoped memory for tpu_custom_call.1']
    #allocation4 [shape = 's32[2]{0}', space=sflag, size = 0x8, scoped, tag = 'scoped memory for tpu_custom_call.1']
    #allocation5 [shape = 'u8[65536]{0}', space=vmem, size = 0x10000, scoped, tag = 'input window, operand 1, single buffered']
    #allocation6 [shape = 's32[1]{0}', space=sflag, size = 0x4, scoped, tag = 'scoped memory for tpu_custom_call.1']
    #allocation7 [shape = 'u8[589824]{0}', space=vmem, size = 0x90000, scoped, tag = 'input window, operand 3, single buffered']
    #allocation8 [shape = 'u8[524288]{0}', space=vmem, size = 0x80000, scoped, tag = 'output window, operand 0']
    %10 = vsyncpa [#allocation3], 0
    %s11 = scalar_lea.sflag [#allocation3], 1
    %12 = vsyncpa %s11, 0
    %13 = vsyncpa [#allocation6], 0
    %14 = vsyncpa [#allocation4], 0
    %s15 = scalar_lea.sflag [#allocation4], 1
    %16 = vsyncpa %s15, 0
    loop: start=0, step=1, limit=4
    $region2: #{tpu_custom_call.1} parent=1 // loop_pre_header
      _
    $region3: #{tpu_custom_call.1} parent=1 // loop_header
      %s18 = sphi 0, %s22
      %p19 = scmp.ge.s32.totalorder %s18, 4
      %s28 = sphi 0, %s30
      %s31 = sphi 0, %s28
      %s32 = sphi 0, %s31
      %s48 = sphi 0, %s32
      %s52 = sphi 0, %s52
      %s54 = sphi 0, %s52
      %s55 = sphi 0, %s54
      %s69 = sphi 0, %s55
      %s73 = sphi 0, %s73
      %s75 = sphi 0, %s73
      %s76 = sphi 0, %s75
      %s90 = sphi 0, %s76
      %s94 = sphi 0, %s94
      %s96 = sphi 0, %s94
      %s97 = sphi 0, %s96
      %s111 = sphi 0, %s97
      %s115 = sphi 0, %s115
      %s117 = sphi 0, %s115
      %s118 = sphi 0, %s117
      %s132 = sphi 0, %s118
      %s138 = sphi 0, %s140
      %s141 = sphi 0, %s138
      %s142 = sphi 0, %s141
      %s158 = sphi 0, %s142
    $region4: #{tpu_custom_call.1} parent=1 // loop_header_branch
      %21 = sbr.rel (%p19) target = $region8
    $region5: #{tpu_custom_call.1} parent=1 // loop_body
      %s23 = ssub.s32 %s18, 1
      %s24 = ssub.s32 %s18, 2
      %s25 = sadd.s32 %s18, 1
      %s26 = ssub.s32 %s18, %s25
      %p27 = scmp.eq.s32.totalorder %s26, 0
      %s29 = sadd.s32 %s28, 1
      %s30 = scalar_select %p27, %s28, %s29
      %p33 = pneg %p27
      %p34 = scmp.eq.s32.totalorder %s18, 1
      %p35 = por %p33, %p34
      %p36 = scmp.ne.s32.totalorder %s28, %s31
      %p37 = scmp.eq.s32.totalorder %s18, 0
      %p38 = por %p36, %p37
      %p39 = scmp.ne.s32.totalorder %s28, %s31
      %p40 = scmp.eq.s32.totalorder %s23, 1
      %p41 = por %p39, %p40
      %p42 = scmp.ne.s32.totalorder %s31, %s32
      %p43 = scmp.eq.s32.totalorder %s23, 0
      %p44 = por %p42, %p43
      %p45 = scmp.ne.s32.totalorder %s31, %s32
      %p46 = scmp.eq.s32.totalorder %s24, 1
      %p47 = por %p45, %p46
      %p49 = scmp.ne.s32.totalorder %s32, %s48
      %p50 = scmp.eq.s32.totalorder %s24, 0
      %p51 = por %p49, %p50
      %s53 = sadd.s32 %s52, 1
      %p56 = scmp.eq.s32.totalorder %s18, 1
      %p57 = scmp.ne.s32.totalorder %s52, %s54
      %p58 = scmp.eq.s32.totalorder %s18, 0
      %p59 = por %p57, %p58
      %p60 = scmp.ne.s32.totalorder %s52, %s54
      %p61 = scmp.eq.s32.totalorder %s23, 1
      %p62 = por %p60, %p61
      %p63 = scmp.ne.s32.totalorder %s54, %s55
      %p64 = scmp.eq.s32.totalorder %s23, 0
      %p65 = por %p63, %p64
      %p66 = scmp.ne.s32.totalorder %s54, %s55
      %p67 = scmp.eq.s32.totalorder %s24, 1
      %p68 = por %p66, %p67
      %p70 = scmp.ne.s32.totalorder %s55, %s69
      %p71 = scmp.eq.s32.totalorder %s24, 0
      %p72 = por %p70, %p71
      %s74 = sadd.s32 %s73, 1
      %p77 = scmp.eq.s32.totalorder %s18, 1
      %p78 = scmp.ne.s32.totalorder %s73, %s75
      %p79 = scmp.eq.s32.totalorder %s18, 0
      %p80 = por %p78, %p79
      %p81 = scmp.ne.s32.totalorder %s73, %s75
      %p82 = scmp.eq.s32.totalorder %s23, 1
      %p83 = por %p81, %p82
      %p84 = scmp.ne.s32.totalorder %s75, %s76
      %p85 = scmp.eq.s32.totalorder %s23, 0
      %p86 = por %p84, %p85
      %p87 = scmp.ne.s32.totalorder %s75, %s76
      %p88 = scmp.eq.s32.totalorder %s24, 1
      %p89 = por %p87, %p88
      %p91 = scmp.ne.s32.totalorder %s76, %s90
      %p92 = scmp.eq.s32.totalorder %s24, 0
      %p93 = por %p91, %p92
      %s95 = sadd.s32 %s94, 1
      %p98 = scmp.eq.s32.totalorder %s18, 1
      %p99 = scmp.ne.s32.totalorder %s94, %s96
      %p100 = scmp.eq.s32.totalorder %s18, 0
      %p101 = por %p99, %p100
      %p102 = scmp.ne.s32.totalorder %s94, %s96
      %p103 = scmp.eq.s32.totalorder %s23, 1
      %p104 = por %p102, %p103
      %p105 = scmp.ne.s32.totalorder %s96, %s97
      %p106 = scmp.eq.s32.totalorder %s23, 0
      %p107 = por %p105, %p106
      %p108 = scmp.ne.s32.totalorder %s96, %s97
      %p109 = scmp.eq.s32.totalorder %s24, 1
      %p110 = por %p108, %p109
      %p112 = scmp.ne.s32.totalorder %s97, %s111
      %p113 = scmp.eq.s32.totalorder %s24, 0
      %p114 = por %p112, %p113
      %s116 = sadd.s32 %s115, 1
      %p119 = scmp.eq.s32.totalorder %s18, 1
      %p120 = scmp.ne.s32.totalorder %s115, %s117
      %p121 = scmp.eq.s32.totalorder %s18, 0
      %p122 = por %p120, %p121
      %p123 = scmp.ne.s32.totalorder %s115, %s117
      %p124 = scmp.eq.s32.totalorder %s23, 1
      %p125 = por %p123, %p124
      %p126 = scmp.ne.s32.totalorder %s117, %s118
      %p127 = scmp.eq.s32.totalorder %s23, 0
      %p128 = por %p126, %p127
      %p129 = scmp.ne.s32.totalorder %s117, %s118
      %p130 = scmp.eq.s32.totalorder %s24, 1
      %p131 = por %p129, %p130
      %p133 = scmp.ne.s32.totalorder %s118, %s132
      %p134 = scmp.eq.s32.totalorder %s24, 0
      %p135 = por %p133, %p134
      %s136 = ssub.s32 %s18, %s25
      %p137 = scmp.eq.s32.totalorder %s136, 0
      %s139 = sadd.s32 %s138, 1
      %s140 = scalar_select %p137, %s138, %s139
      %p143 = pneg %p137
      %p144 = scmp.eq.s32.totalorder %s18, 1
      %p145 = por %p143, %p144
      %p146 = scmp.ne.s32.totalorder %s138, %s141
      %p147 = scmp.eq.s32.totalorder %s18, 0
      %p148 = por %p146, %p147
      %p149 = scmp.ne.s32.totalorder %s138, %s141
      %p150 = scmp.eq.s32.totalorder %s23, 1
      %p151 = por %p149, %p150
      %p152 = scmp.ne.s32.totalorder %s141, %s142
      %p153 = scmp.eq.s32.totalorder %s23, 0
      %p154 = por %p152, %p153
      %p155 = scmp.ne.s32.totalorder %s141, %s142
      %p156 = scmp.eq.s32.totalorder %s24, 1
      %p157 = por %p155, %p156
      %p159 = scmp.ne.s32.totalorder %s142, %s158
      %p160 = scmp.eq.s32.totalorder %s24, 0
      %p161 = por %p159, %p160
      %p162 = scmp.le.s32.totalorder 1, %s18
      %p163 = scmp.lt.s32.totalorder %s18, 3
      %p164 = pnand %p162, %p163
      %p165 = pneg %p164
      // Predicated region
      $region9: #{tpu_custom_call.1} parent=5 // pred_check
        _
      $region10: #{tpu_custom_call.1} parent=5 // pred_check_branch
        %167 = sbr.rel (%p164) target = $region12
      $region11: #{tpu_custom_call.1} parent=5 // pred_region
        %s168 = ssub.s32 %s18, 1
        // Predicated region
        $region13: #{tpu_custom_call.1} parent=11 // pred_check
          %p169 = pneg %p65
        $region14: #{tpu_custom_call.1} parent=11 // pred_check_branch
          %171 = sbr.rel (%p169) target = $region16
        $region15: #{tpu_custom_call.1} parent=11 // pred_region
          %s173 = ssub.s32 2048, 2048
          %174 = vsyncadd [#allocation6], %s173
          %s175 = sshll.u32 [#allocation5], 4
          %s176 = int_to_ptr.vmem [resolvable:$true] %s175
          %181 = dma.hbm_to_vmem [thread:$0]  %s1, 2048, %s176, [#allocation6], 64, 64, 4
        $region16: #{tpu_custom_call.1} parent=11 // pred_fallthru
          _
        // Predicated region
        $region17: #{tpu_custom_call.1} parent=11 // pred_check
          %p182 = pneg %p86
        $region18: #{tpu_custom_call.1} parent=11 // pred_check_branch
          %184 = sbr.rel (%p182) target = $region20
        $region19: #{tpu_custom_call.1} parent=11 // pred_region
          _
        $region20: #{tpu_custom_call.1} parent=11 // pred_fallthru
          _
        // Predicated region
        $region21: #{tpu_custom_call.1} parent=11 // pred_check
          %p185 = pneg %p107
        $region22: #{tpu_custom_call.1} parent=11 // pred_check_branch
          %187 = sbr.rel (%p185) target = $region24
        $region23: #{tpu_custom_call.1} parent=11 // pred_region
          %s189 = ssub.s32 18432, 18432
          %190 = vsyncadd [#allocation6], %s189
          %s191 = sshll.u32 [#allocation7], 4
          %s192 = int_to_ptr.vmem [resolvable:$true] %s191
          %197 = dma.hbm_to_vmem [thread:$0]  %s3, 18432, %s192, [#allocation6], 128, 128, 8
        $region24: #{tpu_custom_call.1} parent=11 // pred_fallthru
          _
        // Predicated region
        $region25: #{tpu_custom_call.1} parent=11 // pred_check
          %p198 = pneg %p128
        $region26: #{tpu_custom_call.1} parent=11 // pred_check_branch
          %200 = sbr.rel (%p198) target = $region28
        $region27: #{tpu_custom_call.1} parent=11 // pred_region
          _
        $region28: #{tpu_custom_call.1} parent=11 // pred_fallthru
          _
      $region12: #{tpu_custom_call.1} parent=5 // pred_fallthru
        _
      %p201 = scmp.lt.s32.totalorder %s18, 2
      // Predicated region
      $region29: #{tpu_custom_call.1} parent=5 // pred_check
        %p202 = pneg %p201
      $region30: #{tpu_custom_call.1} parent=5 // pred_check_branch
        %204 = sbr.rel (%p202) target = $region32
      $region31: #{tpu_custom_call.1} parent=5 // pred_region
        // Predicated region
        $region33: #{tpu_custom_call.1} parent=31 // pred_check
          %p205 = pneg %p38
        $region34: #{tpu_custom_call.1} parent=31 // pred_check_branch
          %207 = sbr.rel (%p205) target = $region36
        $region35: #{tpu_custom_call.1} parent=31 // pred_region
          %s208 = sand.u32 %s28, 1
          %s209 = scalar_lea.sflag [#allocation3], %s208
          %s210 = sand.u32 %s28, 1
          %s211 = smul.addr %s210, 512
          %s212 = scalar_lea.vmem [#allocation2], %s211
          %s214 = ssub.s32 8192, 8192
          %215 = vsyncadd %s209, %s214
          %s216 = smul.addr %s18, 64
          %s217 = smul.addr %s216, 128
          %s218 = scalar_lea.hbm %s0, %s217
          %s219 = sshll.u32 %s212, 4
          %s220 = int_to_ptr.vmem [resolvable:$true] %s219
          %225 = dma.hbm_to_vmem [thread:$0]  %s218, 8192, %s220, %s209, 256, 256, 16
        $region36: #{tpu_custom_call.1} parent=31 // pred_fallthru
          _
      $region32: #{tpu_custom_call.1} parent=5 // pred_fallthru
        _
      %p226 = scmp.le.s32.totalorder 1, %s18
      %p227 = scmp.lt.s32.totalorder %s18, 3
      %p228 = pnand %p226, %p227
      %p229 = pneg %p228
      // Predicated region
      $region37: #{tpu_custom_call.1} parent=5 // pred_check
        _
      $region38: #{tpu_custom_call.1} parent=5 // pred_check_branch
        %231 = sbr.rel (%p228) target = $region40
      $region39: #{tpu_custom_call.1} parent=5 // pred_region
        %s232 = ssub.s32 %s18, 1
        %s233 = sand.u32 %s31, 1
        %s234 = scalar_lea.sflag [#allocation3], %s233
        %s235 = sand.u32 %s31, 1
        %s236 = smul.addr %s235, 512
        %s237 = scalar_lea.vmem [#allocation2], %s236
        // Predicated region
        $region41: #{tpu_custom_call.1} parent=39 // pred_check
          %p238 = pneg %p44
        $region42: #{tpu_custom_call.1} parent=39 // pred_check_branch
          %240 = sbr.rel (%p238) target = $region44
        $region43: #{tpu_custom_call.1} parent=39 // pred_region
          %241 = dma.done %s234, 8192
        $region44: #{tpu_custom_call.1} parent=39 // pred_fallthru
          _
        // Predicated region
        $region45: #{tpu_custom_call.1} parent=39 // pred_check
          %p242 = pneg %p65
        $region46: #{tpu_custom_call.1} parent=39 // pred_check_branch
          %244 = sbr.rel (%p242) target = $region48
        $region47: #{tpu_custom_call.1} parent=39 // pred_region
          %245 = dma.done [#allocation6], 2048
        $region48: #{tpu_custom_call.1} parent=39 // pred_fallthru
          _
        // Predicated region
        $region49: #{tpu_custom_call.1} parent=39 // pred_check
          %p246 = pneg %p107
        $region50: #{tpu_custom_call.1} parent=39 // pred_check_branch
          %248 = sbr.rel (%p246) target = $region52
        $region51: #{tpu_custom_call.1} parent=39 // pred_region
          %249 = dma.done [#allocation6], 18432
        $region52: #{tpu_custom_call.1} parent=39 // pred_fallthru
          _
        %s250 = sand.u32 %s31, 1
        %s251 = scalar_lea.sflag [#allocation3], %s250
        %s252 = sand.u32 %s31, 1
        %s253 = smul.addr %s252, 512
        %s254 = scalar_lea.vmem [#allocation2], %s253
        %p255 = pneg %p44
        %p256 = pneg %p41
        %p257 = pneg %p65
        %p258 = pneg %p62
        %p259 = pneg %p86
        %p260 = pneg %p83
        %p261 = pneg %p107
        %p262 = pneg %p104
        %p263 = pneg %p128
        %p264 = pneg %p125
        %p265 = pneg %p154
        %p266 = pneg %p151
        %s267 = sand.u32 %s141, 1
        %s268 = scalar_lea.sflag [#allocation4], %s267
        %s269 = sand.u32 %s141, 1
        %s270 = smul.addr %s269, 512
        %s271 = scalar_lea.vmem [#allocation8], %s270
        %v273 = vld [vmem:[%s237] sm:$0xff]
        %v274 = vld [vmem:[%s237 + $0x8] sm:$0xff]
        %v275 = vld [vmem:[%s237 + $0x10] sm:$0xff]
        %v276 = vld [vmem:[%s237 + $0x18] sm:$0xff]
        %v277 = vld [vmem:[%s237 + $0x20] sm:$0xff]
        %v278 = vld [vmem:[%s237 + $0x28] sm:$0xff]
        %v279 = vld [vmem:[%s237 + $0x30] sm:$0xff]
        %v280 = vld [vmem:[%s237 + $0x38] sm:$0xff]
        %v281 = vld [vmem:[%s237 + $0x40] sm:$0xff]
        %v282 = vld [vmem:[%s237 + $0x48] sm:$0xff]
        %v283 = vld [vmem:[%s237 + $0x50] sm:$0xff]
        %v284 = vld [vmem:[%s237 + $0x58] sm:$0xff]
        %v285 = vld [vmem:[%s237 + $0x60] sm:$0xff]
        %v286 = vld [vmem:[%s237 + $0x68] sm:$0xff]
        %v287 = vld [vmem:[%s237 + $0x70] sm:$0xff]
        %v288 = vld [vmem:[%s237 + $0x78] sm:$0xff]
        %v289 = vld [vmem:[%s237 + $0x80] sm:$0xff]
        %v290 = vld [vmem:[%s237 + $0x88] sm:$0xff]
        %v291 = vld [vmem:[%s237 + $0x90] sm:$0xff]
        %v292 = vld [vmem:[%s237 + $0x98] sm:$0xff]
        %v293 = vld [vmem:[%s237 + $0xa0] sm:$0xff]
        %v294 = vld [vmem:[%s237 + $0xa8] sm:$0xff]
        %v295 = vld [vmem:[%s237 + $0xb0] sm:$0xff]
        %v296 = vld [vmem:[%s237 + $0xb8] sm:$0xff]
        %v297 = vld [vmem:[%s237 + $0xc0] sm:$0xff]
        %v298 = vld [vmem:[%s237 + $0xc8] sm:$0xff]
        %v299 = vld [vmem:[%s237 + $0xd0] sm:$0xff]
        %v300 = vld [vmem:[%s237 + $0xd8] sm:$0xff]
        %v301 = vld [vmem:[%s237 + $0xe0] sm:$0xff]
        %v302 = vld [vmem:[%s237 + $0xe8] sm:$0xff]
        %v303 = vld [vmem:[%s237 + $0xf0] sm:$0xff]
        %v304 = vld [vmem:[%s237 + $0xf8] sm:$0xff]
        %v305 = vld [vmem:[%s237 + $0x100] sm:$0xff]
        %v306 = vld [vmem:[%s237 + $0x108] sm:$0xff]
        %v307 = vld [vmem:[%s237 + $0x110] sm:$0xff]
        %v308 = vld [vmem:[%s237 + $0x118] sm:$0xff]
        %v309 = vld [vmem:[%s237 + $0x120] sm:$0xff]
        %v310 = vld [vmem:[%s237 + $0x128] sm:$0xff]
        %v311 = vld [vmem:[%s237 + $0x130] sm:$0xff]
        %v312 = vld [vmem:[%s237 + $0x138] sm:$0xff]
        %v313 = vld [vmem:[%s237 + $0x140] sm:$0xff]
        %v314 = vld [vmem:[%s237 + $0x148] sm:$0xff]
        %v315 = vld [vmem:[%s237 + $0x150] sm:$0xff]
        %v316 = vld [vmem:[%s237 + $0x158] sm:$0xff]
        %v317 = vld [vmem:[%s237 + $0x160] sm:$0xff]
        %v318 = vld [vmem:[%s237 + $0x168] sm:$0xff]
        %v319 = vld [vmem:[%s237 + $0x170] sm:$0xff]
        %v320 = vld [vmem:[%s237 + $0x178] sm:$0xff]
        %v321 = vld [vmem:[%s237 + $0x180] sm:$0xff]
        %v322 = vld [vmem:[%s237 + $0x188] sm:$0xff]
        %v323 = vld [vmem:[%s237 + $0x190] sm:$0xff]
        %v324 = vld [vmem:[%s237 + $0x198] sm:$0xff]
        %v325 = vld [vmem:[%s237 + $0x1a0] sm:$0xff]
        %v326 = vld [vmem:[%s237 + $0x1a8] sm:$0xff]
        %v327 = vld [vmem:[%s237 + $0x1b0] sm:$0xff]
        %v328 = vld [vmem:[%s237 + $0x1b8] sm:$0xff]
        %v329 = vld [vmem:[%s237 + $0x1c0] sm:$0xff]
        %v330 = vld [vmem:[%s237 + $0x1c8] sm:$0xff]
        %v331 = vld [vmem:[%s237 + $0x1d0] sm:$0xff]
        %v332 = vld [vmem:[%s237 + $0x1d8] sm:$0xff]
        %v333 = vld [vmem:[%s237 + $0x1e0] sm:$0xff]
        %v334 = vld [vmem:[%s237 + $0x1e8] sm:$0xff]
        %v335 = vld [vmem:[%s237 + $0x1f0] sm:$0xff]
        %v336 = vld [vmem:[%s237 + $0x1f8] sm:$0xff]
        %v337 = vpack.c.bf16 %v275, %v273
        %v338 = vpack.c.bf16 %v276, %v274
        %v339 = vpack.c.bf16 %v279, %v277
        %v340 = vpack.c.bf16 %v280, %v278
        %v341 = vpack.c.bf16 %v283, %v281
        %v342 = vpack.c.bf16 %v284, %v282
        %v343 = vpack.c.bf16 %v287, %v285
        %v344 = vpack.c.bf16 %v288, %v286
        %v345 = vpack.c.bf16 %v291, %v289
        %v346 = vpack.c.bf16 %v292, %v290
        %v347 = vpack.c.bf16 %v295, %v293
        %v348 = vpack.c.bf16 %v296, %v294
        %v349 = vpack.c.bf16 %v299, %v297
        %v350 = vpack.c.bf16 %v300, %v298
        %v351 = vpack.c.bf16 %v303, %v301
        %v352 = vpack.c.bf16 %v304, %v302
        %v353 = vpack.c.bf16 %v307, %v305
        %v354 = vpack.c.bf16 %v308, %v306
        %v355 = vpack.c.bf16 %v311, %v309
        %v356 = vpack.c.bf16 %v312, %v310
        %v357 = vpack.c.bf16 %v315, %v313
        %v358 = vpack.c.bf16 %v316, %v314
        %v359 = vpack.c.bf16 %v319, %v317
        %v360 = vpack.c.bf16 %v320, %v318
        %v361 = vpack.c.bf16 %v323, %v321
        %v362 = vpack.c.bf16 %v324, %v322
        %v363 = vpack.c.bf16 %v327, %v325
        %v364 = vpack.c.bf16 %v328, %v326
        %v365 = vpack.c.bf16 %v331, %v329
        %v366 = vpack.c.bf16 %v332, %v330
        %v367 = vpack.c.bf16 %v335, %v333
        %v368 = vpack.c.bf16 %v336, %v334
        %v369 = vld [vmem:[#allocation5] sm:$0xf]
        %v370 = vld [vmem:[#allocation5 + $0x4] sm:$0xf]
        %v371 = vld [vmem:[#allocation5 + $0x8] sm:$0xf]
        %v372 = vld [vmem:[#allocation5 + $0xc] sm:$0xf]
        %v373 = vld [vmem:[#allocation5 + $0x10] sm:$0xf]
        %v374 = vld [vmem:[#allocation5 + $0x14] sm:$0xf]
        %v375 = vld [vmem:[#allocation5 + $0x18] sm:$0xf]
        %v376 = vld [vmem:[#allocation5 + $0x1c] sm:$0xf]
        %v377 = vld [vmem:[#allocation5 + $0x20] sm:$0xf]
        %v378 = vld [vmem:[#allocation5 + $0x24] sm:$0xf]
        %v379 = vld [vmem:[#allocation5 + $0x28] sm:$0xf]
        %v380 = vld [vmem:[#allocation5 + $0x2c] sm:$0xf]
        %v381 = vld [vmem:[#allocation5 + $0x30] sm:$0xf]
        %v382 = vld [vmem:[#allocation5 + $0x34] sm:$0xf]
        %v383 = vld [vmem:[#allocation5 + $0x38] sm:$0xf]
        %v384 = vld [vmem:[#allocation5 + $0x3c] sm:$0xf]
        %v385 = vld [vmem:[#allocation5 + $0x40] sm:$0xf]
        %v386 = vld [vmem:[#allocation5 + $0x44] sm:$0xf]
        %v387 = vld [vmem:[#allocation5 + $0x48] sm:$0xf]
        %v388 = vld [vmem:[#allocation5 + $0x4c] sm:$0xf]
        %v389 = vld [vmem:[#allocation5 + $0x50] sm:$0xf]
        %v390 = vld [vmem:[#allocation5 + $0x54] sm:$0xf]
        %v391 = vld [vmem:[#allocation5 + $0x58] sm:$0xf]
        %v392 = vld [vmem:[#allocation5 + $0x5c] sm:$0xf]
        %v393 = vld [vmem:[#allocation5 + $0x60] sm:$0xf]
        %v394 = vld [vmem:[#allocation5 + $0x64] sm:$0xf]
        %v395 = vld [vmem:[#allocation5 + $0x68] sm:$0xf]
        %v396 = vld [vmem:[#allocation5 + $0x6c] sm:$0xf]
        %v397 = vld [vmem:[#allocation5 + $0x70] sm:$0xf]
        %v398 = vld [vmem:[#allocation5 + $0x74] sm:$0xf]
        %v399 = vld [vmem:[#allocation5 + $0x78] sm:$0xf]
        %v400 = vld [vmem:[#allocation5 + $0x7c] sm:$0xf]
        %v401 = vld [vmem:[%s2] sm:$0x1]
        %v403 = vlaneseq
        %v404 = vshrl.u32 %v403, 7
        %v405 = vsub.s32 0, %v404
        %v406 = vrot.slane %v401, %v405
        %v440 = vunpack.c.l.b16 %v369
        %v441 = vunpack.c.l.b16 %v370
        %v442 = vunpack.c.l.b16 %v371
        %v443 = vunpack.c.l.b16 %v372
        %v444 = vunpack.c.l.b16 %v373
        %v445 = vunpack.c.l.b16 %v374
        %v446 = vunpack.c.l.b16 %v375
        %v447 = vunpack.c.l.b16 %v376
        %v448 = vunpack.c.l.b16 %v377
        %v449 = vunpack.c.l.b16 %v378
        %v450 = vunpack.c.l.b16 %v379
        %v451 = vunpack.c.l.b16 %v380
        %v452 = vunpack.c.l.b16 %v381
        %v453 = vunpack.c.l.b16 %v382
        %v454 = vunpack.c.l.b16 %v383
        %v455 = vunpack.c.l.b16 %v384
        %v456 = vunpack.c.l.b16 %v385
        %v457 = vunpack.c.l.b16 %v386
        %v458 = vunpack.c.l.b16 %v387
        %v459 = vunpack.c.l.b16 %v388
        %v460 = vunpack.c.l.b16 %v389
        %v461 = vunpack.c.l.b16 %v390
        %v462 = vunpack.c.l.b16 %v391
        %v463 = vunpack.c.l.b16 %v392
        %v464 = vunpack.c.l.b16 %v393
        %v465 = vunpack.c.l.b16 %v394
        %v466 = vunpack.c.l.b16 %v395
        %v467 = vunpack.c.l.b16 %v396
        %v468 = vunpack.c.l.b16 %v397
        %v469 = vunpack.c.l.b16 %v398
        %v470 = vunpack.c.l.b16 %v399
        %v471 = vunpack.c.l.b16 %v400
        %v472 = vpack.c.b16 %v441, %v440
        %v473 = vpack.c.b16 %v443, %v442
        %v474 = vpack.c.b16 %v445, %v444
        %v475 = vpack.c.b16 %v447, %v446
        %v476 = vpack.c.b16 %v449, %v448
        %v477 = vpack.c.b16 %v451, %v450
        %v478 = vpack.c.b16 %v453, %v452
        %v479 = vpack.c.b16 %v455, %v454
        %v480 = vpack.c.b16 %v457, %v456
        %v481 = vpack.c.b16 %v459, %v458
        %v482 = vpack.c.b16 %v461, %v460
        %v483 = vpack.c.b16 %v463, %v462
        %v484 = vpack.c.b16 %v465, %v464
        %v485 = vpack.c.b16 %v467, %v466
        %v486 = vpack.c.b16 %v469, %v468
        %v487 = vpack.c.b16 %v471, %v470
        %504 = vmatprep.subr.bf16.mxu0 0
        %505 = vmatpush1.bf16.msra.mxu0 %v472
        %506 = vmatprep.subr.bf16.mxu0 0
        %507 = vmatpush1.bf16.msra.mxu0 %v473
        %508 = vmatprep.subr.bf16.mxu0 0
        %509 = vmatpush1.bf16.msra.mxu0 %v474
        %510 = vmatprep.subr.bf16.mxu0 0
        %511 = vmatpush1.bf16.msra.mxu0 %v475
        %512 = vmatprep.subr.bf16.mxu0 0
        %513 = vmatpush1.bf16.msra.mxu0 %v476
        %514 = vmatprep.subr.bf16.mxu0 0
        %515 = vmatpush1.bf16.msra.mxu0 %v477
        %516 = vmatprep.subr.bf16.mxu0 0
        %517 = vmatpush1.bf16.msra.mxu0 %v478
        %518 = vmatprep.subr.bf16.mxu0 0
        %519 = vmatpush1.bf16.msra.mxu0 %v479
        %520 = vmatprep.subr.bf16.mxu0 0
        %521 = vmatpush1.bf16.msra.mxu0 %v480
        %522 = vmatprep.subr.bf16.mxu0 0
        %523 = vmatpush1.bf16.msra.mxu0 %v481
        %524 = vmatprep.subr.bf16.mxu0 0
        %525 = vmatpush1.bf16.msra.mxu0 %v482
        %526 = vmatprep.subr.bf16.mxu0 0
        %527 = vmatpush1.bf16.msra.mxu0 %v483
        %528 = vmatprep.subr.bf16.mxu0 0
        %529 = vmatpush1.bf16.msra.mxu0 %v484
        %530 = vmatprep.subr.bf16.mxu0 0
        %531 = vmatpush1.bf16.msra.mxu0 %v485
        %532 = vmatprep.subr.bf16.mxu0 0
        %533 = vmatpush1.bf16.msra.mxu0 %v486
        %534 = vmatprep.subr.bf16.mxu0 0
        %535 = vmatpush1.bf16.msra.mxu0 %v487
        %536 = vmatprep.mubr.bf16.mxu0 %v338
        %537 = vmatmul.mubr.bf16.gmra.mrb[0].mxu0 %v337
        %v538 = vpop.f32.mrb[0].mxu0
        %v539 = vadd.f32 %v406, %v538
        %v540 = vpop.f32.mrb[0].mxu0
        %v541 = vpop.f32.mrb[0].mxu0
        %v542 = vadd.f32 %v406, %v541
        %v543 = vpop.f32.mrb[0].mxu0
        %544 = vmatprep.mubr.bf16.mxu0 %v340
        %545 = vmatmul.mubr.bf16.gmra.mrb[0].mxu0 %v339
        %v546 = vpop.f32.mrb[0].mxu0
        %v547 = vadd.f32 %v406, %v546
        %v548 = vpop.f32.mrb[0].mxu0
        %v549 = vpop.f32.mrb[0].mxu0
        %v550 = vadd.f32 %v406, %v549
        %v551 = vpop.f32.mrb[0].mxu0
        %552 = vmatprep.mubr.bf16.mxu0 %v342
        %553 = vmatmul.mubr.bf16.gmra.mrb[0].mxu0 %v341
        %v554 = vpop.f32.mrb[0].mxu0
        %v555 = vadd.f32 %v406, %v554
        %v556 = vpop.f32.mrb[0].mxu0
        %v557 = vpop.f32.mrb[0].mxu0
        %v558 = vadd.f32 %v406, %v557
        %v559 = vpop.f32.mrb[0].mxu0
        %560 = vmatprep.mubr.bf16.mxu0 %v344
        %561 = vmatmul.mubr.bf16.gmra.mrb[0].mxu0 %v343
        %v562 = vpop.f32.mrb[0].mxu0
        %v563 = vadd.f32 %v406, %v562
        %v564 = vpop.f32.mrb[0].mxu0
        %v565 = vpop.f32.mrb[0].mxu0
        %v566 = vadd.f32 %v406, %v565
        %v567 = vpop.f32.mrb[0].mxu0
        %568 = vmatprep.mubr.bf16.mxu0 %v346
        %569 = vmatmul.mubr.bf16.gmra.mrb[0].mxu0 %v345
        %v570 = vpop.f32.mrb[0].mxu0
        %v571 = vadd.f32 %v406, %v570
        %v572 = vpop.f32.mrb[0].mxu0
        %v573 = vpop.f32.mrb[0].mxu0
        %v574 = vadd.f32 %v406, %v573
        %v575 = vpop.f32.mrb[0].mxu0
        %576 = vmatprep.mubr.bf16.mxu0 %v348
        %577 = vmatmul.mubr.bf16.gmra.mrb[0].mxu0 %v347
        %v578 = vpop.f32.mrb[0].mxu0
        %v579 = vadd.f32 %v406, %v578
        %v580 = vpop.f32.mrb[0].mxu0
        %v581 = vpop.f32.mrb[0].mxu0
        %v582 = vadd.f32 %v406, %v581
        %v583 = vpop.f32.mrb[0].mxu0
        %584 = vmatprep.mubr.bf16.mxu0 %v350
        %585 = vmatmul.mubr.bf16.gmra.mrb[0].mxu0 %v349
        %v586 = vpop.f32.mrb[0].mxu0
        %v587 = vadd.f32 %v406, %v586
        %v588 = vpop.f32.mrb[0].mxu0
        %v589 = vpop.f32.mrb[0].mxu0
        %v590 = vadd.f32 %v406, %v589
        %v591 = vpop.f32.mrb[0].mxu0
        %592 = vmatprep.mubr.bf16.mxu0 %v352
        %593 = vmatmul.mubr.bf16.gmra.mrb[0].mxu0 %v351
        %v594 = vpop.f32.mrb[0].mxu0
        %v595 = vadd.f32 %v406, %v594
        %v596 = vpop.f32.mrb[0].mxu0
        %v597 = vpop.f32.mrb[0].mxu0
        %v598 = vadd.f32 %v406, %v597
        %v599 = vpop.f32.mrb[0].mxu0
        %600 = vmatprep.mubr.bf16.mxu0 %v354
        %601 = vmatmul.mubr.bf16.gmra.mrb[0].mxu0 %v353
        %v602 = vpop.f32.mrb[0].mxu0
        %v603 = vadd.f32 %v406, %v602
        %v604 = vpop.f32.mrb[0].mxu0
        %v605 = vpop.f32.mrb[0].mxu0
        %v606 = vadd.f32 %v406, %v605
        %v607 = vpop.f32.mrb[0].mxu0
        %608 = vmatprep.mubr.bf16.mxu0 %v356
        %609 = vmatmul.mubr.bf16.gmra.mrb[0].mxu0 %v355
        %v610 = vpop.f32.mrb[0].mxu0
        %v611 = vadd.f32 %v406, %v610
        %v612 = vpop.f32.mrb[0].mxu0
        %v613 = vpop.f32.mrb[0].mxu0
        %v614 = vadd.f32 %v406, %v613
        %v615 = vpop.f32.mrb[0].mxu0
        %616 = vmatprep.mubr.bf16.mxu0 %v358
        %617 = vmatmul.mubr.bf16.gmra.mrb[0].mxu0 %v357
        %v618 = vpop.f32.mrb[0].mxu0
        %v619 = vadd.f32 %v406, %v618
        %v620 = vpop.f32.mrb[0].mxu0
        %v621 = vpop.f32.mrb[0].mxu0
        %v622 = vadd.f32 %v406, %v621
        %v623 = vpop.f32.mrb[0].mxu0
        %624 = vmatprep.mubr.bf16.mxu0 %v360
        %625 = vmatmul.mubr.bf16.gmra.mrb[0].mxu0 %v359
        %v626 = vpop.f32.mrb[0].mxu0
        %v627 = vadd.f32 %v406, %v626
        %v628 = vpop.f32.mrb[0].mxu0
        %v629 = vpop.f32.mrb[0].mxu0
        %v630 = vadd.f32 %v406, %v629
        %v631 = vpop.f32.mrb[0].mxu0
        %632 = vmatprep.mubr.bf16.mxu0 %v362
        %633 = vmatmul.mubr.bf16.gmra.mrb[0].mxu0 %v361
        %v634 = vpop.f32.mrb[0].mxu0
        %v635 = vadd.f32 %v406, %v634
        %v636 = vpop.f32.mrb[0].mxu0
        %v637 = vpop.f32.mrb[0].mxu0
        %v638 = vadd.f32 %v406, %v637
        %v639 = vpop.f32.mrb[0].mxu0
        %640 = vmatprep.mubr.bf16.mxu0 %v364
        %641 = vmatmul.mubr.bf16.gmra.mrb[0].mxu0 %v363
        %v642 = vpop.f32.mrb[0].mxu0
        %v643 = vadd.f32 %v406, %v642
        %v644 = vpop.f32.mrb[0].mxu0
        %v645 = vpop.f32.mrb[0].mxu0
        %v646 = vadd.f32 %v406, %v645
        %v647 = vpop.f32.mrb[0].mxu0
        %648 = vmatprep.mubr.bf16.mxu0 %v366
        %649 = vmatmul.mubr.bf16.gmra.mrb[0].mxu0 %v365
        %v650 = vpop.f32.mrb[0].mxu0
        %v651 = vadd.f32 %v406, %v650
        %v652 = vpop.f32.mrb[0].mxu0
        %v653 = vpop.f32.mrb[0].mxu0
        %v654 = vadd.f32 %v406, %v653
        %v655 = vpop.f32.mrb[0].mxu0
        %656 = vmatprep.mubr.bf16.mxu0 %v368
        %657 = vmatmul.mubr.bf16.gmra.mrb[0].mxu0 %v367
        %v658 = vpop.f32.mrb[0].mxu0
        %v659 = vadd.f32 %v406, %v658
        %v660 = vpop.f32.mrb[0].mxu0
        %v661 = vpop.f32.mrb[0].mxu0
        %v662 = vadd.f32 %v406, %v661
        %v663 = vpop.f32.mrb[0].mxu0
        %664 = vdwg.mxu0
        %vm665 = vcmp.ge.f32.partialorder %v539, 0.0
        %vm666 = vcmp.ge.f32.partialorder %v542, 0.0
        %vm667 = vcmp.ge.f32.partialorder %v547, 0.0
        %vm668 = vcmp.ge.f32.partialorder %v550, 0.0
        %vm669 = vcmp.ge.f32.partialorder %v555, 0.0
        %vm670 = vcmp.ge.f32.partialorder %v558, 0.0
        %vm671 = vcmp.ge.f32.partialorder %v563, 0.0
        %vm672 = vcmp.ge.f32.partialorder %v566, 0.0
        %vm673 = vcmp.ge.f32.partialorder %v571, 0.0
        %vm674 = vcmp.ge.f32.partialorder %v574, 0.0
        %vm675 = vcmp.ge.f32.partialorder %v579, 0.0
        %vm676 = vcmp.ge.f32.partialorder %v582, 0.0
        %vm677 = vcmp.ge.f32.partialorder %v587, 0.0
        %vm678 = vcmp.ge.f32.partialorder %v590, 0.0
        %vm679 = vcmp.ge.f32.partialorder %v595, 0.0
        %vm680 = vcmp.ge.f32.partialorder %v598, 0.0
        %vm681 = vcmp.ge.f32.partialorder %v603, 0.0
        %vm682 = vcmp.ge.f32.partialorder %v606, 0.0
        %vm683 = vcmp.ge.f32.partialorder %v611, 0.0
        %vm684 = vcmp.ge.f32.partialorder %v614, 0.0
        %vm685 = vcmp.ge.f32.partialorder %v619, 0.0
        %vm686 = vcmp.ge.f32.partialorder %v622, 0.0
        %vm687 = vcmp.ge.f32.partialorder %v627, 0.0
        %vm688 = vcmp.ge.f32.partialorder %v630, 0.0
        %vm689 = vcmp.ge.f32.partialorder %v635, 0.0
        %vm690 = vcmp.ge.f32.partialorder %v638, 0.0
        %vm691 = vcmp.ge.f32.partialorder %v643, 0.0
        %vm692 = vcmp.ge.f32.partialorder %v646, 0.0
        %vm693 = vcmp.ge.f32.partialorder %v651, 0.0
        %vm694 = vcmp.ge.f32.partialorder %v654, 0.0
        %vm695 = vcmp.ge.f32.partialorder %v659, 0.0
        %vm696 = vcmp.ge.f32.partialorder %v662, 0.0
        %v697 = vmul.f32 %v539, 0.1
        %v698 = vmul.f32 %v542, 0.1
        %v699 = vmul.f32 %v547, 0.1
        %v700 = vmul.f32 %v550, 0.1
        %v701 = vmul.f32 %v555, 0.1
        %v702 = vmul.f32 %v558, 0.1
        %v703 = vmul.f32 %v563, 0.1
        %v704 = vmul.f32 %v566, 0.1
        %v705 = vmul.f32 %v571, 0.1
        %v706 = vmul.f32 %v574, 0.1
        %v707 = vmul.f32 %v579, 0.1
        %v708 = vmul.f32 %v582, 0.1
        %v709 = vmul.f32 %v587, 0.1
        %v710 = vmul.f32 %v590, 0.1
        %v711 = vmul.f32 %v595, 0.1
        %v712 = vmul.f32 %v598, 0.1
        %v713 = vmul.f32 %v603, 0.1
        %v714 = vmul.f32 %v606, 0.1
        %v715 = vmul.f32 %v611, 0.1
        %v716 = vmul.f32 %v614, 0.1
        %v717 = vmul.f32 %v619, 0.1
        %v718 = vmul.f32 %v622, 0.1
        %v719 = vmul.f32 %v627, 0.1
        %v720 = vmul.f32 %v630, 0.1
        %v721 = vmul.f32 %v635, 0.1
        %v722 = vmul.f32 %v638, 0.1
        %v723 = vmul.f32 %v643, 0.1
        %v724 = vmul.f32 %v646, 0.1
        %v725 = vmul.f32 %v651, 0.1
        %v726 = vmul.f32 %v654, 0.1
        %v727 = vmul.f32 %v659, 0.1
        %v728 = vmul.f32 %v662, 0.1
        %v729 = vsel %vm665, %v539, %v697
        %v730 = vsel %vm666, %v542, %v698
        %v731 = vsel %vm667, %v547, %v699
        %v732 = vsel %vm668, %v550, %v700
        %v733 = vsel %vm669, %v555, %v701
        %v734 = vsel %vm670, %v558, %v702
        %v735 = vsel %vm671, %v563, %v703
        %v736 = vsel %vm672, %v566, %v704
        %v737 = vsel %vm673, %v571, %v705
        %v738 = vsel %vm674, %v574, %v706
        %v739 = vsel %vm675, %v579, %v707
        %v740 = vsel %vm676, %v582, %v708
        %v741 = vsel %vm677, %v587, %v709
        %v742 = vsel %vm678, %v590, %v710
        %v743 = vsel %vm679, %v595, %v711
        %v744 = vsel %vm680, %v598, %v712
        %v745 = vsel %vm681, %v603, %v713
        %v746 = vsel %vm682, %v606, %v714
        %v747 = vsel %vm683, %v611, %v715
        %v748 = vsel %vm684, %v614, %v716
        %v749 = vsel %vm685, %v619, %v717
        %v750 = vsel %vm686, %v622, %v718
        %v751 = vsel %vm687, %v627, %v719
        %v752 = vsel %vm688, %v630, %v720
        %v753 = vsel %vm689, %v635, %v721
        %v754 = vsel %vm690, %v638, %v722
        %v755 = vsel %vm691, %v643, %v723
        %v756 = vsel %vm692, %v646, %v724
        %v757 = vsel %vm693, %v651, %v725
        %v758 = vsel %vm694, %v654, %v726
        %v759 = vsel %vm695, %v659, %v727
        %v760 = vsel %vm696, %v662, %v728
        %v761 = vpack.c.bf16 %v730, %v729
        %v762 = vpack.c.bf16 %v732, %v731
        %v763 = vpack.c.bf16 %v734, %v733
        %v764 = vpack.c.bf16 %v736, %v735
        %v765 = vpack.c.bf16 %v738, %v737
        %v766 = vpack.c.bf16 %v740, %v739
        %v767 = vpack.c.bf16 %v742, %v741
        %v768 = vpack.c.bf16 %v744, %v743
        %v769 = vpack.c.bf16 %v746, %v745
        %v770 = vpack.c.bf16 %v748, %v747
        %v771 = vpack.c.bf16 %v750, %v749
        %v772 = vpack.c.bf16 %v752, %v751
        %v773 = vpack.c.bf16 %v754, %v753
        %v774 = vpack.c.bf16 %v756, %v755
        %v775 = vpack.c.bf16 %v758, %v757
        %v776 = vpack.c.bf16 %v760, %v759
        %v778 = vshrl.u32 %v761, 16
        %v780 = vrot.slane %v778, 7
        %v781 = vshll.u32 %v761, 16
        %v783 = vor.u32 %v780, %v781
        %v785 = vshrl.u32 %v762, 16
        %v787 = vrot.slane %v785, 7
        %v788 = vshll.u32 %v762, 16
        %v790 = vor.u32 %v787, %v788
        %v792 = vshrl.u32 %v763, 16
        %v794 = vrot.slane %v792, 7
        %v795 = vshll.u32 %v763, 16
        %v797 = vor.u32 %v794, %v795
        %v799 = vshrl.u32 %v764, 16
        %v801 = vrot.slane %v799, 7
        %v802 = vshll.u32 %v764, 16
        %v804 = vor.u32 %v801, %v802
        %v806 = vshrl.u32 %v765, 16
        %v808 = vrot.slane %v806, 7
        %v809 = vshll.u32 %v765, 16
        %v811 = vor.u32 %v808, %v809
        %v813 = vshrl.u32 %v766, 16
        %v815 = vrot.slane %v813, 7
        %v816 = vshll.u32 %v766, 16
        %v818 = vor.u32 %v815, %v816
        %v820 = vshrl.u32 %v767, 16
        %v822 = vrot.slane %v820, 7
        %v823 = vshll.u32 %v767, 16
        %v825 = vor.u32 %v822, %v823
        %v827 = vshrl.u32 %v768, 16
        %v829 = vrot.slane %v827, 7
        %v830 = vshll.u32 %v768, 16
        %v832 = vor.u32 %v829, %v830
        %v834 = vshrl.u32 %v769, 16
        %v836 = vrot.slane %v834, 7
        %v837 = vshll.u32 %v769, 16
        %v839 = vor.u32 %v836, %v837
        %v841 = vshrl.u32 %v770, 16
        %v843 = vrot.slane %v841, 7
        %v844 = vshll.u32 %v770, 16
        %v846 = vor.u32 %v843, %v844
        %v848 = vshrl.u32 %v771, 16
        %v850 = vrot.slane %v848, 7
        %v851 = vshll.u32 %v771, 16
        %v853 = vor.u32 %v850, %v851
        %v855 = vshrl.u32 %v772, 16
        %v857 = vrot.slane %v855, 7
        %v858 = vshll.u32 %v772, 16
        %v860 = vor.u32 %v857, %v858
        %v862 = vshrl.u32 %v773, 16
        %v864 = vrot.slane %v862, 7
        %v865 = vshll.u32 %v773, 16
        %v867 = vor.u32 %v864, %v865
        %v869 = vshrl.u32 %v774, 16
        %v871 = vrot.slane %v869, 7
        %v872 = vshll.u32 %v774, 16
        %v874 = vor.u32 %v871, %v872
        %v876 = vshrl.u32 %v775, 16
        %v878 = vrot.slane %v876, 7
        %v879 = vshll.u32 %v775, 16
        %v881 = vor.u32 %v878, %v879
        %v883 = vshrl.u32 %v776, 16
        %v885 = vrot.slane %v883, 7
        %v886 = vshll.u32 %v776, 16
        %v888 = vor.u32 %v885, %v886
        %vm921 = vcmask 1040384
        %vm922 = vsmask.f32 256
        %vm923 = vmand %vm921, %vm922
        %v924 = vsel %vm923, 0, %v783
        %v925 = vsel %vm923, 0, %v790
        %v926 = vsel %vm923, 0, %v797
        %v927 = vsel %vm923, 0, %v804
        %v928 = vsel %vm923, 0, %v811
        %v929 = vsel %vm923, 0, %v818
        %v930 = vsel %vm923, 0, %v825
        %v931 = vsel %vm923, 0, %v832
        %v932 = vsel %vm923, 0, %v839
        %v933 = vsel %vm923, 0, %v846
        %v934 = vsel %vm923, 0, %v853
        %v935 = vsel %vm923, 0, %v860
        %v936 = vsel %vm923, 0, %v867
        %v937 = vsel %vm923, 0, %v874
        %v938 = vsel %vm923, 0, %v881
        %v939 = vsel %vm923, 0, %v888
        %v940 = vsel %vm923, %v780, 0
        %v941 = vsel %vm923, %v787, 0
        %v942 = vsel %vm923, %v794, 0
        %v943 = vsel %vm923, %v801, 0
        %v944 = vsel %vm923, %v808, 0
        %v945 = vsel %vm923, %v815, 0
        %v946 = vsel %vm923, %v822, 0
        %v947 = vsel %vm923, %v829, 0
        %v948 = vsel %vm923, %v836, 0
        %v949 = vsel %vm923, %v843, 0
        %v950 = vsel %vm923, %v850, 0
        %v951 = vsel %vm923, %v857, 0
        %v952 = vsel %vm923, %v864, 0
        %v953 = vsel %vm923, %v871, 0
        %v954 = vsel %vm923, %v878, 0
        %v955 = vsel %vm923, %v885, 0
        %v956 = vld [vmem:[#allocation7] sm:$0xff]
        %v957 = vld [vmem:[#allocation7 + $0x8] sm:$0xff]
        %v958 = vld [vmem:[#allocation7 + $0x10] sm:$0xff]
        %v959 = vld [vmem:[#allocation7 + $0x18] sm:$0xff]
        %v960 = vld [vmem:[#allocation7 + $0x20] sm:$0xff]
        %v961 = vld [vmem:[#allocation7 + $0x28] sm:$0xff]
        %v962 = vld [vmem:[#allocation7 + $0x30] sm:$0xff]
        %v963 = vld [vmem:[#allocation7 + $0x38] sm:$0xff]
        %v964 = vld [vmem:[#allocation7 + $0x40] sm:$0xff]
        %v965 = vld [vmem:[#allocation7 + $0x48] sm:$0xff]
        %v966 = vld [vmem:[#allocation7 + $0x50] sm:$0xff]
        %v967 = vld [vmem:[#allocation7 + $0x58] sm:$0xff]
        %v968 = vld [vmem:[#allocation7 + $0x60] sm:$0xff]
        %v969 = vld [vmem:[#allocation7 + $0x68] sm:$0xff]
        %v970 = vld [vmem:[#allocation7 + $0x70] sm:$0xff]
        %v971 = vld [vmem:[#allocation7 + $0x78] sm:$0xff]
        %s972 = scalar_lea.vmem [#allocation7], 384
        %v973 = vld [vmem:[%s972] sm:$0xff]
        %v974 = vld [vmem:[%s972 + $0x8] sm:$0xff]
        %v975 = vld [vmem:[%s972 + $0x10] sm:$0xff]
        %v976 = vld [vmem:[%s972 + $0x18] sm:$0xff]
        %v977 = vld [vmem:[%s972 + $0x20] sm:$0xff]
        %v978 = vld [vmem:[%s972 + $0x28] sm:$0xff]
        %v979 = vld [vmem:[%s972 + $0x30] sm:$0xff]
        %v980 = vld [vmem:[%s972 + $0x38] sm:$0xff]
        %v981 = vld [vmem:[%s972 + $0x40] sm:$0xff]
        %v982 = vld [vmem:[%s972 + $0x48] sm:$0xff]
        %v983 = vld [vmem:[%s972 + $0x50] sm:$0xff]
        %v984 = vld [vmem:[%s972 + $0x58] sm:$0xff]
        %v985 = vld [vmem:[%s972 + $0x60] sm:$0xff]
        %v986 = vld [vmem:[%s972 + $0x68] sm:$0xff]
        %v987 = vld [vmem:[%s972 + $0x70] sm:$0xff]
        %v988 = vld [vmem:[%s972 + $0x78] sm:$0xff]
        %v1005 = vunpack.c.l.b16 %v973
        %v1006 = vunpack.c.h.b16 %v973
        %v1007 = vunpack.c.l.b16 %v974
        %v1008 = vunpack.c.h.b16 %v974
        %v1009 = vunpack.c.l.b16 %v975
        %v1010 = vunpack.c.h.b16 %v975
        %v1011 = vunpack.c.l.b16 %v976
        %v1012 = vunpack.c.h.b16 %v976
        %v1013 = vunpack.c.l.b16 %v977
        %v1014 = vunpack.c.h.b16 %v977
        %v1015 = vunpack.c.l.b16 %v978
        %v1016 = vunpack.c.h.b16 %v978
        %v1017 = vunpack.c.l.b16 %v979
        %v1018 = vunpack.c.h.b16 %v979
        %v1019 = vunpack.c.l.b16 %v980
        %v1020 = vunpack.c.h.b16 %v980
        %v1021 = vunpack.c.l.b16 %v981
        %v1022 = vunpack.c.h.b16 %v981
        %v1023 = vunpack.c.l.b16 %v982
        %v1024 = vunpack.c.h.b16 %v982
        %v1025 = vunpack.c.l.b16 %v983
        %v1026 = vunpack.c.h.b16 %v983
        %v1027 = vunpack.c.l.b16 %v984
        %v1028 = vunpack.c.h.b16 %v984
        %v1029 = vunpack.c.l.b16 %v985
        %v1030 = vunpack.c.h.b16 %v985
        %v1031 = vunpack.c.l.b16 %v986
        %v1032 = vunpack.c.h.b16 %v986
        %v1033 = vunpack.c.l.b16 %v987
        %v1034 = vunpack.c.h.b16 %v987
        %v1035 = vunpack.c.l.b16 %v988
        %v1036 = vunpack.c.h.b16 %v988
        %v1037 = vpack.c.b16 %v1007, %v1005
        %v1038 = vpack.c.b16 %v1008, %v1006
        %v1039 = vpack.c.b16 %v1011, %v1009
        %v1040 = vpack.c.b16 %v1012, %v1010
        %v1041 = vpack.c.b16 %v1015, %v1013
        %v1042 = vpack.c.b16 %v1016, %v1014
        %v1043 = vpack.c.b16 %v1019, %v1017
        %v1044 = vpack.c.b16 %v1020, %v1018
        %v1045 = vpack.c.b16 %v1023, %v1021
        %v1046 = vpack.c.b16 %v1024, %v1022
        %v1047 = vpack.c.b16 %v1027, %v1025
        %v1048 = vpack.c.b16 %v1028, %v1026
        %v1049 = vpack.c.b16 %v1031, %v1029
        %v1050 = vpack.c.b16 %v1032, %v1030
        %v1051 = vpack.c.b16 %v1035, %v1033
        %v1052 = vpack.c.b16 %v1036, %v1034
        %1069 = vmatprep.subr.bf16.mxu0 %v1038
        %1070 = vmatpush1.bf16.msra.mxu0 %v1037
        %1071 = vmatprep.subr.bf16.mxu0 %v1040
        %1072 = vmatpush1.bf16.msra.mxu0 %v1039
        %1073 = vmatprep.subr.bf16.mxu0 %v1042
        %1074 = vmatpush1.bf16.msra.mxu0 %v1041
        %1075 = vmatprep.subr.bf16.mxu0 %v1044
        %1076 = vmatpush1.bf16.msra.mxu0 %v1043
        %1077 = vmatprep.subr.bf16.mxu0 %v1046
        %1078 = vmatpush1.bf16.msra.mxu0 %v1045
        %1079 = vmatprep.subr.bf16.mxu0 %v1048
        %1080 = vmatpush1.bf16.msra.mxu0 %v1047
        %1081 = vmatprep.subr.bf16.mxu0 %v1050
        %1082 = vmatpush1.bf16.msra.mxu0 %v1049
        %1083 = vmatprep.subr.bf16.mxu0 %v1052
        %1084 = vmatpush1.bf16.msra.mxu0 %v1051
        %1085 = vmatprep.subr.bf16.mxu0 0
        %1086 = vmatpush1.bf16.msra.mxu0 0
        %1087 = vmatprep.subr.bf16.mxu0 0
        %1088 = vmatpush1.bf16.msra.mxu0 0
        %1089 = vmatprep.subr.bf16.mxu0 0
        %1090 = vmatpush1.bf16.msra.mxu0 0
        %1091 = vmatprep.subr.bf16.mxu0 0
        %1092 = vmatpush1.bf16.msra.mxu0 0
        %1093 = vmatprep.subr.bf16.mxu0 0
        %1094 = vmatpush1.bf16.msra.mxu0 0
        %1095 = vmatprep.subr.bf16.mxu0 0
        %1096 = vmatpush1.bf16.msra.mxu0 0
        %1097 = vmatprep.subr.bf16.mxu0 0
        %1098 = vmatpush1.bf16.msra.mxu0 0
        %1099 = vmatprep.subr.bf16.mxu0 0
        %1100 = vmatpush1.bf16.msra.mxu0 0
        %1101 = vmatprep.mubr.bf16.mxu0 0
        %1102 = vmatmul.mubr.bf16.gmra.mrb[0].mxu0 %v924
        %v1103 = vpop.f32.mrb[0].mxu0
        %v1104 = vadd.f32 0.0, %v1103
        %v1105 = vpop.f32.mrb[0].mxu0
        %v1106 = vadd.f32 0.0, %v1105
        %v1107 = vpop.f32.mrb[0].mxu0
        %v1108 = vadd.f32 0.0, %v1107
        %v1109 = vpop.f32.mrb[0].mxu0
        %v1110 = vadd.f32 0.0, %v1109
        %1111 = vmatprep.mubr.bf16.mxu0 0
        %1112 = vmatmul.mubr.bf16.gmra.mrb[0].mxu0 %v925
        %v1113 = vpop.f32.mrb[0].mxu0
        %v1114 = vadd.f32 0.0, %v1113
        %v1115 = vpop.f32.mrb[0].mxu0
        %v1116 = vadd.f32 0.0, %v1115
        %v1117 = vpop.f32.mrb[0].mxu0
        %v1118 = vadd.f32 0.0, %v1117
        %v1119 = vpop.f32.mrb[0].mxu0
        %v1120 = vadd.f32 0.0, %v1119
        %1121 = vmatprep.mubr.bf16.mxu0 0
        %1122 = vmatmul.mubr.bf16.gmra.mrb[0].mxu0 %v926
        %v1123 = vpop.f32.mrb[0].mxu0
        %v1124 = vadd.f32 0.0, %v1123
        %v1125 = vpop.f32.mrb[0].mxu0
        %v1126 = vadd.f32 0.0, %v1125
        %v1127 = vpop.f32.mrb[0].mxu0
        %v1128 = vadd.f32 0.0, %v1127
        %v1129 = vpop.f32.mrb[0].mxu0
        %v1130 = vadd.f32 0.0, %v1129
        %1131 = vmatprep.mubr.bf16.mxu0 0
        %1132 = vmatmul.mubr.bf16.gmra.mrb[0].mxu0 %v927
        %v1133 = vpop.f32.mrb[0].mxu0
        %v1134 = vadd.f32 0.0, %v1133
        %v1135 = vpop.f32.mrb[0].mxu0
        %v1136 = vadd.f32 0.0, %v1135
        %v1137 = vpop.f32.mrb[0].mxu0
        %v1138 = vadd.f32 0.0, %v1137
        %v1139 = vpop.f32.mrb[0].mxu0
        %v1140 = vadd.f32 0.0, %v1139
        %1141 = vmatprep.mubr.bf16.mxu0 0
        %1142 = vmatmul.mubr.bf16.gmra.mrb[0].mxu0 %v928
        %v1143 = vpop.f32.mrb[0].mxu0
        %v1144 = vadd.f32 0.0, %v1143
        %v1145 = vpop.f32.mrb[0].mxu0
        %v1146 = vadd.f32 0.0, %v1145
        %v1147 = vpop.f32.mrb[0].mxu0
        %v1148 = vadd.f32 0.0, %v1147
        %v1149 = vpop.f32.mrb[0].mxu0
        %v1150 = vadd.f32 0.0, %v1149
        %1151 = vmatprep.mubr.bf16.mxu0 0
        %1152 = vmatmul.mubr.bf16.gmra.mrb[0].mxu0 %v929
        %v1153 = vpop.f32.mrb[0].mxu0
        %v1154 = vadd.f32 0.0, %v1153
        %v1155 = vpop.f32.mrb[0].mxu0
        %v1156 = vadd.f32 0.0, %v1155
        %v1157 = vpop.f32.mrb[0].mxu0
        %v1158 = vadd.f32 0.0, %v1157
        %v1159 = vpop.f32.mrb[0].mxu0
        %v1160 = vadd.f32 0.0, %v1159
        %1161 = vmatprep.mubr.bf16.mxu0 0
        %1162 = vmatmul.mubr.bf16.gmra.mrb[0].mxu0 %v930
        %v1163 = vpop.f32.mrb[0].mxu0
        %v1164 = vadd.f32 0.0, %v1163
        %v1165 = vpop.f32.mrb[0].mxu0
        %v1166 = vadd.f32 0.0, %v1165
        %v1167 = vpop.f32.mrb[0].mxu0
        %v1168 = vadd.f32 0.0, %v1167
        %v1169 = vpop.f32.mrb[0].mxu0
        %v1170 = vadd.f32 0.0, %v1169
        %1171 = vmatprep.mubr.bf16.mxu0 0
        %1172 = vmatmul.mubr.bf16.gmra.mrb[0].mxu0 %v931
        %v1173 = vpop.f32.mrb[0].mxu0
        %v1174 = vadd.f32 0.0, %v1173
        %v1175 = vpop.f32.mrb[0].mxu0
        %v1176 = vadd.f32 0.0, %v1175
        %v1177 = vpop.f32.mrb[0].mxu0
        %v1178 = vadd.f32 0.0, %v1177
        %v1179 = vpop.f32.mrb[0].mxu0
        %v1180 = vadd.f32 0.0, %v1179
        %1181 = vmatprep.mubr.bf16.mxu0 0
        %1182 = vmatmul.mubr.bf16.gmra.mrb[0].mxu0 %v932
        %v1183 = vpop.f32.mrb[0].mxu0
        %v1184 = vadd.f32 0.0, %v1183
        %v1185 = vpop.f32.mrb[0].mxu0
        %v1186 = vadd.f32 0.0, %v1185
        %v1187 = vpop.f32.mrb[0].mxu0
        %v1188 = vadd.f32 0.0, %v1187
        %v1189 = vpop.f32.mrb[0].mxu0
        %v1190 = vadd.f32 0.0, %v1189
        %1191 = vmatprep.mubr.bf16.mxu0 0
        %1192 = vmatmul.mubr.bf16.gmra.mrb[0].mxu0 %v933
        %v1193 = vpop.f32.mrb[0].mxu0
        %v1194 = vadd.f32 0.0, %v1193
        %v1195 = vpop.f32.mrb[0].mxu0
        %v1196 = vadd.f32 0.0, %v1195
        %v1197 = vpop.f32.mrb[0].mxu0
        %v1198 = vadd.f32 0.0, %v1197
        %v1199 = vpop.f32.mrb[0].mxu0
        %v1200 = vadd.f32 0.0, %v1199
        %1201 = vmatprep.mubr.bf16.mxu0 0
        %1202 = vmatmul.mubr.bf16.gmra.mrb[0].mxu0 %v934
        %v1203 = vpop.f32.mrb[0].mxu0
        %v1204 = vadd.f32 0.0, %v1203
        %v1205 = vpop.f32.mrb[0].mxu0
        %v1206 = vadd.f32 0.0, %v1205
        %v1207 = vpop.f32.mrb[0].mxu0
        %v1208 = vadd.f32 0.0, %v1207
        %v1209 = vpop.f32.mrb[0].mxu0
        %v1210 = vadd.f32 0.0, %v1209
        %1211 = vmatprep.mubr.bf16.mxu0 0
        %1212 = vmatmul.mubr.bf16.gmra.mrb[0].mxu0 %v935
        %v1213 = vpop.f32.mrb[0].mxu0
        %v1214 = vadd.f32 0.0, %v1213
        %v1215 = vpop.f32.mrb[0].mxu0
        %v1216 = vadd.f32 0.0, %v1215
        %v1217 = vpop.f32.mrb[0].mxu0
        %v1218 = vadd.f32 0.0, %v1217
        %v1219 = vpop.f32.mrb[0].mxu0
        %v1220 = vadd.f32 0.0, %v1219
        %1221 = vmatprep.mubr.bf16.mxu0 0
        %1222 = vmatmul.mubr.bf16.gmra.mrb[0].mxu0 %v936
        %v1223 = vpop.f32.mrb[0].mxu0
        %v1224 = vadd.f32 0.0, %v1223
        %v1225 = vpop.f32.mrb[0].mxu0
        %v1226 = vadd.f32 0.0, %v1225
        %v1227 = vpop.f32.mrb[0].mxu0
        %v1228 = vadd.f32 0.0, %v1227
        %v1229 = vpop.f32.mrb[0].mxu0
        %v1230 = vadd.f32 0.0, %v1229
        %1231 = vmatprep.mubr.bf16.mxu0 0
        %1232 = vmatmul.mubr.bf16.gmra.mrb[0].mxu0 %v937
        %v1233 = vpop.f32.mrb[0].mxu0
        %v1234 = vadd.f32 0.0, %v1233
        %v1235 = vpop.f32.mrb[0].mxu0
        %v1236 = vadd.f32 0.0, %v1235
        %v1237 = vpop.f32.mrb[0].mxu0
        %v1238 = vadd.f32 0.0, %v1237
        %v1239 = vpop.f32.mrb[0].mxu0
        %v1240 = vadd.f32 0.0, %v1239
        %1241 = vmatprep.mubr.bf16.mxu0 0
        %1242 = vmatmul.mubr.bf16.gmra.mrb[0].mxu0 %v938
        %v1243 = vpop.f32.mrb[0].mxu0
        %v1244 = vadd.f32 0.0, %v1243
        %v1245 = vpop.f32.mrb[0].mxu0
        %v1246 = vadd.f32 0.0, %v1245
        %v1247 = vpop.f32.mrb[0].mxu0
        %v1248 = vadd.f32 0.0, %v1247
        %v1249 = vpop.f32.mrb[0].mxu0
        %v1250 = vadd.f32 0.0, %v1249
        %1251 = vmatprep.mubr.bf16.mxu0 0
        %1252 = vmatmul.mubr.bf16.gmra.mrb[0].mxu0 %v939
        %v1253 = vpop.f32.mrb[0].mxu0
        %v1254 = vadd.f32 0.0, %v1253
        %v1255 = vpop.f32.mrb[0].mxu0
        %v1256 = vadd.f32 0.0, %v1255
        %v1257 = vpop.f32.mrb[0].mxu0
        %v1258 = vadd.f32 0.0, %v1257
        %v1259 = vpop.f32.mrb[0].mxu0
        %v1260 = vadd.f32 0.0, %v1259
        %1261 = vdwg.mxu0
        %v1278 = vunpack.c.l.b16 %v956
        %v1279 = vunpack.c.h.b16 %v956
        %v1280 = vunpack.c.l.b16 %v957
        %v1281 = vunpack.c.h.b16 %v957
        %v1282 = vunpack.c.l.b16 %v958
        %v1283 = vunpack.c.h.b16 %v958
        %v1284 = vunpack.c.l.b16 %v959
        %v1285 = vunpack.c.h.b16 %v959
        %v1286 = vunpack.c.l.b16 %v960
        %v1287 = vunpack.c.h.b16 %v960
        %v1288 = vunpack.c.l.b16 %v961
        %v1289 = vunpack.c.h.b16 %v961
        %v1290 = vunpack.c.l.b16 %v962
        %v1291 = vunpack.c.h.b16 %v962
        %v1292 = vunpack.c.l.b16 %v963
        %v1293 = vunpack.c.h.b16 %v963
        %v1294 = vunpack.c.l.b16 %v964
        %v1295 = vunpack.c.h.b16 %v964
        %v1296 = vunpack.c.l.b16 %v965
        %v1297 = vunpack.c.h.b16 %v965
        %v1298 = vunpack.c.l.b16 %v966
        %v1299 = vunpack.c.h.b16 %v966
        %v1300 = vunpack.c.l.b16 %v967
        %v1301 = vunpack.c.h.b16 %v967
        %v1302 = vunpack.c.l.b16 %v968
        %v1303 = vunpack.c.h.b16 %v968
        %v1304 = vunpack.c.l.b16 %v969
        %v1305 = vunpack.c.h.b16 %v969
        %v1306 = vunpack.c.l.b16 %v970
        %v1307 = vunpack.c.h.b16 %v970
        %v1308 = vunpack.c.l.b16 %v971
        %v1309 = vunpack.c.h.b16 %v971
        %v1310 = vpack.c.b16 %v1280, %v1278
        %v1311 = vpack.c.b16 %v1281, %v1279
        %v1312 = vpack.c.b16 %v1284, %v1282
        %v1313 = vpack.c.b16 %v1285, %v1283
        %v1314 = vpack.c.b16 %v1288, %v1286
        %v1315 = vpack.c.b16 %v1289, %v1287
        %v1316 = vpack.c.b16 %v1292, %v1290
        %v1317 = vpack.c.b16 %v1293, %v1291
        %v1318 = vpack.c.b16 %v1296, %v1294
        %v1319 = vpack.c.b16 %v1297, %v1295
        %v1320 = vpack.c.b16 %v1300, %v1298
        %v1321 = vpack.c.b16 %v1301, %v1299
        %v1322 = vpack.c.b16 %v1304, %v1302
        %v1323 = vpack.c.b16 %v1305, %v1303
        %v1324 = vpack.c.b16 %v1308, %v1306
        %v1325 = vpack.c.b16 %v1309, %v1307
        %1342 = vmatprep.subr.bf16.mxu0 %v1311
        %1343 = vmatpush1.bf16.msra.mxu0 %v1310
        %1344 = vmatprep.subr.bf16.mxu0 %v1313
        %1345 = vmatpush1.bf16.msra.mxu0 %v1312
        %1346 = vmatprep.subr.bf16.mxu0 %v1315
        %1347 = vmatpush1.bf16.msra.mxu0 %v1314
        %1348 = vmatprep.subr.bf16.mxu0 %v1317
        %1349 = vmatpush1.bf16.msra.mxu0 %v1316
        %1350 = vmatprep.subr.bf16.mxu0 %v1319
        %1351 = vmatpush1.bf16.msra.mxu0 %v1318
        %1352 = vmatprep.subr.bf16.mxu0 %v1321
        %1353 = vmatpush1.bf16.msra.mxu0 %v1320
        %1354 = vmatprep.subr.bf16.mxu0 %v1323
        %1355 = vmatpush1.bf16.msra.mxu0 %v1322
        %1356 = vmatprep.subr.bf16.mxu0 %v1325
        %1357 = vmatpush1.bf16.msra.mxu0 %v1324
        %1358 = vmatprep.subr.bf16.mxu0 0
        %1359 = vmatpush1.bf16.msra.mxu0 0
        %1360 = vmatprep.subr.bf16.mxu0 0
        %1361 = vmatpush1.bf16.msra.mxu0 0
        %1362 = vmatprep.subr.bf16.mxu0 0
        %1363 = vmatpush1.bf16.msra.mxu0 0
        %1364 = vmatprep.subr.bf16.mxu0 0
        %1365 = vmatpush1.bf16.msra.mxu0 0
        %1366 = vmatprep.subr.bf16.mxu0 0
        %1367 = vmatpush1.bf16.msra.mxu0 0
        %1368 = vmatprep.subr.bf16.mxu0 0
        %1369 = vmatpush1.bf16.msra.mxu0 0
        %1370 = vmatprep.subr.bf16.mxu0 0
        %1371 = vmatpush1.bf16.msra.mxu0 0
        %1372 = vmatprep.subr.bf16.mxu0 0
        %1373 = vmatpush1.bf16.msra.mxu0 0
        %1374 = vmatprep.mubr.bf16.mxu0 0
        %1375 = vmatmul.mubr.bf16.gmra.mrb[0].mxu0 0
        %v1376 = vpop.f32.mrb[0].mxu0
        %v1377 = vadd.f32 %v1104, %v1376
        %v1378 = vpop.f32.mrb[0].mxu0
        %v1379 = vadd.f32 %v1106, %v1378
        %v1380 = vpop.f32.mrb[0].mxu0
        %v1381 = vadd.f32 %v1108, %v1380
        %v1382 = vpop.f32.mrb[0].mxu0
        %v1383 = vadd.f32 %v1110, %v1382
        %1384 = vmatprep.mubr.bf16.mxu0 0
        %1385 = vmatmul.mubr.bf16.gmra.mrb[0].mxu0 %v924
        %v1386 = vpop.f32.mrb[0].mxu0
        %v1387 = vadd.f32 %v1114, %v1386
        %v1388 = vpop.f32.mrb[0].mxu0
        %v1389 = vadd.f32 %v1116, %v1388
        %v1390 = vpop.f32.mrb[0].mxu0
        %v1391 = vadd.f32 %v1118, %v1390
        %v1392 = vpop.f32.mrb[0].mxu0
        %v1393 = vadd.f32 %v1120, %v1392
        %1394 = vmatprep.mubr.bf16.mxu0 0
        %1395 = vmatmul.mubr.bf16.gmra.mrb[0].mxu0 %v925
        %v1396 = vpop.f32.mrb[0].mxu0
        %v1397 = vadd.f32 %v1124, %v1396
        %v1398 = vpop.f32.mrb[0].mxu0
        %v1399 = vadd.f32 %v1126, %v1398
        %v1400 = vpop.f32.mrb[0].mxu0
        %v1401 = vadd.f32 %v1128, %v1400
        %v1402 = vpop.f32.mrb[0].mxu0
        %v1403 = vadd.f32 %v1130, %v1402
        %1404 = vmatprep.mubr.bf16.mxu0 0
        %1405 = vmatmul.mubr.bf16.gmra.mrb[0].mxu0 %v926
        %v1406 = vpop.f32.mrb[0].mxu0
        %v1407 = vadd.f32 %v1134, %v1406
        %v1408 = vpop.f32.mrb[0].mxu0
        %v1409 = vadd.f32 %v1136, %v1408
        %v1410 = vpop.f32.mrb[0].mxu0
        %v1411 = vadd.f32 %v1138, %v1410
        %v1412 = vpop.f32.mrb[0].mxu0
        %v1413 = vadd.f32 %v1140, %v1412
        %1414 = vmatprep.mubr.bf16.mxu0 0
        %1415 = vmatmul.mubr.bf16.gmra.mrb[0].mxu0 %v927
        %v1416 = vpop.f32.mrb[0].mxu0
        %v1417 = vadd.f32 %v1144, %v1416
        %v1418 = vpop.f32.mrb[0].mxu0
        %v1419 = vadd.f32 %v1146, %v1418
        %v1420 = vpop.f32.mrb[0].mxu0
        %v1421 = vadd.f32 %v1148, %v1420
        %v1422 = vpop.f32.mrb[0].mxu0
        %v1423 = vadd.f32 %v1150, %v1422
        %1424 = vmatprep.mubr.bf16.mxu0 0
        %1425 = vmatmul.mubr.bf16.gmra.mrb[0].mxu0 %v928
        %v1426 = vpop.f32.mrb[0].mxu0
        %v1427 = vadd.f32 %v1154, %v1426
        %v1428 = vpop.f32.mrb[0].mxu0
        %v1429 = vadd.f32 %v1156, %v1428
        %v1430 = vpop.f32.mrb[0].mxu0
        %v1431 = vadd.f32 %v1158, %v1430
        %v1432 = vpop.f32.mrb[0].mxu0
        %v1433 = vadd.f32 %v1160, %v1432
        %1434 = vmatprep.mubr.bf16.mxu0 0
        %1435 = vmatmul.mubr.bf16.gmra.mrb[0].mxu0 %v929
        %v1436 = vpop.f32.mrb[0].mxu0
        %v1437 = vadd.f32 %v1164, %v1436
        %v1438 = vpop.f32.mrb[0].mxu0
        %v1439 = vadd.f32 %v1166, %v1438
        %v1440 = vpop.f32.mrb[0].mxu0
        %v1441 = vadd.f32 %v1168, %v1440
        %v1442 = vpop.f32.mrb[0].mxu0
        %v1443 = vadd.f32 %v1170, %v1442
        %1444 = vmatprep.mubr.bf16.mxu0 0
        %1445 = vmatmul.mubr.bf16.gmra.mrb[0].mxu0 %v930
        %v1446 = vpop.f32.mrb[0].mxu0
        %v1447 = vadd.f32 %v1174, %v1446
        %v1448 = vpop.f32.mrb[0].mxu0
        %v1449 = vadd.f32 %v1176, %v1448
        %v1450 = vpop.f32.mrb[0].mxu0
        %v1451 = vadd.f32 %v1178, %v1450
        %v1452 = vpop.f32.mrb[0].mxu0
        %v1453 = vadd.f32 %v1180, %v1452
        %1454 = vmatprep.mubr.bf16.mxu0 0
        %1455 = vmatmul.mubr.bf16.gmra.mrb[0].mxu0 %v931
        %v1456 = vpop.f32.mrb[0].mxu0
        %v1457 = vadd.f32 %v1184, %v1456
        %v1458 = vpop.f32.mrb[0].mxu0
        %v1459 = vadd.f32 %v1186, %v1458
        %v1460 = vpop.f32.mrb[0].mxu0
        %v1461 = vadd.f32 %v1188, %v1460
        %v1462 = vpop.f32.mrb[0].mxu0
        %v1463 = vadd.f32 %v1190, %v1462
        %1464 = vmatprep.mubr.bf16.mxu0 0
        %1465 = vmatmul.mubr.bf16.gmra.mrb[0].mxu0 %v932
        %v1466 = vpop.f32.mrb[0].mxu0
        %v1467 = vadd.f32 %v1194, %v1466
        %v1468 = vpop.f32.mrb[0].mxu0
        %v1469 = vadd.f32 %v1196, %v1468
        %v1470 = vpop.f32.mrb[0].mxu0
        %v1471 = vadd.f32 %v1198, %v1470
        %v1472 = vpop.f32.mrb[0].mxu0
        %v1473 = vadd.f32 %v1200, %v1472
        %1474 = vmatprep.mubr.bf16.mxu0 0
        %1475 = vmatmul.mubr.bf16.gmra.mrb[0].mxu0 %v933
        %v1476 = vpop.f32.mrb[0].mxu0
        %v1477 = vadd.f32 %v1204, %v1476
        %v1478 = vpop.f32.mrb[0].mxu0
        %v1479 = vadd.f32 %v1206, %v1478
        %v1480 = vpop.f32.mrb[0].mxu0
        %v1481 = vadd.f32 %v1208, %v1480
        %v1482 = vpop.f32.mrb[0].mxu0
        %v1483 = vadd.f32 %v1210, %v1482
        %1484 = vmatprep.mubr.bf16.mxu0 0
        %1485 = vmatmul.mubr.bf16.gmra.mrb[0].mxu0 %v934
        %v1486 = vpop.f32.mrb[0].mxu0
        %v1487 = vadd.f32 %v1214, %v1486
        %v1488 = vpop.f32.mrb[0].mxu0
        %v1489 = vadd.f32 %v1216, %v1488
        %v1490 = vpop.f32.mrb[0].mxu0
        %v1491 = vadd.f32 %v1218, %v1490
        %v1492 = vpop.f32.mrb[0].mxu0
        %v1493 = vadd.f32 %v1220, %v1492
        %1494 = vmatprep.mubr.bf16.mxu0 0
        %1495 = vmatmul.mubr.bf16.gmra.mrb[0].mxu0 %v935
        %v1496 = vpop.f32.mrb[0].mxu0
        %v1497 = vadd.f32 %v1224, %v1496
        %v1498 = vpop.f32.mrb[0].mxu0
        %v1499 = vadd.f32 %v1226, %v1498
        %v1500 = vpop.f32.mrb[0].mxu0
        %v1501 = vadd.f32 %v1228, %v1500
        %v1502 = vpop.f32.mrb[0].mxu0
        %v1503 = vadd.f32 %v1230, %v1502
        %1504 = vmatprep.mubr.bf16.mxu0 0
        %1505 = vmatmul.mubr.bf16.gmra.mrb[0].mxu0 %v936
        %v1506 = vpop.f32.mrb[0].mxu0
        %v1507 = vadd.f32 %v1234, %v1506
        %v1508 = vpop.f32.mrb[0].mxu0
        %v1509 = vadd.f32 %v1236, %v1508
        %v1510 = vpop.f32.mrb[0].mxu0
        %v1511 = vadd.f32 %v1238, %v1510
        %v1512 = vpop.f32.mrb[0].mxu0
        %v1513 = vadd.f32 %v1240, %v1512
        %1514 = vmatprep.mubr.bf16.mxu0 0
        %1515 = vmatmul.mubr.bf16.gmra.mrb[0].mxu0 %v937
        %v1516 = vpop.f32.mrb[0].mxu0
        %v1517 = vadd.f32 %v1244, %v1516
        %v1518 = vpop.f32.mrb[0].mxu0
        %v1519 = vadd.f32 %v1246, %v1518
        %v1520 = vpop.f32.mrb[0].mxu0
        %v1521 = vadd.f32 %v1248, %v1520
        %v1522 = vpop.f32.mrb[0].mxu0
        %v1523 = vadd.f32 %v1250, %v1522
        %1524 = vmatprep.mubr.bf16.mxu0 0
        %1525 = vmatmul.mubr.bf16.gmra.mrb[0].mxu0 %v938
        %v1526 = vpop.f32.mrb[0].mxu0
        %v1527 = vadd.f32 %v1254, %v1526
        %v1528 = vpop.f32.mrb[0].mxu0
        %v1529 = vadd.f32 %v1256, %v1528
        %v1530 = vpop.f32.mrb[0].mxu0
        %v1531 = vadd.f32 %v1258, %v1530
        %v1532 = vpop.f32.mrb[0].mxu0
        %v1533 = vadd.f32 %v1260, %v1532
        %1534 = vdwg.mxu0
        %s1535 = scalar_lea.vmem [#allocation7], 768
        %v1536 = vld [vmem:[%s1535] sm:$0xff]
        %v1537 = vld [vmem:[%s1535 + $0x8] sm:$0xff]
        %v1538 = vld [vmem:[%s1535 + $0x10] sm:$0xff]
        %v1539 = vld [vmem:[%s1535 + $0x18] sm:$0xff]
        %v1540 = vld [vmem:[%s1535 + $0x20] sm:$0xff]
        %v1541 = vld [vmem:[%s1535 + $0x28] sm:$0xff]
        %v1542 = vld [vmem:[%s1535 + $0x30] sm:$0xff]
        %v1543 = vld [vmem:[%s1535 + $0x38] sm:$0xff]
        %v1544 = vld [vmem:[%s1535 + $0x40] sm:$0xff]
        %v1545 = vld [vmem:[%s1535 + $0x48] sm:$0xff]
        %v1546 = vld [vmem:[%s1535 + $0x50] sm:$0xff]
        %v1547 = vld [vmem:[%s1535 + $0x58] sm:$0xff]
        %v1548 = vld [vmem:[%s1535 + $0x60] sm:$0xff]
        %v1549 = vld [vmem:[%s1535 + $0x68] sm:$0xff]
        %v1550 = vld [vmem:[%s1535 + $0x70] sm:$0xff]
        %v1551 = vld [vmem:[%s1535 + $0x78] sm:$0xff]
        %v1568 = vunpack.c.l.b16 %v1536
        %v1569 = vunpack.c.h.b16 %v1536
        %v1570 = vunpack.c.l.b16 %v1537
        %v1571 = vunpack.c.h.b16 %v1537
        %v1572 = vunpack.c.l.b16 %v1538
        %v1573 = vunpack.c.h.b16 %v1538
        %v1574 = vunpack.c.l.b16 %v1539
        %v1575 = vunpack.c.h.b16 %v1539
        %v1576 = vunpack.c.l.b16 %v1540
        %v1577 = vunpack.c.h.b16 %v1540
        %v1578 = vunpack.c.l.b16 %v1541
        %v1579 = vunpack.c.h.b16 %v1541
        %v1580 = vunpack.c.l.b16 %v1542
        %v1581 = vunpack.c.h.b16 %v1542
        %v1582 = vunpack.c.l.b16 %v1543
        %v1583 = vunpack.c.h.b16 %v1543
        %v1584 = vunpack.c.l.b16 %v1544
        %v1585 = vunpack.c.h.b16 %v1544
        %v1586 = vunpack.c.l.b16 %v1545
        %v1587 = vunpack.c.h.b16 %v1545
        %v1588 = vunpack.c.l.b16 %v1546
        %v1589 = vunpack.c.h.b16 %v1546
        %v1590 = vunpack.c.l.b16 %v1547
        %v1591 = vunpack.c.h.b16 %v1547
        %v1592 = vunpack.c.l.b16 %v1548
        %v1593 = vunpack.c.h.b16 %v1548
        %v1594 = vunpack.c.l.b16 %v1549
        %v1595 = vunpack.c.h.b16 %v1549
        %v1596 = vunpack.c.l.b16 %v1550
        %v1597 = vunpack.c.h.b16 %v1550
        %v1598 = vunpack.c.l.b16 %v1551
        %v1599 = vunpack.c.h.b16 %v1551
        %v1600 = vpack.c.b16 %v1570, %v1568
        %v1601 = vpack.c.b16 %v1571, %v1569
        %v1602 = vpack.c.b16 %v1574, %v1572
        %v1603 = vpack.c.b16 %v1575, %v1573
        %v1604 = vpack.c.b16 %v1578, %v1576
        %v1605 = vpack.c.b16 %v1579, %v1577
        %v1606 = vpack.c.b16 %v1582, %v1580
        %v1607 = vpack.c.b16 %v1583, %v1581
        %v1608 = vpack.c.b16 %v1586, %v1584
        %v1609 = vpack.c.b16 %v1587, %v1585
        %v1610 = vpack.c.b16 %v1590, %v1588
        %v1611 = vpack.c.b16 %v1591, %v1589
        %v1612 = vpack.c.b16 %v1594, %v1592
        %v1613 = vpack.c.b16 %v1595, %v1593
        %v1614 = vpack.c.b16 %v1598, %v1596
        %v1615 = vpack.c.b16 %v1599, %v1597
        %1632 = vmatprep.subr.bf16.mxu0 %v1601
        %1633 = vmatpush1.bf16.msra.mxu0 %v1600
        %1634 = vmatprep.subr.bf16.mxu0 %v1603
        %1635 = vmatpush1.bf16.msra.mxu0 %v1602
        %1636 = vmatprep.subr.bf16.mxu0 %v1605
        %1637 = vmatpush1.bf16.msra.mxu0 %v1604
        %1638 = vmatprep.subr.bf16.mxu0 %v1607
        %1639 = vmatpush1.bf16.msra.mxu0 %v1606
        %1640 = vmatprep.subr.bf16.mxu0 %v1609
        %1641 = vmatpush1.bf16.msra.mxu0 %v1608
        %1642 = vmatprep.subr.bf16.mxu0 %v1611
        %1643 = vmatpush1.bf16.msra.mxu0 %v1610
        %1644 = vmatprep.subr.bf16.mxu0 %v1613
        %1645 = vmatpush1.bf16.msra.mxu0 %v1612
        %1646 = vmatprep.subr.bf16.mxu0 %v1615
        %1647 = vmatpush1.bf16.msra.mxu0 %v1614
        %1648 = vmatprep.subr.bf16.mxu0 0
        %1649 = vmatpush1.bf16.msra.mxu0 0
        %1650 = vmatprep.subr.bf16.mxu0 0
        %1651 = vmatpush1.bf16.msra.mxu0 0
        %1652 = vmatprep.subr.bf16.mxu0 0
        %1653 = vmatpush1.bf16.msra.mxu0 0
        %1654 = vmatprep.subr.bf16.mxu0 0
        %1655 = vmatpush1.bf16.msra.mxu0 0
        %1656 = vmatprep.subr.bf16.mxu0 0
        %1657 = vmatpush1.bf16.msra.mxu0 0
        %1658 = vmatprep.subr.bf16.mxu0 0
        %1659 = vmatpush1.bf16.msra.mxu0 0
        %1660 = vmatprep.subr.bf16.mxu0 0
        %1661 = vmatpush1.bf16.msra.mxu0 0
        %1662 = vmatprep.subr.bf16.mxu0 0
        %1663 = vmatpush1.bf16.msra.mxu0 0
        %1664 = vmatprep.mubr.bf16.mxu0 0
        %1665 = vmatmul.mubr.bf16.gmra.mrb[0].mxu0 %v925
        %v1666 = vpop.f32.mrb[0].mxu0
        %v1667 = vadd.f32 0.0, %v1666
        %v1668 = vpop.f32.mrb[0].mxu0
        %v1669 = vadd.f32 0.0, %v1668
        %v1670 = vpop.f32.mrb[0].mxu0
        %v1671 = vadd.f32 0.0, %v1670
        %v1672 = vpop.f32.mrb[0].mxu0
        %v1673 = vadd.f32 0.0, %v1672
        %1674 = vmatprep.mubr.bf16.mxu0 0
        %1675 = vmatmul.mubr.bf16.gmra.mrb[0].mxu0 %v926
        %v1676 = vpop.f32.mrb[0].mxu0
        %v1677 = vadd.f32 0.0, %v1676
        %v1678 = vpop.f32.mrb[0].mxu0
        %v1679 = vadd.f32 0.0, %v1678
        %v1680 = vpop.f32.mrb[0].mxu0
        %v1681 = vadd.f32 0.0, %v1680
        %v1682 = vpop.f32.mrb[0].mxu0
        %v1683 = vadd.f32 0.0, %v1682
        %1684 = vmatprep.mubr.bf16.mxu0 0
        %1685 = vmatmul.mubr.bf16.gmra.mrb[0].mxu0 %v927
        %v1686 = vpop.f32.mrb[0].mxu0
        %v1687 = vadd.f32 0.0, %v1686
        %v1688 = vpop.f32.mrb[0].mxu0
        %v1689 = vadd.f32 0.0, %v1688
        %v1690 = vpop.f32.mrb[0].mxu0
        %v1691 = vadd.f32 0.0, %v1690
        %v1692 = vpop.f32.mrb[0].mxu0
        %v1693 = vadd.f32 0.0, %v1692
        %1694 = vmatprep.mubr.bf16.mxu0 0
        %1695 = vmatmul.mubr.bf16.gmra.mrb[0].mxu0 %v928
        %v1696 = vpop.f32.mrb[0].mxu0
        %v1697 = vadd.f32 0.0, %v1696
        %v1698 = vpop.f32.mrb[0].mxu0
        %v1699 = vadd.f32 0.0, %v1698
        %v1700 = vpop.f32.mrb[0].mxu0
        %v1701 = vadd.f32 0.0, %v1700
        %v1702 = vpop.f32.mrb[0].mxu0
        %v1703 = vadd.f32 0.0, %v1702
        %1704 = vmatprep.mubr.bf16.mxu0 0
        %1705 = vmatmul.mubr.bf16.gmra.mrb[0].mxu0 %v929
        %v1706 = vpop.f32.mrb[0].mxu0
        %v1707 = vadd.f32 0.0, %v1706
        %v1708 = vpop.f32.mrb[0].mxu0
        %v1709 = vadd.f32 0.0, %v1708
        %v1710 = vpop.f32.mrb[0].mxu0
        %v1711 = vadd.f32 0.0, %v1710
        %v1712 = vpop.f32.mrb[0].mxu0
        %v1713 = vadd.f32 0.0, %v1712
        %1714 = vmatprep.mubr.bf16.mxu0 0
        %1715 = vmatmul.mubr.bf16.gmra.mrb[0].mxu0 %v930
        %v1716 = vpop.f32.mrb[0].mxu0
        %v1717 = vadd.f32 0.0, %v1716
        %v1718 = vpop.f32.mrb[0].mxu0
        %v1719 = vadd.f32 0.0, %v1718
        %v1720 = vpop.f32.mrb[0].mxu0
        %v1721 = vadd.f32 0.0, %v1720
        %v1722 = vpop.f32.mrb[0].mxu0
        %v1723 = vadd.f32 0.0, %v1722
        %1724 = vmatprep.mubr.bf16.mxu0 0
        %1725 = vmatmul.mubr.bf16.gmra.mrb[0].mxu0 %v931
        %v1726 = vpop.f32.mrb[0].mxu0
        %v1727 = vadd.f32 0.0, %v1726
        %v1728 = vpop.f32.mrb[0].mxu0
        %v1729 = vadd.f32 0.0, %v1728
        %v1730 = vpop.f32.mrb[0].mxu0
        %v1731 = vadd.f32 0.0, %v1730
        %v1732 = vpop.f32.mrb[0].mxu0
        %v1733 = vadd.f32 0.0, %v1732
        %1734 = vmatprep.mubr.bf16.mxu0 0
        %1735 = vmatmul.mubr.bf16.gmra.mrb[0].mxu0 %v932
        %v1736 = vpop.f32.mrb[0].mxu0
        %v1737 = vadd.f32 0.0, %v1736
        %v1738 = vpop.f32.mrb[0].mxu0
        %v1739 = vadd.f32 0.0, %v1738
        %v1740 = vpop.f32.mrb[0].mxu0
        %v1741 = vadd.f32 0.0, %v1740
        %v1742 = vpop.f32.mrb[0].mxu0
        %v1743 = vadd.f32 0.0, %v1742
        %1744 = vmatprep.mubr.bf16.mxu0 0
        %1745 = vmatmul.mubr.bf16.gmra.mrb[0].mxu0 %v933
        %v1746 = vpop.f32.mrb[0].mxu0
        %v1747 = vadd.f32 0.0, %v1746
        %v1748 = vpop.f32.mrb[0].mxu0
        %v1749 = vadd.f32 0.0, %v1748
        %v1750 = vpop.f32.mrb[0].mxu0
        %v1751 = vadd.f32 0.0, %v1750
        %v1752 = vpop.f32.mrb[0].mxu0
        %v1753 = vadd.f32 0.0, %v1752
        %1754 = vmatprep.mubr.bf16.mxu0 0
        %1755 = vmatmul.mubr.bf16.gmra.mrb[0].mxu0 %v934
        %v1756 = vpop.f32.mrb[0].mxu0
        %v1757 = vadd.f32 0.0, %v1756
        %v1758 = vpop.f32.mrb[0].mxu0
        %v1759 = vadd.f32 0.0, %v1758
        %v1760 = vpop.f32.mrb[0].mxu0
        %v1761 = vadd.f32 0.0, %v1760
        %v1762 = vpop.f32.mrb[0].mxu0
        %v1763 = vadd.f32 0.0, %v1762
        %1764 = vmatprep.mubr.bf16.mxu0 0
        %1765 = vmatmul.mubr.bf16.gmra.mrb[0].mxu0 %v935
        %v1766 = vpop.f32.mrb[0].mxu0
        %v1767 = vadd.f32 0.0, %v1766
        %v1768 = vpop.f32.mrb[0].mxu0
        %v1769 = vadd.f32 0.0, %v1768
        %v1770 = vpop.f32.mrb[0].mxu0
        %v1771 = vadd.f32 0.0, %v1770
        %v1772 = vpop.f32.mrb[0].mxu0
        %v1773 = vadd.f32 0.0, %v1772
        %1774 = vmatprep.mubr.bf16.mxu0 0
        %1775 = vmatmul.mubr.bf16.gmra.mrb[0].mxu0 %v936
        %v1776 = vpop.f32.mrb[0].mxu0
        %v1777 = vadd.f32 0.0, %v1776
        %v1778 = vpop.f32.mrb[0].mxu0
        %v1779 = vadd.f32 0.0, %v1778
        %v1780 = vpop.f32.mrb[0].mxu0
        %v1781 = vadd.f32 0.0, %v1780
        %v1782 = vpop.f32.mrb[0].mxu0
        %v1783 = vadd.f32 0.0, %v1782
        %1784 = vmatprep.mubr.bf16.mxu0 0
        %1785 = vmatmul.mubr.bf16.gmra.mrb[0].mxu0 %v937
        %v1786 = vpop.f32.mrb[0].mxu0
        %v1787 = vadd.f32 0.0, %v1786
        %v1788 = vpop.f32.mrb[0].mxu0
        %v1789 = vadd.f32 0.0, %v1788
        %v1790 = vpop.f32.mrb[0].mxu0
        %v1791 = vadd.f32 0.0, %v1790
        %v1792 = vpop.f32.mrb[0].mxu0
        %v1793 = vadd.f32 0.0, %v1792
        %1794 = vmatprep.mubr.bf16.mxu0 0
        %1795 = vmatmul.mubr.bf16.gmra.mrb[0].mxu0 %v938
        %v1796 = vpop.f32.mrb[0].mxu0
        %v1797 = vadd.f32 0.0, %v1796
        %v1798 = vpop.f32.mrb[0].mxu0
        %v1799 = vadd.f32 0.0, %v1798
        %v1800 = vpop.f32.mrb[0].mxu0
        %v1801 = vadd.f32 0.0, %v1800
        %v1802 = vpop.f32.mrb[0].mxu0
        %v1803 = vadd.f32 0.0, %v1802
        %1804 = vmatprep.mubr.bf16.mxu0 0
        %1805 = vmatmul.mubr.bf16.gmra.mrb[0].mxu0 %v939
        %v1806 = vpop.f32.mrb[0].mxu0
        %v1807 = vadd.f32 0.0, %v1806
        %v1808 = vpop.f32.mrb[0].mxu0
        %v1809 = vadd.f32 0.0, %v1808
        %v1810 = vpop.f32.mrb[0].mxu0
        %v1811 = vadd.f32 0.0, %v1810
        %v1812 = vpop.f32.mrb[0].mxu0
        %v1813 = vadd.f32 0.0, %v1812
        %1814 = vmatprep.mubr.bf16.mxu0 0
        %1815 = vmatmul.mubr.bf16.gmra.mrb[0].mxu0 0
        %v1816 = vpop.f32.mrb[0].mxu0
        %v1817 = vadd.f32 0.0, %v1816
        %v1818 = vpop.f32.mrb[0].mxu0
        %v1819 = vadd.f32 0.0, %v1818
        %v1820 = vpop.f32.mrb[0].mxu0
        %v1821 = vadd.f32 0.0, %v1820
        %v1822 = vpop.f32.mrb[0].mxu0
        %v1823 = vadd.f32 0.0, %v1822
        %1824 = vdwg.mxu0
        %v1825 = vadd.f32 %v1377, %v1667
        %v1826 = vadd.f32 %v1379, %v1669
        %v1827 = vadd.f32 %v1381, %v1671
        %v1828 = vadd.f32 %v1383, %v1673
        %v1829 = vadd.f32 %v1387, %v1677
        %v1830 = vadd.f32 %v1389, %v1679
        %v1831 = vadd.f32 %v1391, %v1681
        %v1832 = vadd.f32 %v1393, %v1683
        %v1833 = vadd.f32 %v1397, %v1687
        %v1834 = vadd.f32 %v1399, %v1689
        %v1835 = vadd.f32 %v1401, %v1691
        %v1836 = vadd.f32 %v1403, %v1693
        %v1837 = vadd.f32 %v1407, %v1697
        %v1838 = vadd.f32 %v1409, %v1699
        %v1839 = vadd.f32 %v1411, %v1701
        %v1840 = vadd.f32 %v1413, %v1703
        %v1841 = vadd.f32 %v1417, %v1707
        %v1842 = vadd.f32 %v1419, %v1709
        %v1843 = vadd.f32 %v1421, %v1711
        %v1844 = vadd.f32 %v1423, %v1713
        %v1845 = vadd.f32 %v1427, %v1717
        %v1846 = vadd.f32 %v1429, %v1719
        %v1847 = vadd.f32 %v1431, %v1721
        %v1848 = vadd.f32 %v1433, %v1723
        %v1849 = vadd.f32 %v1437, %v1727
        %v1850 = vadd.f32 %v1439, %v1729
        %v1851 = vadd.f32 %v1441, %v1731
        %v1852 = vadd.f32 %v1443, %v1733
        %v1853 = vadd.f32 %v1447, %v1737
        %v1854 = vadd.f32 %v1449, %v1739
        %v1855 = vadd.f32 %v1451, %v1741
        %v1856 = vadd.f32 %v1453, %v1743
        %v1857 = vadd.f32 %v1457, %v1747
        %v1858 = vadd.f32 %v1459, %v1749
        %v1859 = vadd.f32 %v1461, %v1751
        %v1860 = vadd.f32 %v1463, %v1753
        %v1861 = vadd.f32 %v1467, %v1757
        %v1862 = vadd.f32 %v1469, %v1759
        %v1863 = vadd.f32 %v1471, %v1761
        %v1864 = vadd.f32 %v1473, %v1763
        %v1865 = vadd.f32 %v1477, %v1767
        %v1866 = vadd.f32 %v1479, %v1769
        %v1867 = vadd.f32 %v1481, %v1771
        %v1868 = vadd.f32 %v1483, %v1773
        %v1869 = vadd.f32 %v1487, %v1777
        %v1870 = vadd.f32 %v1489, %v1779
        %v1871 = vadd.f32 %v1491, %v1781
        %v1872 = vadd.f32 %v1493, %v1783
        %v1873 = vadd.f32 %v1497, %v1787
        %v1874 = vadd.f32 %v1499, %v1789
        %v1875 = vadd.f32 %v1501, %v1791
        %v1876 = vadd.f32 %v1503, %v1793
        %v1877 = vadd.f32 %v1507, %v1797
        %v1878 = vadd.f32 %v1509, %v1799
        %v1879 = vadd.f32 %v1511, %v1801
        %v1880 = vadd.f32 %v1513, %v1803
        %v1881 = vadd.f32 %v1517, %v1807
        %v1882 = vadd.f32 %v1519, %v1809
        %v1883 = vadd.f32 %v1521, %v1811
        %v1884 = vadd.f32 %v1523, %v1813
        %v1885 = vadd.f32 %v1527, %v1817
        %v1886 = vadd.f32 %v1529, %v1819
        %v1887 = vadd.f32 %v1531, %v1821
        %v1888 = vadd.f32 %v1533, %v1823
        %vm1889 = vsmask.f32 7424
        %v1891 = vshrl.u32 %v924, 16
        %v1893 = vshll.u32 %v924, 16
        %v1895 = vrot.slane %v1893, 1
        %v1896 = vor.u32 %v1891, %v1895
        %v1898 = vshll.u32 %v940, 16
        %v1900 = vrot.slane %v1898, 1
        %v1901 = vsel %vm1889, %v1896, %v1900
        %v1903 = vshrl.u32 %v925, 16
        %v1905 = vshll.u32 %v925, 16
        %v1907 = vrot.slane %v1905, 1
        %v1908 = vor.u32 %v1903, %v1907
        %v1910 = vshll.u32 %v941, 16
        %v1912 = vrot.slane %v1910, 1
        %v1913 = vsel %vm1889, %v1908, %v1912
        %v1915 = vshrl.u32 %v926, 16
        %v1917 = vshll.u32 %v926, 16
        %v1919 = vrot.slane %v1917, 1
        %v1920 = vor.u32 %v1915, %v1919
        %v1922 = vshll.u32 %v942, 16
        %v1924 = vrot.slane %v1922, 1
        %v1925 = vsel %vm1889, %v1920, %v1924
        %v1927 = vshrl.u32 %v927, 16
        %v1929 = vshll.u32 %v927, 16
        %v1931 = vrot.slane %v1929, 1
        %v1932 = vor.u32 %v1927, %v1931
        %v1934 = vshll.u32 %v943, 16
        %v1936 = vrot.slane %v1934, 1
        %v1937 = vsel %vm1889, %v1932, %v1936
        %v1939 = vshrl.u32 %v928, 16
        %v1941 = vshll.u32 %v928, 16
        %v1943 = vrot.slane %v1941, 1
        %v1944 = vor.u32 %v1939, %v1943
        %v1946 = vshll.u32 %v944, 16
        %v1948 = vrot.slane %v1946, 1
        %v1949 = vsel %vm1889, %v1944, %v1948
        %v1951 = vshrl.u32 %v929, 16
        %v1953 = vshll.u32 %v929, 16
        %v1955 = vrot.slane %v1953, 1
        %v1956 = vor.u32 %v1951, %v1955
        %v1958 = vshll.u32 %v945, 16
        %v1960 = vrot.slane %v1958, 1
        %v1961 = vsel %vm1889, %v1956, %v1960
        %v1963 = vshrl.u32 %v930, 16
        %v1965 = vshll.u32 %v930, 16
        %v1967 = vrot.slane %v1965, 1
        %v1968 = vor.u32 %v1963, %v1967
        %v1970 = vshll.u32 %v946, 16
        %v1972 = vrot.slane %v1970, 1
        %v1973 = vsel %vm1889, %v1968, %v1972
        %v1975 = vshrl.u32 %v931, 16
        %v1977 = vshll.u32 %v931, 16
        %v1979 = vrot.slane %v1977, 1
        %v1980 = vor.u32 %v1975, %v1979
        %v1982 = vshll.u32 %v947, 16
        %v1984 = vrot.slane %v1982, 1
        %v1985 = vsel %vm1889, %v1980, %v1984
        %v1987 = vshrl.u32 %v932, 16
        %v1989 = vshll.u32 %v932, 16
        %v1991 = vrot.slane %v1989, 1
        %v1992 = vor.u32 %v1987, %v1991
        %v1994 = vshll.u32 %v948, 16
        %v1996 = vrot.slane %v1994, 1
        %v1997 = vsel %vm1889, %v1992, %v1996
        %v1999 = vshrl.u32 %v933, 16
        %v2001 = vshll.u32 %v933, 16
        %v2003 = vrot.slane %v2001, 1
        %v2004 = vor.u32 %v1999, %v2003
        %v2006 = vshll.u32 %v949, 16
        %v2008 = vrot.slane %v2006, 1
        %v2009 = vsel %vm1889, %v2004, %v2008
        %v2011 = vshrl.u32 %v934, 16
        %v2013 = vshll.u32 %v934, 16
        %v2015 = vrot.slane %v2013, 1
        %v2016 = vor.u32 %v2011, %v2015
        %v2018 = vshll.u32 %v950, 16
        %v2020 = vrot.slane %v2018, 1
        %v2021 = vsel %vm1889, %v2016, %v2020
        %v2023 = vshrl.u32 %v935, 16
        %v2025 = vshll.u32 %v935, 16
        %v2027 = vrot.slane %v2025, 1
        %v2028 = vor.u32 %v2023, %v2027
        %v2030 = vshll.u32 %v951, 16
        %v2032 = vrot.slane %v2030, 1
        %v2033 = vsel %vm1889, %v2028, %v2032
        %v2035 = vshrl.u32 %v936, 16
        %v2037 = vshll.u32 %v936, 16
        %v2039 = vrot.slane %v2037, 1
        %v2040 = vor.u32 %v2035, %v2039
        %v2042 = vshll.u32 %v952, 16
        %v2044 = vrot.slane %v2042, 1
        %v2045 = vsel %vm1889, %v2040, %v2044
        %v2047 = vshrl.u32 %v937, 16
        %v2049 = vshll.u32 %v937, 16
        %v2051 = vrot.slane %v2049, 1
        %v2052 = vor.u32 %v2047, %v2051
        %v2054 = vshll.u32 %v953, 16
        %v2056 = vrot.slane %v2054, 1
        %v2057 = vsel %vm1889, %v2052, %v2056
        %v2059 = vshrl.u32 %v938, 16
        %v2061 = vshll.u32 %v938, 16
        %v2063 = vrot.slane %v2061, 1
        %v2064 = vor.u32 %v2059, %v2063
        %v2066 = vshll.u32 %v954, 16
        %v2068 = vrot.slane %v2066, 1
        %v2069 = vsel %vm1889, %v2064, %v2068
        %v2071 = vshrl.u32 %v939, 16
        %v2073 = vshll.u32 %v939, 16
        %v2075 = vrot.slane %v2073, 1
        %v2076 = vor.u32 %v2071, %v2075
        %v2078 = vshll.u32 %v955, 16
        %v2080 = vrot.slane %v2078, 1
        %v2081 = vsel %vm1889, %v2076, %v2080
        %s2098 = scalar_lea.vmem [#allocation7], 128
        %v2099 = vld [vmem:[%s2098] sm:$0xff]
        %v2100 = vld [vmem:[%s2098 + $0x8] sm:$0xff]
        %v2101 = vld [vmem:[%s2098 + $0x10] sm:$0xff]
        %v2102 = vld [vmem:[%s2098 + $0x18] sm:$0xff]
        %v2103 = vld [vmem:[%s2098 + $0x20] sm:$0xff]
        %v2104 = vld [vmem:[%s2098 + $0x28] sm:$0xff]
        %v2105 = vld [vmem:[%s2098 + $0x30] sm:$0xff]
        %v2106 = vld [vmem:[%s2098 + $0x38] sm:$0xff]
        %v2107 = vld [vmem:[%s2098 + $0x40] sm:$0xff]
        %v2108 = vld [vmem:[%s2098 + $0x48] sm:$0xff]
        %v2109 = vld [vmem:[%s2098 + $0x50] sm:$0xff]
        %v2110 = vld [vmem:[%s2098 + $0x58] sm:$0xff]
        %v2111 = vld [vmem:[%s2098 + $0x60] sm:$0xff]
        %v2112 = vld [vmem:[%s2098 + $0x68] sm:$0xff]
        %v2113 = vld [vmem:[%s2098 + $0x70] sm:$0xff]
        %v2114 = vld [vmem:[%s2098 + $0x78] sm:$0xff]
        %v2131 = vunpack.c.l.b16 %v2099
        %v2132 = vunpack.c.h.b16 %v2099
        %v2133 = vunpack.c.l.b16 %v2100
        %v2134 = vunpack.c.h.b16 %v2100
        %v2135 = vunpack.c.l.b16 %v2101
        %v2136 = vunpack.c.h.b16 %v2101
        %v2137 = vunpack.c.l.b16 %v2102
        %v2138 = vunpack.c.h.b16 %v2102
        %v2139 = vunpack.c.l.b16 %v2103
        %v2140 = vunpack.c.h.b16 %v2103
        %v2141 = vunpack.c.l.b16 %v2104
        %v2142 = vunpack.c.h.b16 %v2104
        %v2143 = vunpack.c.l.b16 %v2105
        %v2144 = vunpack.c.h.b16 %v2105
        %v2145 = vunpack.c.l.b16 %v2106
        %v2146 = vunpack.c.h.b16 %v2106
        %v2147 = vunpack.c.l.b16 %v2107
        %v2148 = vunpack.c.h.b16 %v2107
        %v2149 = vunpack.c.l.b16 %v2108
        %v2150 = vunpack.c.h.b16 %v2108
        %v2151 = vunpack.c.l.b16 %v2109
        %v2152 = vunpack.c.h.b16 %v2109
        %v2153 = vunpack.c.l.b16 %v2110
        %v2154 = vunpack.c.h.b16 %v2110
        %v2155 = vunpack.c.l.b16 %v2111
        %v2156 = vunpack.c.h.b16 %v2111
        %v2157 = vunpack.c.l.b16 %v2112
        %v2158 = vunpack.c.h.b16 %v2112
        %v2159 = vunpack.c.l.b16 %v2113
        %v2160 = vunpack.c.h.b16 %v2113
        %v2161 = vunpack.c.l.b16 %v2114
        %v2162 = vunpack.c.h.b16 %v2114
        %v2163 = vpack.c.b16 %v2133, %v2131
        %v2164 = vpack.c.b16 %v2134, %v2132
        %v2165 = vpack.c.b16 %v2137, %v2135
        %v2166 = vpack.c.b16 %v2138, %v2136
        %v2167 = vpack.c.b16 %v2141, %v2139
        %v2168 = vpack.c.b16 %v2142, %v2140
        %v2169 = vpack.c.b16 %v2145, %v2143
        %v2170 = vpack.c.b16 %v2146, %v2144
        %v2171 = vpack.c.b16 %v2149, %v2147
        %v2172 = vpack.c.b16 %v2150, %v2148
        %v2173 = vpack.c.b16 %v2153, %v2151
        %v2174 = vpack.c.b16 %v2154, %v2152
        %v2175 = vpack.c.b16 %v2157, %v2155
        %v2176 = vpack.c.b16 %v2158, %v2156
        %v2177 = vpack.c.b16 %v2161, %v2159
        %v2178 = vpack.c.b16 %v2162, %v2160
        %2195 = vmatprep.subr.bf16.mxu0 %v2164
        %2196 = vmatpush1.bf16.msra.mxu0 %v2163
        %2197 = vmatprep.subr.bf16.mxu0 %v2166
        %2198 = vmatpush1.bf16.msra.mxu0 %v2165
        %2199 = vmatprep.subr.bf16.mxu0 %v2168
        %2200 = vmatpush1.bf16.msra.mxu0 %v2167
        %2201 = vmatprep.subr.bf16.mxu0 %v2170
        %2202 = vmatpush1.bf16.msra.mxu0 %v2169
        %2203 = vmatprep.subr.bf16.mxu0 %v2172
        %2204 = vmatpush1.bf16.msra.mxu0 %v2171
        %2205 = vmatprep.subr.bf16.mxu0 %v2174
        %2206 = vmatpush1.bf16.msra.mxu0 %v2173
        %2207 = vmatprep.subr.bf16.mxu0 %v2176
        %2208 = vmatpush1.bf16.msra.mxu0 %v2175
        %2209 = vmatprep.subr.bf16.mxu0 %v2178
        %2210 = vmatpush1.bf16.msra.mxu0 %v2177
        %2211 = vmatprep.subr.bf16.mxu0 0
        %2212 = vmatpush1.bf16.msra.mxu0 0
        %2213 = vmatprep.subr.bf16.mxu0 0
        %2214 = vmatpush1.bf16.msra.mxu0 0
        %2215 = vmatprep.subr.bf16.mxu0 0
        %2216 = vmatpush1.bf16.msra.mxu0 0
        %2217 = vmatprep.subr.bf16.mxu0 0
        %2218 = vmatpush1.bf16.msra.mxu0 0
        %2219 = vmatprep.subr.bf16.mxu0 0
        %2220 = vmatpush1.bf16.msra.mxu0 0
        %2221 = vmatprep.subr.bf16.mxu0 0
        %2222 = vmatpush1.bf16.msra.mxu0 0
        %2223 = vmatprep.subr.bf16.mxu0 0
        %2224 = vmatpush1.bf16.msra.mxu0 0
        %2225 = vmatprep.subr.bf16.mxu0 0
        %2226 = vmatpush1.bf16.msra.mxu0 0
        %2227 = vmatprep.mubr.bf16.mxu0 0
        %2228 = vmatmul.mubr.bf16.gmra.mrb[0].mxu0 0
        %v2229 = vpop.f32.mrb[0].mxu0
        %v2230 = vadd.f32 0.0, %v2229
        %v2231 = vpop.f32.mrb[0].mxu0
        %v2232 = vadd.f32 0.0, %v2231
        %v2233 = vpop.f32.mrb[0].mxu0
        %v2234 = vadd.f32 0.0, %v2233
        %v2235 = vpop.f32.mrb[0].mxu0
        %v2236 = vadd.f32 0.0, %v2235
        %2237 = vmatprep.mubr.bf16.mxu0 0
        %2238 = vmatmul.mubr.bf16.gmra.mrb[0].mxu0 %v1901
        %v2239 = vpop.f32.mrb[0].mxu0
        %v2240 = vadd.f32 0.0, %v2239
        %v2241 = vpop.f32.mrb[0].mxu0
        %v2242 = vadd.f32 0.0, %v2241
        %v2243 = vpop.f32.mrb[0].mxu0
        %v2244 = vadd.f32 0.0, %v2243
        %v2245 = vpop.f32.mrb[0].mxu0
        %v2246 = vadd.f32 0.0, %v2245
        %2247 = vmatprep.mubr.bf16.mxu0 0
        %2248 = vmatmul.mubr.bf16.gmra.mrb[0].mxu0 %v1913
        %v2249 = vpop.f32.mrb[0].mxu0
        %v2250 = vadd.f32 0.0, %v2249
        %v2251 = vpop.f32.mrb[0].mxu0
        %v2252 = vadd.f32 0.0, %v2251
        %v2253 = vpop.f32.mrb[0].mxu0
        %v2254 = vadd.f32 0.0, %v2253
        %v2255 = vpop.f32.mrb[0].mxu0
        %v2256 = vadd.f32 0.0, %v2255
        %2257 = vmatprep.mubr.bf16.mxu0 0
        %2258 = vmatmul.mubr.bf16.gmra.mrb[0].mxu0 %v1925
        %v2259 = vpop.f32.mrb[0].mxu0
        %v2260 = vadd.f32 0.0, %v2259
        %v2261 = vpop.f32.mrb[0].mxu0
        %v2262 = vadd.f32 0.0, %v2261
        %v2263 = vpop.f32.mrb[0].mxu0
        %v2264 = vadd.f32 0.0, %v2263
        %v2265 = vpop.f32.mrb[0].mxu0
        %v2266 = vadd.f32 0.0, %v2265
        %2267 = vmatprep.mubr.bf16.mxu0 0
        %2268 = vmatmul.mubr.bf16.gmra.mrb[0].mxu0 %v1937
        %v2269 = vpop.f32.mrb[0].mxu0
        %v2270 = vadd.f32 0.0, %v2269
        %v2271 = vpop.f32.mrb[0].mxu0
        %v2272 = vadd.f32 0.0, %v2271
        %v2273 = vpop.f32.mrb[0].mxu0
        %v2274 = vadd.f32 0.0, %v2273
        %v2275 = vpop.f32.mrb[0].mxu0
        %v2276 = vadd.f32 0.0, %v2275
        %2277 = vmatprep.mubr.bf16.mxu0 0
        %2278 = vmatmul.mubr.bf16.gmra.mrb[0].mxu0 %v1949
        %v2279 = vpop.f32.mrb[0].mxu0
        %v2280 = vadd.f32 0.0, %v2279
        %v2281 = vpop.f32.mrb[0].mxu0
        %v2282 = vadd.f32 0.0, %v2281
        %v2283 = vpop.f32.mrb[0].mxu0
        %v2284 = vadd.f32 0.0, %v2283
        %v2285 = vpop.f32.mrb[0].mxu0
        %v2286 = vadd.f32 0.0, %v2285
        %2287 = vmatprep.mubr.bf16.mxu0 0
        %2288 = vmatmul.mubr.bf16.gmra.mrb[0].mxu0 %v1961
        %v2289 = vpop.f32.mrb[0].mxu0
        %v2290 = vadd.f32 0.0, %v2289
        %v2291 = vpop.f32.mrb[0].mxu0
        %v2292 = vadd.f32 0.0, %v2291
        %v2293 = vpop.f32.mrb[0].mxu0
        %v2294 = vadd.f32 0.0, %v2293
        %v2295 = vpop.f32.mrb[0].mxu0
        %v2296 = vadd.f32 0.0, %v2295
        %2297 = vmatprep.mubr.bf16.mxu0 0
        %2298 = vmatmul.mubr.bf16.gmra.mrb[0].mxu0 %v1973
        %v2299 = vpop.f32.mrb[0].mxu0
        %v2300 = vadd.f32 0.0, %v2299
        %v2301 = vpop.f32.mrb[0].mxu0
        %v2302 = vadd.f32 0.0, %v2301
        %v2303 = vpop.f32.mrb[0].mxu0
        %v2304 = vadd.f32 0.0, %v2303
        %v2305 = vpop.f32.mrb[0].mxu0
        %v2306 = vadd.f32 0.0, %v2305
        %2307 = vmatprep.mubr.bf16.mxu0 0
        %2308 = vmatmul.mubr.bf16.gmra.mrb[0].mxu0 %v1985
        %v2309 = vpop.f32.mrb[0].mxu0
        %v2310 = vadd.f32 0.0, %v2309
        %v2311 = vpop.f32.mrb[0].mxu0
        %v2312 = vadd.f32 0.0, %v2311
        %v2313 = vpop.f32.mrb[0].mxu0
        %v2314 = vadd.f32 0.0, %v2313
        %v2315 = vpop.f32.mrb[0].mxu0
        %v2316 = vadd.f32 0.0, %v2315
        %2317 = vmatprep.mubr.bf16.mxu0 0
        %2318 = vmatmul.mubr.bf16.gmra.mrb[0].mxu0 %v1997
        %v2319 = vpop.f32.mrb[0].mxu0
        %v2320 = vadd.f32 0.0, %v2319
        %v2321 = vpop.f32.mrb[0].mxu0
        %v2322 = vadd.f32 0.0, %v2321
        %v2323 = vpop.f32.mrb[0].mxu0
        %v2324 = vadd.f32 0.0, %v2323
        %v2325 = vpop.f32.mrb[0].mxu0
        %v2326 = vadd.f32 0.0, %v2325
        %2327 = vmatprep.mubr.bf16.mxu0 0
        %2328 = vmatmul.mubr.bf16.gmra.mrb[0].mxu0 %v2009
        %v2329 = vpop.f32.mrb[0].mxu0
        %v2330 = vadd.f32 0.0, %v2329
        %v2331 = vpop.f32.mrb[0].mxu0
        %v2332 = vadd.f32 0.0, %v2331
        %v2333 = vpop.f32.mrb[0].mxu0
        %v2334 = vadd.f32 0.0, %v2333
        %v2335 = vpop.f32.mrb[0].mxu0
        %v2336 = vadd.f32 0.0, %v2335
        %2337 = vmatprep.mubr.bf16.mxu0 0
        %2338 = vmatmul.mubr.bf16.gmra.mrb[0].mxu0 %v2021
        %v2339 = vpop.f32.mrb[0].mxu0
        %v2340 = vadd.f32 0.0, %v2339
        %v2341 = vpop.f32.mrb[0].mxu0
        %v2342 = vadd.f32 0.0, %v2341
        %v2343 = vpop.f32.mrb[0].mxu0
        %v2344 = vadd.f32 0.0, %v2343
        %v2345 = vpop.f32.mrb[0].mxu0
        %v2346 = vadd.f32 0.0, %v2345
        %2347 = vmatprep.mubr.bf16.mxu0 0
        %2348 = vmatmul.mubr.bf16.gmra.mrb[0].mxu0 %v2033
        %v2349 = vpop.f32.mrb[0].mxu0
        %v2350 = vadd.f32 0.0, %v2349
        %v2351 = vpop.f32.mrb[0].mxu0
        %v2352 = vadd.f32 0.0, %v2351
        %v2353 = vpop.f32.mrb[0].mxu0
        %v2354 = vadd.f32 0.0, %v2353
        %v2355 = vpop.f32.mrb[0].mxu0
        %v2356 = vadd.f32 0.0, %v2355
        %2357 = vmatprep.mubr.bf16.mxu0 0
        %2358 = vmatmul.mubr.bf16.gmra.mrb[0].mxu0 %v2045
        %v2359 = vpop.f32.mrb[0].mxu0
        %v2360 = vadd.f32 0.0, %v2359
        %v2361 = vpop.f32.mrb[0].mxu0
        %v2362 = vadd.f32 0.0, %v2361
        %v2363 = vpop.f32.mrb[0].mxu0
        %v2364 = vadd.f32 0.0, %v2363
        %v2365 = vpop.f32.mrb[0].mxu0
        %v2366 = vadd.f32 0.0, %v2365
        %2367 = vmatprep.mubr.bf16.mxu0 0
        %2368 = vmatmul.mubr.bf16.gmra.mrb[0].mxu0 %v2057
        %v2369 = vpop.f32.mrb[0].mxu0
        %v2370 = vadd.f32 0.0, %v2369
        %v2371 = vpop.f32.mrb[0].mxu0
        %v2372 = vadd.f32 0.0, %v2371
        %v2373 = vpop.f32.mrb[0].mxu0
        %v2374 = vadd.f32 0.0, %v2373
        %v2375 = vpop.f32.mrb[0].mxu0
        %v2376 = vadd.f32 0.0, %v2375
        %2377 = vmatprep.mubr.bf16.mxu0 0
        %2378 = vmatmul.mubr.bf16.gmra.mrb[0].mxu0 %v2069
        %v2379 = vpop.f32.mrb[0].mxu0
        %v2380 = vadd.f32 0.0, %v2379
        %v2381 = vpop.f32.mrb[0].mxu0
        %v2382 = vadd.f32 0.0, %v2381
        %v2383 = vpop.f32.mrb[0].mxu0
        %v2384 = vadd.f32 0.0, %v2383
        %v2385 = vpop.f32.mrb[0].mxu0
        %v2386 = vadd.f32 0.0, %v2385
        %2387 = vdwg.mxu0
        %v2388 = vadd.f32 %v1825, %v2230
        %v2389 = vadd.f32 %v1826, %v2232
        %v2390 = vadd.f32 %v1827, %v2234
        %v2391 = vadd.f32 %v1828, %v2236
        %v2392 = vadd.f32 %v1829, %v2240
        %v2393 = vadd.f32 %v1830, %v2242
        %v2394 = vadd.f32 %v1831, %v2244
        %v2395 = vadd.f32 %v1832, %v2246
        %v2396 = vadd.f32 %v1833, %v2250
        %v2397 = vadd.f32 %v1834, %v2252
        %v2398 = vadd.f32 %v1835, %v2254
        %v2399 = vadd.f32 %v1836, %v2256
        %v2400 = vadd.f32 %v1837, %v2260
        %v2401 = vadd.f32 %v1838, %v2262
        %v2402 = vadd.f32 %v1839, %v2264
        %v2403 = vadd.f32 %v1840, %v2266
        %v2404 = vadd.f32 %v1841, %v2270
        %v2405 = vadd.f32 %v1842, %v2272
        %v2406 = vadd.f32 %v1843, %v2274
        %v2407 = vadd.f32 %v1844, %v2276
        %v2408 = vadd.f32 %v1845, %v2280
        %v2409 = vadd.f32 %v1846, %v2282
        %v2410 = vadd.f32 %v1847, %v2284
        %v2411 = vadd.f32 %v1848, %v2286
        %v2412 = vadd.f32 %v1849, %v2290
        %v2413 = vadd.f32 %v1850, %v2292
        %v2414 = vadd.f32 %v1851, %v2294
        %v2415 = vadd.f32 %v1852, %v2296
        %v2416 = vadd.f32 %v1853, %v2300
        %v2417 = vadd.f32 %v1854, %v2302
        %v2418 = vadd.f32 %v1855, %v2304
        %v2419 = vadd.f32 %v1856, %v2306
        %v2420 = vadd.f32 %v1857, %v2310
        %v2421 = vadd.f32 %v1858, %v2312
        %v2422 = vadd.f32 %v1859, %v2314
        %v2423 = vadd.f32 %v1860, %v2316
        %v2424 = vadd.f32 %v1861, %v2320
        %v2425 = vadd.f32 %v1862, %v2322
        %v2426 = vadd.f32 %v1863, %v2324
        %v2427 = vadd.f32 %v1864, %v2326
        %v2428 = vadd.f32 %v1865, %v2330
        %v2429 = vadd.f32 %v1866, %v2332
        %v2430 = vadd.f32 %v1867, %v2334
        %v2431 = vadd.f32 %v1868, %v2336
        %v2432 = vadd.f32 %v1869, %v2340
        %v2433 = vadd.f32 %v1870, %v2342
        %v2434 = vadd.f32 %v1871, %v2344
        %v2435 = vadd.f32 %v1872, %v2346
        %v2436 = vadd.f32 %v1873, %v2350
        %v2437 = vadd.f32 %v1874, %v2352
        %v2438 = vadd.f32 %v1875, %v2354
        %v2439 = vadd.f32 %v1876, %v2356
        %v2440 = vadd.f32 %v1877, %v2360
        %v2441 = vadd.f32 %v1878, %v2362
        %v2442 = vadd.f32 %v1879, %v2364
        %v2443 = vadd.f32 %v1880, %v2366
        %v2444 = vadd.f32 %v1881, %v2370
        %v2445 = vadd.f32 %v1882, %v2372
        %v2446 = vadd.f32 %v1883, %v2374
        %v2447 = vadd.f32 %v1884, %v2376
        %v2448 = vadd.f32 %v1885, %v2380
        %v2449 = vadd.f32 %v1886, %v2382
        %v2450 = vadd.f32 %v1887, %v2384
        %v2451 = vadd.f32 %v1888, %v2386
        %s2452 = scalar_lea.vmem [#allocation7], 512
        %v2453 = vld [vmem:[%s2452] sm:$0xff]
        %v2454 = vld [vmem:[%s2452 + $0x8] sm:$0xff]
        %v2455 = vld [vmem:[%s2452 + $0x10] sm:$0xff]
        %v2456 = vld [vmem:[%s2452 + $0x18] sm:$0xff]
        %v2457 = vld [vmem:[%s2452 + $0x20] sm:$0xff]
        %v2458 = vld [vmem:[%s2452 + $0x28] sm:$0xff]
        %v2459 = vld [vmem:[%s2452 + $0x30] sm:$0xff]
        %v2460 = vld [vmem:[%s2452 + $0x38] sm:$0xff]
        %v2461 = vld [vmem:[%s2452 + $0x40] sm:$0xff]
        %v2462 = vld [vmem:[%s2452 + $0x48] sm:$0xff]
        %v2463 = vld [vmem:[%s2452 + $0x50] sm:$0xff]
        %v2464 = vld [vmem:[%s2452 + $0x58] sm:$0xff]
        %v2465 = vld [vmem:[%s2452 + $0x60] sm:$0xff]
        %v2466 = vld [vmem:[%s2452 + $0x68] sm:$0xff]
        %v2467 = vld [vmem:[%s2452 + $0x70] sm:$0xff]
        %v2468 = vld [vmem:[%s2452 + $0x78] sm:$0xff]
        %v2485 = vunpack.c.l.b16 %v2453
        %v2486 = vunpack.c.h.b16 %v2453
        %v2487 = vunpack.c.l.b16 %v2454
        %v2488 = vunpack.c.h.b16 %v2454
        %v2489 = vunpack.c.l.b16 %v2455
        %v2490 = vunpack.c.h.b16 %v2455
        %v2491 = vunpack.c.l.b16 %v2456
        %v2492 = vunpack.c.h.b16 %v2456
        %v2493 = vunpack.c.l.b16 %v2457
        %v2494 = vunpack.c.h.b16 %v2457
        %v2495 = vunpack.c.l.b16 %v2458
        %v2496 = vunpack.c.h.b16 %v2458
        %v2497 = vunpack.c.l.b16 %v2459
        %v2498 = vunpack.c.h.b16 %v2459
        %v2499 = vunpack.c.l.b16 %v2460
        %v2500 = vunpack.c.h.b16 %v2460
        %v2501 = vunpack.c.l.b16 %v2461
        %v2502 = vunpack.c.h.b16 %v2461
        %v2503 = vunpack.c.l.b16 %v2462
        %v2504 = vunpack.c.h.b16 %v2462
        %v2505 = vunpack.c.l.b16 %v2463
        %v2506 = vunpack.c.h.b16 %v2463
        %v2507 = vunpack.c.l.b16 %v2464
        %v2508 = vunpack.c.h.b16 %v2464
        %v2509 = vunpack.c.l.b16 %v2465
        %v2510 = vunpack.c.h.b16 %v2465
        %v2511 = vunpack.c.l.b16 %v2466
        %v2512 = vunpack.c.h.b16 %v2466
        %v2513 = vunpack.c.l.b16 %v2467
        %v2514 = vunpack.c.h.b16 %v2467
        %v2515 = vunpack.c.l.b16 %v2468
        %v2516 = vunpack.c.h.b16 %v2468
        %v2517 = vpack.c.b16 %v2487, %v2485
        %v2518 = vpack.c.b16 %v2488, %v2486
        %v2519 = vpack.c.b16 %v2491, %v2489
        %v2520 = vpack.c.b16 %v2492, %v2490
        %v2521 = vpack.c.b16 %v2495, %v2493
        %v2522 = vpack.c.b16 %v2496, %v2494
        %v2523 = vpack.c.b16 %v2499, %v2497
        %v2524 = vpack.c.b16 %v2500, %v2498
        %v2525 = vpack.c.b16 %v2503, %v2501
        %v2526 = vpack.c.b16 %v2504, %v2502
        %v2527 = vpack.c.b16 %v2507, %v2505
        %v2528 = vpack.c.b16 %v2508, %v2506
        %v2529 = vpack.c.b16 %v2511, %v2509
        %v2530 = vpack.c.b16 %v2512, %v2510
        %v2531 = vpack.c.b16 %v2515, %v2513
        %v2532 = vpack.c.b16 %v2516, %v2514
        %2549 = vmatprep.subr.bf16.mxu0 %v2518
        %2550 = vmatpush1.bf16.msra.mxu0 %v2517
        %2551 = vmatprep.subr.bf16.mxu0 %v2520
        %2552 = vmatpush1.bf16.msra.mxu0 %v2519
        %2553 = vmatprep.subr.bf16.mxu0 %v2522
        %2554 = vmatpush1.bf16.msra.mxu0 %v2521
        %2555 = vmatprep.subr.bf16.mxu0 %v2524
        %2556 = vmatpush1.bf16.msra.mxu0 %v2523
        %2557 = vmatprep.subr.bf16.mxu0 %v2526
        %2558 = vmatpush1.bf16.msra.mxu0 %v2525
        %2559 = vmatprep.subr.bf16.mxu0 %v2528
        %2560 = vmatpush1.bf16.msra.mxu0 %v2527
        %2561 = vmatprep.subr.bf16.mxu0 %v2530
        %2562 = vmatpush1.bf16.msra.mxu0 %v2529
        %2563 = vmatprep.subr.bf16.mxu0 %v2532
        %2564 = vmatpush1.bf16.msra.mxu0 %v2531
        %2565 = vmatprep.subr.bf16.mxu0 0
        %2566 = vmatpush1.bf16.msra.mxu0 0
        %2567 = vmatprep.subr.bf16.mxu0 0
        %2568 = vmatpush1.bf16.msra.mxu0 0
        %2569 = vmatprep.subr.bf16.mxu0 0
        %2570 = vmatpush1.bf16.msra.mxu0 0
        %2571 = vmatprep.subr.bf16.mxu0 0
        %2572 = vmatpush1.bf16.msra.mxu0 0
        %2573 = vmatprep.subr.bf16.mxu0 0
        %2574 = vmatpush1.bf16.msra.mxu0 0
        %2575 = vmatprep.subr.bf16.mxu0 0
        %2576 = vmatpush1.bf16.msra.mxu0 0
        %2577 = vmatprep.subr.bf16.mxu0 0
        %2578 = vmatpush1.bf16.msra.mxu0 0
        %2579 = vmatprep.subr.bf16.mxu0 0
        %2580 = vmatpush1.bf16.msra.mxu0 0
        %2581 = vmatprep.mubr.bf16.mxu0 0
        %2582 = vmatmul.mubr.bf16.gmra.mrb[0].mxu0 %v1901
        %v2583 = vpop.f32.mrb[0].mxu0
        %v2584 = vadd.f32 0.0, %v2583
        %v2585 = vpop.f32.mrb[0].mxu0
        %v2586 = vadd.f32 0.0, %v2585
        %v2587 = vpop.f32.mrb[0].mxu0
        %v2588 = vadd.f32 0.0, %v2587
        %v2589 = vpop.f32.mrb[0].mxu0
        %v2590 = vadd.f32 0.0, %v2589
        %2591 = vmatprep.mubr.bf16.mxu0 0
        %2592 = vmatmul.mubr.bf16.gmra.mrb[0].mxu0 %v1913
        %v2593 = vpop.f32.mrb[0].mxu0
        %v2594 = vadd.f32 0.0, %v2593
        %v2595 = vpop.f32.mrb[0].mxu0
        %v2596 = vadd.f32 0.0, %v2595
        %v2597 = vpop.f32.mrb[0].mxu0
        %v2598 = vadd.f32 0.0, %v2597
        %v2599 = vpop.f32.mrb[0].mxu0
        %v2600 = vadd.f32 0.0, %v2599
        %2601 = vmatprep.mubr.bf16.mxu0 0
        %2602 = vmatmul.mubr.bf16.gmra.mrb[0].mxu0 %v1925
        %v2603 = vpop.f32.mrb[0].mxu0
        %v2604 = vadd.f32 0.0, %v2603
        %v2605 = vpop.f32.mrb[0].mxu0
        %v2606 = vadd.f32 0.0, %v2605
        %v2607 = vpop.f32.mrb[0].mxu0
        %v2608 = vadd.f32 0.0, %v2607
        %v2609 = vpop.f32.mrb[0].mxu0
        %v2610 = vadd.f32 0.0, %v2609
        %2611 = vmatprep.mubr.bf16.mxu0 0
        %2612 = vmatmul.mubr.bf16.gmra.mrb[0].mxu0 %v1937
        %v2613 = vpop.f32.mrb[0].mxu0
        %v2614 = vadd.f32 0.0, %v2613
        %v2615 = vpop.f32.mrb[0].mxu0
        %v2616 = vadd.f32 0.0, %v2615
        %v2617 = vpop.f32.mrb[0].mxu0
        %v2618 = vadd.f32 0.0, %v2617
        %v2619 = vpop.f32.mrb[0].mxu0
        %v2620 = vadd.f32 0.0, %v2619
        %2621 = vmatprep.mubr.bf16.mxu0 0
        %2622 = vmatmul.mubr.bf16.gmra.mrb[0].mxu0 %v1949
        %v2623 = vpop.f32.mrb[0].mxu0
        %v2624 = vadd.f32 0.0, %v2623
        %v2625 = vpop.f32.mrb[0].mxu0
        %v2626 = vadd.f32 0.0, %v2625
        %v2627 = vpop.f32.mrb[0].mxu0
        %v2628 = vadd.f32 0.0, %v2627
        %v2629 = vpop.f32.mrb[0].mxu0
        %v2630 = vadd.f32 0.0, %v2629
        %2631 = vmatprep.mubr.bf16.mxu0 0
        %2632 = vmatmul.mubr.bf16.gmra.mrb[0].mxu0 %v1961
        %v2633 = vpop.f32.mrb[0].mxu0
        %v2634 = vadd.f32 0.0, %v2633
        %v2635 = vpop.f32.mrb[0].mxu0
        %v2636 = vadd.f32 0.0, %v2635
        %v2637 = vpop.f32.mrb[0].mxu0
        %v2638 = vadd.f32 0.0, %v2637
        %v2639 = vpop.f32.mrb[0].mxu0
        %v2640 = vadd.f32 0.0, %v2639
        %2641 = vmatprep.mubr.bf16.mxu0 0
        %2642 = vmatmul.mubr.bf16.gmra.mrb[0].mxu0 %v1973
        %v2643 = vpop.f32.mrb[0].mxu0
        %v2644 = vadd.f32 0.0, %v2643
        %v2645 = vpop.f32.mrb[0].mxu0
        %v2646 = vadd.f32 0.0, %v2645
        %v2647 = vpop.f32.mrb[0].mxu0
        %v2648 = vadd.f32 0.0, %v2647
        %v2649 = vpop.f32.mrb[0].mxu0
        %v2650 = vadd.f32 0.0, %v2649
        %2651 = vmatprep.mubr.bf16.mxu0 0
        %2652 = vmatmul.mubr.bf16.gmra.mrb[0].mxu0 %v1985
        %v2653 = vpop.f32.mrb[0].mxu0
        %v2654 = vadd.f32 0.0, %v2653
        %v2655 = vpop.f32.mrb[0].mxu0
        %v2656 = vadd.f32 0.0, %v2655
        %v2657 = vpop.f32.mrb[0].mxu0
        %v2658 = vadd.f32 0.0, %v2657
        %v2659 = vpop.f32.mrb[0].mxu0
        %v2660 = vadd.f32 0.0, %v2659
        %2661 = vmatprep.mubr.bf16.mxu0 0
        %2662 = vmatmul.mubr.bf16.gmra.mrb[0].mxu0 %v1997
        %v2663 = vpop.f32.mrb[0].mxu0
        %v2664 = vadd.f32 0.0, %v2663
        %v2665 = vpop.f32.mrb[0].mxu0
        %v2666 = vadd.f32 0.0, %v2665
        %v2667 = vpop.f32.mrb[0].mxu0
        %v2668 = vadd.f32 0.0, %v2667
        %v2669 = vpop.f32.mrb[0].mxu0
        %v2670 = vadd.f32 0.0, %v2669
        %2671 = vmatprep.mubr.bf16.mxu0 0
        %2672 = vmatmul.mubr.bf16.gmra.mrb[0].mxu0 %v2009
        %v2673 = vpop.f32.mrb[0].mxu0
        %v2674 = vadd.f32 0.0, %v2673
        %v2675 = vpop.f32.mrb[0].mxu0
        %v2676 = vadd.f32 0.0, %v2675
        %v2677 = vpop.f32.mrb[0].mxu0
        %v2678 = vadd.f32 0.0, %v2677
        %v2679 = vpop.f32.mrb[0].mxu0
        %v2680 = vadd.f32 0.0, %v2679
        %2681 = vmatprep.mubr.bf16.mxu0 0
        %2682 = vmatmul.mubr.bf16.gmra.mrb[0].mxu0 %v2021
        %v2683 = vpop.f32.mrb[0].mxu0
        %v2684 = vadd.f32 0.0, %v2683
        %v2685 = vpop.f32.mrb[0].mxu0
        %v2686 = vadd.f32 0.0, %v2685
        %v2687 = vpop.f32.mrb[0].mxu0
        %v2688 = vadd.f32 0.0, %v2687
        %v2689 = vpop.f32.mrb[0].mxu0
        %v2690 = vadd.f32 0.0, %v2689
        %2691 = vmatprep.mubr.bf16.mxu0 0
        %2692 = vmatmul.mubr.bf16.gmra.mrb[0].mxu0 %v2033
        %v2693 = vpop.f32.mrb[0].mxu0
        %v2694 = vadd.f32 0.0, %v2693
        %v2695 = vpop.f32.mrb[0].mxu0
        %v2696 = vadd.f32 0.0, %v2695
        %v2697 = vpop.f32.mrb[0].mxu0
        %v2698 = vadd.f32 0.0, %v2697
        %v2699 = vpop.f32.mrb[0].mxu0
        %v2700 = vadd.f32 0.0, %v2699
        %2701 = vmatprep.mubr.bf16.mxu0 0
        %2702 = vmatmul.mubr.bf16.gmra.mrb[0].mxu0 %v2045
        %v2703 = vpop.f32.mrb[0].mxu0
        %v2704 = vadd.f32 0.0, %v2703
        %v2705 = vpop.f32.mrb[0].mxu0
        %v2706 = vadd.f32 0.0, %v2705
        %v2707 = vpop.f32.mrb[0].mxu0
        %v2708 = vadd.f32 0.0, %v2707
        %v2709 = vpop.f32.mrb[0].mxu0
        %v2710 = vadd.f32 0.0, %v2709
        %2711 = vmatprep.mubr.bf16.mxu0 0
        %2712 = vmatmul.mubr.bf16.gmra.mrb[0].mxu0 %v2057
        %v2713 = vpop.f32.mrb[0].mxu0
        %v2714 = vadd.f32 0.0, %v2713
        %v2715 = vpop.f32.mrb[0].mxu0
        %v2716 = vadd.f32 0.0, %v2715
        %v2717 = vpop.f32.mrb[0].mxu0
        %v2718 = vadd.f32 0.0, %v2717
        %v2719 = vpop.f32.mrb[0].mxu0
        %v2720 = vadd.f32 0.0, %v2719
        %2721 = vmatprep.mubr.bf16.mxu0 0
        %2722 = vmatmul.mubr.bf16.gmra.mrb[0].mxu0 %v2069
        %v2723 = vpop.f32.mrb[0].mxu0
        %v2724 = vadd.f32 0.0, %v2723
        %v2725 = vpop.f32.mrb[0].mxu0
        %v2726 = vadd.f32 0.0, %v2725
        %v2727 = vpop.f32.mrb[0].mxu0
        %v2728 = vadd.f32 0.0, %v2727
        %v2729 = vpop.f32.mrb[0].mxu0
        %v2730 = vadd.f32 0.0, %v2729
        %2731 = vmatprep.mubr.bf16.mxu0 0
        %2732 = vmatmul.mubr.bf16.gmra.mrb[0].mxu0 %v2081
        %v2733 = vpop.f32.mrb[0].mxu0
        %v2734 = vadd.f32 0.0, %v2733
        %v2735 = vpop.f32.mrb[0].mxu0
        %v2736 = vadd.f32 0.0, %v2735
        %v2737 = vpop.f32.mrb[0].mxu0
        %v2738 = vadd.f32 0.0, %v2737
        %v2739 = vpop.f32.mrb[0].mxu0
        %v2740 = vadd.f32 0.0, %v2739
        %2741 = vdwg.mxu0
        %v2742 = vadd.f32 %v2388, %v2584
        %v2743 = vadd.f32 %v2389, %v2586
        %v2744 = vadd.f32 %v2390, %v2588
        %v2745 = vadd.f32 %v2391, %v2590
        %v2746 = vadd.f32 %v2392, %v2594
        %v2747 = vadd.f32 %v2393, %v2596
        %v2748 = vadd.f32 %v2394, %v2598
        %v2749 = vadd.f32 %v2395, %v2600
        %v2750 = vadd.f32 %v2396, %v2604
        %v2751 = vadd.f32 %v2397, %v2606
        %v2752 = vadd.f32 %v2398, %v2608
        %v2753 = vadd.f32 %v2399, %v2610
        %v2754 = vadd.f32 %v2400, %v2614
        %v2755 = vadd.f32 %v2401, %v2616
        %v2756 = vadd.f32 %v2402, %v2618
        %v2757 = vadd.f32 %v2403, %v2620
        %v2758 = vadd.f32 %v2404, %v2624
        %v2759 = vadd.f32 %v2405, %v2626
        %v2760 = vadd.f32 %v2406, %v2628
        %v2761 = vadd.f32 %v2407, %v2630
        %v2762 = vadd.f32 %v2408, %v2634
        %v2763 = vadd.f32 %v2409, %v2636
        %v2764 = vadd.f32 %v2410, %v2638
        %v2765 = vadd.f32 %v2411, %v2640
        %v2766 = vadd.f32 %v2412, %v2644
        %v2767 = vadd.f32 %v2413, %v2646
        %v2768 = vadd.f32 %v2414, %v2648
        %v2769 = vadd.f32 %v2415, %v2650
        %v2770 = vadd.f32 %v2416, %v2654
        %v2771 = vadd.f32 %v2417, %v2656
        %v2772 = vadd.f32 %v2418, %v2658
        %v2773 = vadd.f32 %v2419, %v2660
        %v2774 = vadd.f32 %v2420, %v2664
        %v2775 = vadd.f32 %v2421, %v2666
        %v2776 = vadd.f32 %v2422, %v2668
        %v2777 = vadd.f32 %v2423, %v2670
        %v2778 = vadd.f32 %v2424, %v2674
        %v2779 = vadd.f32 %v2425, %v2676
        %v2780 = vadd.f32 %v2426, %v2678
        %v2781 = vadd.f32 %v2427, %v2680
        %v2782 = vadd.f32 %v2428, %v2684
        %v2783 = vadd.f32 %v2429, %v2686
        %v2784 = vadd.f32 %v2430, %v2688
        %v2785 = vadd.f32 %v2431, %v2690
        %v2786 = vadd.f32 %v2432, %v2694
        %v2787 = vadd.f32 %v2433, %v2696
        %v2788 = vadd.f32 %v2434, %v2698
        %v2789 = vadd.f32 %v2435, %v2700
        %v2790 = vadd.f32 %v2436, %v2704
        %v2791 = vadd.f32 %v2437, %v2706
        %v2792 = vadd.f32 %v2438, %v2708
        %v2793 = vadd.f32 %v2439, %v2710
        %v2794 = vadd.f32 %v2440, %v2714
        %v2795 = vadd.f32 %v2441, %v2716
        %v2796 = vadd.f32 %v2442, %v2718
        %v2797 = vadd.f32 %v2443, %v2720
        %v2798 = vadd.f32 %v2444, %v2724
        %v2799 = vadd.f32 %v2445, %v2726
        %v2800 = vadd.f32 %v2446, %v2728
        %v2801 = vadd.f32 %v2447, %v2730
        %v2802 = vadd.f32 %v2448, %v2734
        %v2803 = vadd.f32 %v2449, %v2736
        %v2804 = vadd.f32 %v2450, %v2738
        %v2805 = vadd.f32 %v2451, %v2740
        %s2806 = scalar_lea.vmem [#allocation7], 896
        %v2807 = vld [vmem:[%s2806] sm:$0xff]
        %v2808 = vld [vmem:[%s2806 + $0x8] sm:$0xff]
        %v2809 = vld [vmem:[%s2806 + $0x10] sm:$0xff]
        %v2810 = vld [vmem:[%s2806 + $0x18] sm:$0xff]
        %v2811 = vld [vmem:[%s2806 + $0x20] sm:$0xff]
        %v2812 = vld [vmem:[%s2806 + $0x28] sm:$0xff]
        %v2813 = vld [vmem:[%s2806 + $0x30] sm:$0xff]
        %v2814 = vld [vmem:[%s2806 + $0x38] sm:$0xff]
        %v2815 = vld [vmem:[%s2806 + $0x40] sm:$0xff]
        %v2816 = vld [vmem:[%s2806 + $0x48] sm:$0xff]
        %v2817 = vld [vmem:[%s2806 + $0x50] sm:$0xff]
        %v2818 = vld [vmem:[%s2806 + $0x58] sm:$0xff]
        %v2819 = vld [vmem:[%s2806 + $0x60] sm:$0xff]
        %v2820 = vld [vmem:[%s2806 + $0x68] sm:$0xff]
        %v2821 = vld [vmem:[%s2806 + $0x70] sm:$0xff]
        %v2822 = vld [vmem:[%s2806 + $0x78] sm:$0xff]
        %v2839 = vunpack.c.l.b16 %v2807
        %v2840 = vunpack.c.h.b16 %v2807
        %v2841 = vunpack.c.l.b16 %v2808
        %v2842 = vunpack.c.h.b16 %v2808
        %v2843 = vunpack.c.l.b16 %v2809
        %v2844 = vunpack.c.h.b16 %v2809
        %v2845 = vunpack.c.l.b16 %v2810
        %v2846 = vunpack.c.h.b16 %v2810
        %v2847 = vunpack.c.l.b16 %v2811
        %v2848 = vunpack.c.h.b16 %v2811
        %v2849 = vunpack.c.l.b16 %v2812
        %v2850 = vunpack.c.h.b16 %v2812
        %v2851 = vunpack.c.l.b16 %v2813
        %v2852 = vunpack.c.h.b16 %v2813
        %v2853 = vunpack.c.l.b16 %v2814
        %v2854 = vunpack.c.h.b16 %v2814
        %v2855 = vunpack.c.l.b16 %v2815
        %v2856 = vunpack.c.h.b16 %v2815
        %v2857 = vunpack.c.l.b16 %v2816
        %v2858 = vunpack.c.h.b16 %v2816
        %v2859 = vunpack.c.l.b16 %v2817
        %v2860 = vunpack.c.h.b16 %v2817
        %v2861 = vunpack.c.l.b16 %v2818
        %v2862 = vunpack.c.h.b16 %v2818
        %v2863 = vunpack.c.l.b16 %v2819
        %v2864 = vunpack.c.h.b16 %v2819
        %v2865 = vunpack.c.l.b16 %v2820
        %v2866 = vunpack.c.h.b16 %v2820
        %v2867 = vunpack.c.l.b16 %v2821
        %v2868 = vunpack.c.h.b16 %v2821
        %v2869 = vunpack.c.l.b16 %v2822
        %v2870 = vunpack.c.h.b16 %v2822
        %v2871 = vpack.c.b16 %v2841, %v2839
        %v2872 = vpack.c.b16 %v2842, %v2840
        %v2873 = vpack.c.b16 %v2845, %v2843
        %v2874 = vpack.c.b16 %v2846, %v2844
        %v2875 = vpack.c.b16 %v2849, %v2847
        %v2876 = vpack.c.b16 %v2850, %v2848
        %v2877 = vpack.c.b16 %v2853, %v2851
        %v2878 = vpack.c.b16 %v2854, %v2852
        %v2879 = vpack.c.b16 %v2857, %v2855
        %v2880 = vpack.c.b16 %v2858, %v2856
        %v2881 = vpack.c.b16 %v2861, %v2859
        %v2882 = vpack.c.b16 %v2862, %v2860
        %v2883 = vpack.c.b16 %v2865, %v2863
        %v2884 = vpack.c.b16 %v2866, %v2864
        %v2885 = vpack.c.b16 %v2869, %v2867
        %v2886 = vpack.c.b16 %v2870, %v2868
        %2903 = vmatprep.subr.bf16.mxu0 %v2872
        %2904 = vmatpush1.bf16.msra.mxu0 %v2871
        %2905 = vmatprep.subr.bf16.mxu0 %v2874
        %2906 = vmatpush1.bf16.msra.mxu0 %v2873
        %2907 = vmatprep.subr.bf16.mxu0 %v2876
        %2908 = vmatpush1.bf16.msra.mxu0 %v2875
        %2909 = vmatprep.subr.bf16.mxu0 %v2878
        %2910 = vmatpush1.bf16.msra.mxu0 %v2877
        %2911 = vmatprep.subr.bf16.mxu0 %v2880
        %2912 = vmatpush1.bf16.msra.mxu0 %v2879
        %2913 = vmatprep.subr.bf16.mxu0 %v2882
        %2914 = vmatpush1.bf16.msra.mxu0 %v2881
        %2915 = vmatprep.subr.bf16.mxu0 %v2884
        %2916 = vmatpush1.bf16.msra.mxu0 %v2883
        %2917 = vmatprep.subr.bf16.mxu0 %v2886
        %2918 = vmatpush1.bf16.msra.mxu0 %v2885
        %2919 = vmatprep.subr.bf16.mxu0 0
        %2920 = vmatpush1.bf16.msra.mxu0 0
        %2921 = vmatprep.subr.bf16.mxu0 0
        %2922 = vmatpush1.bf16.msra.mxu0 0
        %2923 = vmatprep.subr.bf16.mxu0 0
        %2924 = vmatpush1.bf16.msra.mxu0 0
        %2925 = vmatprep.subr.bf16.mxu0 0
        %2926 = vmatpush1.bf16.msra.mxu0 0
        %2927 = vmatprep.subr.bf16.mxu0 0
        %2928 = vmatpush1.bf16.msra.mxu0 0
        %2929 = vmatprep.subr.bf16.mxu0 0
        %2930 = vmatpush1.bf16.msra.mxu0 0
        %2931 = vmatprep.subr.bf16.mxu0 0
        %2932 = vmatpush1.bf16.msra.mxu0 0
        %2933 = vmatprep.subr.bf16.mxu0 0
        %2934 = vmatpush1.bf16.msra.mxu0 0
        %2935 = vmatprep.mubr.bf16.mxu0 0
        %2936 = vmatmul.mubr.bf16.gmra.mrb[0].mxu0 %v1913
        %v2937 = vpop.f32.mrb[0].mxu0
        %v2938 = vadd.f32 0.0, %v2937
        %v2939 = vpop.f32.mrb[0].mxu0
        %v2940 = vadd.f32 0.0, %v2939
        %v2941 = vpop.f32.mrb[0].mxu0
        %v2942 = vadd.f32 0.0, %v2941
        %v2943 = vpop.f32.mrb[0].mxu0
        %v2944 = vadd.f32 0.0, %v2943
        %2945 = vmatprep.mubr.bf16.mxu0 0
        %2946 = vmatmul.mubr.bf16.gmra.mrb[0].mxu0 %v1925
        %v2947 = vpop.f32.mrb[0].mxu0
        %v2948 = vadd.f32 0.0, %v2947
        %v2949 = vpop.f32.mrb[0].mxu0
        %v2950 = vadd.f32 0.0, %v2949
        %v2951 = vpop.f32.mrb[0].mxu0
        %v2952 = vadd.f32 0.0, %v2951
        %v2953 = vpop.f32.mrb[0].mxu0
        %v2954 = vadd.f32 0.0, %v2953
        %2955 = vmatprep.mubr.bf16.mxu0 0
        %2956 = vmatmul.mubr.bf16.gmra.mrb[0].mxu0 %v1937
        %v2957 = vpop.f32.mrb[0].mxu0
        %v2958 = vadd.f32 0.0, %v2957
        %v2959 = vpop.f32.mrb[0].mxu0
        %v2960 = vadd.f32 0.0, %v2959
        %v2961 = vpop.f32.mrb[0].mxu0
        %v2962 = vadd.f32 0.0, %v2961
        %v2963 = vpop.f32.mrb[0].mxu0
        %v2964 = vadd.f32 0.0, %v2963
        %2965 = vmatprep.mubr.bf16.mxu0 0
        %2966 = vmatmul.mubr.bf16.gmra.mrb[0].mxu0 %v1949
        %v2967 = vpop.f32.mrb[0].mxu0
        %v2968 = vadd.f32 0.0, %v2967
        %v2969 = vpop.f32.mrb[0].mxu0
        %v2970 = vadd.f32 0.0, %v2969
        %v2971 = vpop.f32.mrb[0].mxu0
        %v2972 = vadd.f32 0.0, %v2971
        %v2973 = vpop.f32.mrb[0].mxu0
        %v2974 = vadd.f32 0.0, %v2973
        %2975 = vmatprep.mubr.bf16.mxu0 0
        %2976 = vmatmul.mubr.bf16.gmra.mrb[0].mxu0 %v1961
        %v2977 = vpop.f32.mrb[0].mxu0
        %v2978 = vadd.f32 0.0, %v2977
        %v2979 = vpop.f32.mrb[0].mxu0
        %v2980 = vadd.f32 0.0, %v2979
        %v2981 = vpop.f32.mrb[0].mxu0
        %v2982 = vadd.f32 0.0, %v2981
        %v2983 = vpop.f32.mrb[0].mxu0
        %v2984 = vadd.f32 0.0, %v2983
        %2985 = vmatprep.mubr.bf16.mxu0 0
        %2986 = vmatmul.mubr.bf16.gmra.mrb[0].mxu0 %v1973
        %v2987 = vpop.f32.mrb[0].mxu0
        %v2988 = vadd.f32 0.0, %v2987
        %v2989 = vpop.f32.mrb[0].mxu0
        %v2990 = vadd.f32 0.0, %v2989
        %v2991 = vpop.f32.mrb[0].mxu0
        %v2992 = vadd.f32 0.0, %v2991
        %v2993 = vpop.f32.mrb[0].mxu0
        %v2994 = vadd.f32 0.0, %v2993
        %2995 = vmatprep.mubr.bf16.mxu0 0
        %2996 = vmatmul.mubr.bf16.gmra.mrb[0].mxu0 %v1985
        %v2997 = vpop.f32.mrb[0].mxu0
        %v2998 = vadd.f32 0.0, %v2997
        %v2999 = vpop.f32.mrb[0].mxu0
        %v3000 = vadd.f32 0.0, %v2999
        %v3001 = vpop.f32.mrb[0].mxu0
        %v3002 = vadd.f32 0.0, %v3001
        %v3003 = vpop.f32.mrb[0].mxu0
        %v3004 = vadd.f32 0.0, %v3003
        %3005 = vmatprep.mubr.bf16.mxu0 0
        %3006 = vmatmul.mubr.bf16.gmra.mrb[0].mxu0 %v1997
        %v3007 = vpop.f32.mrb[0].mxu0
        %v3008 = vadd.f32 0.0, %v3007
        %v3009 = vpop.f32.mrb[0].mxu0
        %v3010 = vadd.f32 0.0, %v3009
        %v3011 = vpop.f32.mrb[0].mxu0
        %v3012 = vadd.f32 0.0, %v3011
        %v3013 = vpop.f32.mrb[0].mxu0
        %v3014 = vadd.f32 0.0, %v3013
        %3015 = vmatprep.mubr.bf16.mxu0 0
        %3016 = vmatmul.mubr.bf16.gmra.mrb[0].mxu0 %v2009
        %v3017 = vpop.f32.mrb[0].mxu0
        %v3018 = vadd.f32 0.0, %v3017
        %v3019 = vpop.f32.mrb[0].mxu0
        %v3020 = vadd.f32 0.0, %v3019
        %v3021 = vpop.f32.mrb[0].mxu0
        %v3022 = vadd.f32 0.0, %v3021
        %v3023 = vpop.f32.mrb[0].mxu0
        %v3024 = vadd.f32 0.0, %v3023
        %3025 = vmatprep.mubr.bf16.mxu0 0
        %3026 = vmatmul.mubr.bf16.gmra.mrb[0].mxu0 %v2021
        %v3027 = vpop.f32.mrb[0].mxu0
        %v3028 = vadd.f32 0.0, %v3027
        %v3029 = vpop.f32.mrb[0].mxu0
        %v3030 = vadd.f32 0.0, %v3029
        %v3031 = vpop.f32.mrb[0].mxu0
        %v3032 = vadd.f32 0.0, %v3031
        %v3033 = vpop.f32.mrb[0].mxu0
        %v3034 = vadd.f32 0.0, %v3033
        %3035 = vmatprep.mubr.bf16.mxu0 0
        %3036 = vmatmul.mubr.bf16.gmra.mrb[0].mxu0 %v2033
        %v3037 = vpop.f32.mrb[0].mxu0
        %v3038 = vadd.f32 0.0, %v3037
        %v3039 = vpop.f32.mrb[0].mxu0
        %v3040 = vadd.f32 0.0, %v3039
        %v3041 = vpop.f32.mrb[0].mxu0
        %v3042 = vadd.f32 0.0, %v3041
        %v3043 = vpop.f32.mrb[0].mxu0
        %v3044 = vadd.f32 0.0, %v3043
        %3045 = vmatprep.mubr.bf16.mxu0 0
        %3046 = vmatmul.mubr.bf16.gmra.mrb[0].mxu0 %v2045
        %v3047 = vpop.f32.mrb[0].mxu0
        %v3048 = vadd.f32 0.0, %v3047
        %v3049 = vpop.f32.mrb[0].mxu0
        %v3050 = vadd.f32 0.0, %v3049
        %v3051 = vpop.f32.mrb[0].mxu0
        %v3052 = vadd.f32 0.0, %v3051
        %v3053 = vpop.f32.mrb[0].mxu0
        %v3054 = vadd.f32 0.0, %v3053
        %3055 = vmatprep.mubr.bf16.mxu0 0
        %3056 = vmatmul.mubr.bf16.gmra.mrb[0].mxu0 %v2057
        %v3057 = vpop.f32.mrb[0].mxu0
        %v3058 = vadd.f32 0.0, %v3057
        %v3059 = vpop.f32.mrb[0].mxu0
        %v3060 = vadd.f32 0.0, %v3059
        %v3061 = vpop.f32.mrb[0].mxu0
        %v3062 = vadd.f32 0.0, %v3061
        %v3063 = vpop.f32.mrb[0].mxu0
        %v3064 = vadd.f32 0.0, %v3063
        %3065 = vmatprep.mubr.bf16.mxu0 0
        %3066 = vmatmul.mubr.bf16.gmra.mrb[0].mxu0 %v2069
        %v3067 = vpop.f32.mrb[0].mxu0
        %v3068 = vadd.f32 0.0, %v3067
        %v3069 = vpop.f32.mrb[0].mxu0
        %v3070 = vadd.f32 0.0, %v3069
        %v3071 = vpop.f32.mrb[0].mxu0
        %v3072 = vadd.f32 0.0, %v3071
        %v3073 = vpop.f32.mrb[0].mxu0
        %v3074 = vadd.f32 0.0, %v3073
        %3075 = vmatprep.mubr.bf16.mxu0 0
        %3076 = vmatmul.mubr.bf16.gmra.mrb[0].mxu0 %v2081
        %v3077 = vpop.f32.mrb[0].mxu0
        %v3078 = vadd.f32 0.0, %v3077
        %v3079 = vpop.f32.mrb[0].mxu0
        %v3080 = vadd.f32 0.0, %v3079
        %v3081 = vpop.f32.mrb[0].mxu0
        %v3082 = vadd.f32 0.0, %v3081
        %v3083 = vpop.f32.mrb[0].mxu0
        %v3084 = vadd.f32 0.0, %v3083
        %3085 = vmatprep.mubr.bf16.mxu0 0
        %3086 = vmatmul.mubr.bf16.gmra.mrb[0].mxu0 0
        %v3087 = vpop.f32.mrb[0].mxu0
        %v3088 = vadd.f32 0.0, %v3087
        %v3089 = vpop.f32.mrb[0].mxu0
        %v3090 = vadd.f32 0.0, %v3089
        %v3091 = vpop.f32.mrb[0].mxu0
        %v3092 = vadd.f32 0.0, %v3091
        %v3093 = vpop.f32.mrb[0].mxu0
        %v3094 = vadd.f32 0.0, %v3093
        %3095 = vdwg.mxu0
        %v3096 = vadd.f32 %v2742, %v2938
        %v3097 = vadd.f32 %v2743, %v2940
        %v3098 = vadd.f32 %v2744, %v2942
        %v3099 = vadd.f32 %v2745, %v2944
        %v3100 = vadd.f32 %v2746, %v2948
        %v3101 = vadd.f32 %v2747, %v2950
        %v3102 = vadd.f32 %v2748, %v2952
        %v3103 = vadd.f32 %v2749, %v2954
        %v3104 = vadd.f32 %v2750, %v2958
        %v3105 = vadd.f32 %v2751, %v2960
        %v3106 = vadd.f32 %v2752, %v2962
        %v3107 = vadd.f32 %v2753, %v2964
        %v3108 = vadd.f32 %v2754, %v2968
        %v3109 = vadd.f32 %v2755, %v2970
        %v3110 = vadd.f32 %v2756, %v2972
        %v3111 = vadd.f32 %v2757, %v2974
        %v3112 = vadd.f32 %v2758, %v2978
        %v3113 = vadd.f32 %v2759, %v2980
        %v3114 = vadd.f32 %v2760, %v2982
        %v3115 = vadd.f32 %v2761, %v2984
        %v3116 = vadd.f32 %v2762, %v2988
        %v3117 = vadd.f32 %v2763, %v2990
        %v3118 = vadd.f32 %v2764, %v2992
        %v3119 = vadd.f32 %v2765, %v2994
        %v3120 = vadd.f32 %v2766, %v2998
        %v3121 = vadd.f32 %v2767, %v3000
        %v3122 = vadd.f32 %v2768, %v3002
        %v3123 = vadd.f32 %v2769, %v3004
        %v3124 = vadd.f32 %v2770, %v3008
        %v3125 = vadd.f32 %v2771, %v3010
        %v3126 = vadd.f32 %v2772, %v3012
        %v3127 = vadd.f32 %v2773, %v3014
        %v3128 = vadd.f32 %v2774, %v3018
        %v3129 = vadd.f32 %v2775, %v3020
        %v3130 = vadd.f32 %v2776, %v3022
        %v3131 = vadd.f32 %v2777, %v3024
        %v3132 = vadd.f32 %v2778, %v3028
        %v3133 = vadd.f32 %v2779, %v3030
        %v3134 = vadd.f32 %v2780, %v3032
        %v3135 = vadd.f32 %v2781, %v3034
        %v3136 = vadd.f32 %v2782, %v3038
        %v3137 = vadd.f32 %v2783, %v3040
        %v3138 = vadd.f32 %v2784, %v3042
        %v3139 = vadd.f32 %v2785, %v3044
        %v3140 = vadd.f32 %v2786, %v3048
        %v3141 = vadd.f32 %v2787, %v3050
        %v3142 = vadd.f32 %v2788, %v3052
        %v3143 = vadd.f32 %v2789, %v3054
        %v3144 = vadd.f32 %v2790, %v3058
        %v3145 = vadd.f32 %v2791, %v3060
        %v3146 = vadd.f32 %v2792, %v3062
        %v3147 = vadd.f32 %v2793, %v3064
        %v3148 = vadd.f32 %v2794, %v3068
        %v3149 = vadd.f32 %v2795, %v3070
        %v3150 = vadd.f32 %v2796, %v3072
        %v3151 = vadd.f32 %v2797, %v3074
        %v3152 = vadd.f32 %v2798, %v3078
        %v3153 = vadd.f32 %v2799, %v3080
        %v3154 = vadd.f32 %v2800, %v3082
        %v3155 = vadd.f32 %v2801, %v3084
        %v3156 = vadd.f32 %v2802, %v3088
        %v3157 = vadd.f32 %v2803, %v3090
        %v3158 = vadd.f32 %v2804, %v3092
        %v3159 = vadd.f32 %v2805, %v3094
        %vm3192 = vcmask 1046528
        %v3193 = vrot.slane %v924, 1
        %v3194 = vrot.slane %v940, 1
        %v3195 = vsel %vm3192, %v3193, %v3194
        %v3196 = vrot.slane %v925, 1
        %v3197 = vrot.slane %v941, 1
        %v3198 = vsel %vm3192, %v3196, %v3197
        %v3199 = vrot.slane %v926, 1
        %v3200 = vrot.slane %v942, 1
        %v3201 = vsel %vm3192, %v3199, %v3200
        %v3202 = vrot.slane %v927, 1
        %v3203 = vrot.slane %v943, 1
        %v3204 = vsel %vm3192, %v3202, %v3203
        %v3205 = vrot.slane %v928, 1
        %v3206 = vrot.slane %v944, 1
        %v3207 = vsel %vm3192, %v3205, %v3206
        %v3208 = vrot.slane %v929, 1
        %v3209 = vrot.slane %v945, 1
        %v3210 = vsel %vm3192, %v3208, %v3209
        %v3211 = vrot.slane %v930, 1
        %v3212 = vrot.slane %v946, 1
        %v3213 = vsel %vm3192, %v3211, %v3212
        %v3214 = vrot.slane %v931, 1
        %v3215 = vrot.slane %v947, 1
        %v3216 = vsel %vm3192, %v3214, %v3215
        %v3217 = vrot.slane %v932, 1
        %v3218 = vrot.slane %v948, 1
        %v3219 = vsel %vm3192, %v3217, %v3218
        %v3220 = vrot.slane %v933, 1
        %v3221 = vrot.slane %v949, 1
        %v3222 = vsel %vm3192, %v3220, %v3221
        %v3223 = vrot.slane %v934, 1
        %v3224 = vrot.slane %v950, 1
        %v3225 = vsel %vm3192, %v3223, %v3224
        %v3226 = vrot.slane %v935, 1
        %v3227 = vrot.slane %v951, 1
        %v3228 = vsel %vm3192, %v3226, %v3227
        %v3229 = vrot.slane %v936, 1
        %v3230 = vrot.slane %v952, 1
        %v3231 = vsel %vm3192, %v3229, %v3230
        %v3232 = vrot.slane %v937, 1
        %v3233 = vrot.slane %v953, 1
        %v3234 = vsel %vm3192, %v3232, %v3233
        %v3235 = vrot.slane %v938, 1
        %v3236 = vrot.slane %v954, 1
        %v3237 = vsel %vm3192, %v3235, %v3236
        %v3238 = vrot.slane %v939, 1
        %v3239 = vrot.slane %v955, 1
        %v3240 = vsel %vm3192, %v3238, %v3239
        %s3257 = scalar_lea.vmem [#allocation7], 256
        %v3258 = vld [vmem:[%s3257] sm:$0xff]
        %v3259 = vld [vmem:[%s3257 + $0x8] sm:$0xff]
        %v3260 = vld [vmem:[%s3257 + $0x10] sm:$0xff]
        %v3261 = vld [vmem:[%s3257 + $0x18] sm:$0xff]
        %v3262 = vld [vmem:[%s3257 + $0x20] sm:$0xff]
        %v3263 = vld [vmem:[%s3257 + $0x28] sm:$0xff]
        %v3264 = vld [vmem:[%s3257 + $0x30] sm:$0xff]
        %v3265 = vld [vmem:[%s3257 + $0x38] sm:$0xff]
        %v3266 = vld [vmem:[%s3257 + $0x40] sm:$0xff]
        %v3267 = vld [vmem:[%s3257 + $0x48] sm:$0xff]
        %v3268 = vld [vmem:[%s3257 + $0x50] sm:$0xff]
        %v3269 = vld [vmem:[%s3257 + $0x58] sm:$0xff]
        %v3270 = vld [vmem:[%s3257 + $0x60] sm:$0xff]
        %v3271 = vld [vmem:[%s3257 + $0x68] sm:$0xff]
        %v3272 = vld [vmem:[%s3257 + $0x70] sm:$0xff]
        %v3273 = vld [vmem:[%s3257 + $0x78] sm:$0xff]
        %v3290 = vunpack.c.l.b16 %v3258
        %v3291 = vunpack.c.h.b16 %v3258
        %v3292 = vunpack.c.l.b16 %v3259
        %v3293 = vunpack.c.h.b16 %v3259
        %v3294 = vunpack.c.l.b16 %v3260
        %v3295 = vunpack.c.h.b16 %v3260
        %v3296 = vunpack.c.l.b16 %v3261
        %v3297 = vunpack.c.h.b16 %v3261
        %v3298 = vunpack.c.l.b16 %v3262
        %v3299 = vunpack.c.h.b16 %v3262
        %v3300 = vunpack.c.l.b16 %v3263
        %v3301 = vunpack.c.h.b16 %v3263
        %v3302 = vunpack.c.l.b16 %v3264
        %v3303 = vunpack.c.h.b16 %v3264
        %v3304 = vunpack.c.l.b16 %v3265
        %v3305 = vunpack.c.h.b16 %v3265
        %v3306 = vunpack.c.l.b16 %v3266
        %v3307 = vunpack.c.h.b16 %v3266
        %v3308 = vunpack.c.l.b16 %v3267
        %v3309 = vunpack.c.h.b16 %v3267
        %v3310 = vunpack.c.l.b16 %v3268
        %v3311 = vunpack.c.h.b16 %v3268
        %v3312 = vunpack.c.l.b16 %v3269
        %v3313 = vunpack.c.h.b16 %v3269
        %v3314 = vunpack.c.l.b16 %v3270
        %v3315 = vunpack.c.h.b16 %v3270
        %v3316 = vunpack.c.l.b16 %v3271
        %v3317 = vunpack.c.h.b16 %v3271
        %v3318 = vunpack.c.l.b16 %v3272
        %v3319 = vunpack.c.h.b16 %v3272
        %v3320 = vunpack.c.l.b16 %v3273
        %v3321 = vunpack.c.h.b16 %v3273
        %v3322 = vpack.c.b16 %v3292, %v3290
        %v3323 = vpack.c.b16 %v3293, %v3291
        %v3324 = vpack.c.b16 %v3296, %v3294
        %v3325 = vpack.c.b16 %v3297, %v3295
        %v3326 = vpack.c.b16 %v3300, %v3298
        %v3327 = vpack.c.b16 %v3301, %v3299
        %v3328 = vpack.c.b16 %v3304, %v3302
        %v3329 = vpack.c.b16 %v3305, %v3303
        %v3330 = vpack.c.b16 %v3308, %v3306
        %v3331 = vpack.c.b16 %v3309, %v3307
        %v3332 = vpack.c.b16 %v3312, %v3310
        %v3333 = vpack.c.b16 %v3313, %v3311
        %v3334 = vpack.c.b16 %v3316, %v3314
        %v3335 = vpack.c.b16 %v3317, %v3315
        %v3336 = vpack.c.b16 %v3320, %v3318
        %v3337 = vpack.c.b16 %v3321, %v3319
        %3354 = vmatprep.subr.bf16.mxu0 %v3323
        %3355 = vmatpush1.bf16.msra.mxu0 %v3322
        %3356 = vmatprep.subr.bf16.mxu0 %v3325
        %3357 = vmatpush1.bf16.msra.mxu0 %v3324
        %3358 = vmatprep.subr.bf16.mxu0 %v3327
        %3359 = vmatpush1.bf16.msra.mxu0 %v3326
        %3360 = vmatprep.subr.bf16.mxu0 %v3329
        %3361 = vmatpush1.bf16.msra.mxu0 %v3328
        %3362 = vmatprep.subr.bf16.mxu0 %v3331
        %3363 = vmatpush1.bf16.msra.mxu0 %v3330
        %3364 = vmatprep.subr.bf16.mxu0 %v3333
        %3365 = vmatpush1.bf16.msra.mxu0 %v3332
        %3366 = vmatprep.subr.bf16.mxu0 %v3335
        %3367 = vmatpush1.bf16.msra.mxu0 %v3334
        %3368 = vmatprep.subr.bf16.mxu0 %v3337
        %3369 = vmatpush1.bf16.msra.mxu0 %v3336
        %3370 = vmatprep.subr.bf16.mxu0 0
        %3371 = vmatpush1.bf16.msra.mxu0 0
        %3372 = vmatprep.subr.bf16.mxu0 0
        %3373 = vmatpush1.bf16.msra.mxu0 0
        %3374 = vmatprep.subr.bf16.mxu0 0
        %3375 = vmatpush1.bf16.msra.mxu0 0
        %3376 = vmatprep.subr.bf16.mxu0 0
        %3377 = vmatpush1.bf16.msra.mxu0 0
        %3378 = vmatprep.subr.bf16.mxu0 0
        %3379 = vmatpush1.bf16.msra.mxu0 0
        %3380 = vmatprep.subr.bf16.mxu0 0
        %3381 = vmatpush1.bf16.msra.mxu0 0
        %3382 = vmatprep.subr.bf16.mxu0 0
        %3383 = vmatpush1.bf16.msra.mxu0 0
        %3384 = vmatprep.subr.bf16.mxu0 0
        %3385 = vmatpush1.bf16.msra.mxu0 0
        %3386 = vmatprep.mubr.bf16.mxu0 0
        %3387 = vmatmul.mubr.bf16.gmra.mrb[0].mxu0 0
        %v3388 = vpop.f32.mrb[0].mxu0
        %v3389 = vadd.f32 0.0, %v3388
        %v3390 = vpop.f32.mrb[0].mxu0
        %v3391 = vadd.f32 0.0, %v3390
        %v3392 = vpop.f32.mrb[0].mxu0
        %v3393 = vadd.f32 0.0, %v3392
        %v3394 = vpop.f32.mrb[0].mxu0
        %v3395 = vadd.f32 0.0, %v3394
        %3396 = vmatprep.mubr.bf16.mxu0 0
        %3397 = vmatmul.mubr.bf16.gmra.mrb[0].mxu0 %v3195
        %v3398 = vpop.f32.mrb[0].mxu0
        %v3399 = vadd.f32 0.0, %v3398
        %v3400 = vpop.f32.mrb[0].mxu0
        %v3401 = vadd.f32 0.0, %v3400
        %v3402 = vpop.f32.mrb[0].mxu0
        %v3403 = vadd.f32 0.0, %v3402
        %v3404 = vpop.f32.mrb[0].mxu0
        %v3405 = vadd.f32 0.0, %v3404
        %3406 = vmatprep.mubr.bf16.mxu0 0
        %3407 = vmatmul.mubr.bf16.gmra.mrb[0].mxu0 %v3198
        %v3408 = vpop.f32.mrb[0].mxu0
        %v3409 = vadd.f32 0.0, %v3408
        %v3410 = vpop.f32.mrb[0].mxu0
        %v3411 = vadd.f32 0.0, %v3410
        %v3412 = vpop.f32.mrb[0].mxu0
        %v3413 = vadd.f32 0.0, %v3412
        %v3414 = vpop.f32.mrb[0].mxu0
        %v3415 = vadd.f32 0.0, %v3414
        %3416 = vmatprep.mubr.bf16.mxu0 0
        %3417 = vmatmul.mubr.bf16.gmra.mrb[0].mxu0 %v3201
        %v3418 = vpop.f32.mrb[0].mxu0
        %v3419 = vadd.f32 0.0, %v3418
        %v3420 = vpop.f32.mrb[0].mxu0
        %v3421 = vadd.f32 0.0, %v3420
        %v3422 = vpop.f32.mrb[0].mxu0
        %v3423 = vadd.f32 0.0, %v3422
        %v3424 = vpop.f32.mrb[0].mxu0
        %v3425 = vadd.f32 0.0, %v3424
        %3426 = vmatprep.mubr.bf16.mxu0 0
        %3427 = vmatmul.mubr.bf16.gmra.mrb[0].mxu0 %v3204
        %v3428 = vpop.f32.mrb[0].mxu0
        %v3429 = vadd.f32 0.0, %v3428
        %v3430 = vpop.f32.mrb[0].mxu0
        %v3431 = vadd.f32 0.0, %v3430
        %v3432 = vpop.f32.mrb[0].mxu0
        %v3433 = vadd.f32 0.0, %v3432
        %v3434 = vpop.f32.mrb[0].mxu0
        %v3435 = vadd.f32 0.0, %v3434
        %3436 = vmatprep.mubr.bf16.mxu0 0
        %3437 = vmatmul.mubr.bf16.gmra.mrb[0].mxu0 %v3207
        %v3438 = vpop.f32.mrb[0].mxu0
        %v3439 = vadd.f32 0.0, %v3438
        %v3440 = vpop.f32.mrb[0].mxu0
        %v3441 = vadd.f32 0.0, %v3440
        %v3442 = vpop.f32.mrb[0].mxu0
        %v3443 = vadd.f32 0.0, %v3442
        %v3444 = vpop.f32.mrb[0].mxu0
        %v3445 = vadd.f32 0.0, %v3444
        %3446 = vmatprep.mubr.bf16.mxu0 0
        %3447 = vmatmul.mubr.bf16.gmra.mrb[0].mxu0 %v3210
        %v3448 = vpop.f32.mrb[0].mxu0
        %v3449 = vadd.f32 0.0, %v3448
        %v3450 = vpop.f32.mrb[0].mxu0
        %v3451 = vadd.f32 0.0, %v3450
        %v3452 = vpop.f32.mrb[0].mxu0
        %v3453 = vadd.f32 0.0, %v3452
        %v3454 = vpop.f32.mrb[0].mxu0
        %v3455 = vadd.f32 0.0, %v3454
        %3456 = vmatprep.mubr.bf16.mxu0 0
        %3457 = vmatmul.mubr.bf16.gmra.mrb[0].mxu0 %v3213
        %v3458 = vpop.f32.mrb[0].mxu0
        %v3459 = vadd.f32 0.0, %v3458
        %v3460 = vpop.f32.mrb[0].mxu0
        %v3461 = vadd.f32 0.0, %v3460
        %v3462 = vpop.f32.mrb[0].mxu0
        %v3463 = vadd.f32 0.0, %v3462
        %v3464 = vpop.f32.mrb[0].mxu0
        %v3465 = vadd.f32 0.0, %v3464
        %3466 = vmatprep.mubr.bf16.mxu0 0
        %3467 = vmatmul.mubr.bf16.gmra.mrb[0].mxu0 %v3216
        %v3468 = vpop.f32.mrb[0].mxu0
        %v3469 = vadd.f32 0.0, %v3468
        %v3470 = vpop.f32.mrb[0].mxu0
        %v3471 = vadd.f32 0.0, %v3470
        %v3472 = vpop.f32.mrb[0].mxu0
        %v3473 = vadd.f32 0.0, %v3472
        %v3474 = vpop.f32.mrb[0].mxu0
        %v3475 = vadd.f32 0.0, %v3474
        %3476 = vmatprep.mubr.bf16.mxu0 0
        %3477 = vmatmul.mubr.bf16.gmra.mrb[0].mxu0 %v3219
        %v3478 = vpop.f32.mrb[0].mxu0
        %v3479 = vadd.f32 0.0, %v3478
        %v3480 = vpop.f32.mrb[0].mxu0
        %v3481 = vadd.f32 0.0, %v3480
        %v3482 = vpop.f32.mrb[0].mxu0
        %v3483 = vadd.f32 0.0, %v3482
        %v3484 = vpop.f32.mrb[0].mxu0
        %v3485 = vadd.f32 0.0, %v3484
        %3486 = vmatprep.mubr.bf16.mxu0 0
        %3487 = vmatmul.mubr.bf16.gmra.mrb[0].mxu0 %v3222
        %v3488 = vpop.f32.mrb[0].mxu0
        %v3489 = vadd.f32 0.0, %v3488
        %v3490 = vpop.f32.mrb[0].mxu0
        %v3491 = vadd.f32 0.0, %v3490
        %v3492 = vpop.f32.mrb[0].mxu0
        %v3493 = vadd.f32 0.0, %v3492
        %v3494 = vpop.f32.mrb[0].mxu0
        %v3495 = vadd.f32 0.0, %v3494
        %3496 = vmatprep.mubr.bf16.mxu0 0
        %3497 = vmatmul.mubr.bf16.gmra.mrb[0].mxu0 %v3225
        %v3498 = vpop.f32.mrb[0].mxu0
        %v3499 = vadd.f32 0.0, %v3498
        %v3500 = vpop.f32.mrb[0].mxu0
        %v3501 = vadd.f32 0.0, %v3500
        %v3502 = vpop.f32.mrb[0].mxu0
        %v3503 = vadd.f32 0.0, %v3502
        %v3504 = vpop.f32.mrb[0].mxu0
        %v3505 = vadd.f32 0.0, %v3504
        %3506 = vmatprep.mubr.bf16.mxu0 0
        %3507 = vmatmul.mubr.bf16.gmra.mrb[0].mxu0 %v3228
        %v3508 = vpop.f32.mrb[0].mxu0
        %v3509 = vadd.f32 0.0, %v3508
        %v3510 = vpop.f32.mrb[0].mxu0
        %v3511 = vadd.f32 0.0, %v3510
        %v3512 = vpop.f32.mrb[0].mxu0
        %v3513 = vadd.f32 0.0, %v3512
        %v3514 = vpop.f32.mrb[0].mxu0
        %v3515 = vadd.f32 0.0, %v3514
        %3516 = vmatprep.mubr.bf16.mxu0 0
        %3517 = vmatmul.mubr.bf16.gmra.mrb[0].mxu0 %v3231
        %v3518 = vpop.f32.mrb[0].mxu0
        %v3519 = vadd.f32 0.0, %v3518
        %v3520 = vpop.f32.mrb[0].mxu0
        %v3521 = vadd.f32 0.0, %v3520
        %v3522 = vpop.f32.mrb[0].mxu0
        %v3523 = vadd.f32 0.0, %v3522
        %v3524 = vpop.f32.mrb[0].mxu0
        %v3525 = vadd.f32 0.0, %v3524
        %3526 = vmatprep.mubr.bf16.mxu0 0
        %3527 = vmatmul.mubr.bf16.gmra.mrb[0].mxu0 %v3234
        %v3528 = vpop.f32.mrb[0].mxu0
        %v3529 = vadd.f32 0.0, %v3528
        %v3530 = vpop.f32.mrb[0].mxu0
        %v3531 = vadd.f32 0.0, %v3530
        %v3532 = vpop.f32.mrb[0].mxu0
        %v3533 = vadd.f32 0.0, %v3532
        %v3534 = vpop.f32.mrb[0].mxu0
        %v3535 = vadd.f32 0.0, %v3534
        %3536 = vmatprep.mubr.bf16.mxu0 0
        %3537 = vmatmul.mubr.bf16.gmra.mrb[0].mxu0 %v3237
        %v3538 = vpop.f32.mrb[0].mxu0
        %v3539 = vadd.f32 0.0, %v3538
        %v3540 = vpop.f32.mrb[0].mxu0
        %v3541 = vadd.f32 0.0, %v3540
        %v3542 = vpop.f32.mrb[0].mxu0
        %v3543 = vadd.f32 0.0, %v3542
        %v3544 = vpop.f32.mrb[0].mxu0
        %v3545 = vadd.f32 0.0, %v3544
        %3546 = vdwg.mxu0
        %v3547 = vadd.f32 %v3096, %v3389
        %v3548 = vadd.f32 %v3097, %v3391
        %v3549 = vadd.f32 %v3098, %v3393
        %v3550 = vadd.f32 %v3099, %v3395
        %v3551 = vadd.f32 %v3100, %v3399
        %v3552 = vadd.f32 %v3101, %v3401
        %v3553 = vadd.f32 %v3102, %v3403
        %v3554 = vadd.f32 %v3103, %v3405
        %v3555 = vadd.f32 %v3104, %v3409
        %v3556 = vadd.f32 %v3105, %v3411
        %v3557 = vadd.f32 %v3106, %v3413
        %v3558 = vadd.f32 %v3107, %v3415
        %v3559 = vadd.f32 %v3108, %v3419
        %v3560 = vadd.f32 %v3109, %v3421
        %v3561 = vadd.f32 %v3110, %v3423
        %v3562 = vadd.f32 %v3111, %v3425
        %v3563 = vadd.f32 %v3112, %v3429
        %v3564 = vadd.f32 %v3113, %v3431
        %v3565 = vadd.f32 %v3114, %v3433
        %v3566 = vadd.f32 %v3115, %v3435
        %v3567 = vadd.f32 %v3116, %v3439
        %v3568 = vadd.f32 %v3117, %v3441
        %v3569 = vadd.f32 %v3118, %v3443
        %v3570 = vadd.f32 %v3119, %v3445
        %v3571 = vadd.f32 %v3120, %v3449
        %v3572 = vadd.f32 %v3121, %v3451
        %v3573 = vadd.f32 %v3122, %v3453
        %v3574 = vadd.f32 %v3123, %v3455
        %v3575 = vadd.f32 %v3124, %v3459
        %v3576 = vadd.f32 %v3125, %v3461
        %v3577 = vadd.f32 %v3126, %v3463
        %v3578 = vadd.f32 %v3127, %v3465
        %v3579 = vadd.f32 %v3128, %v3469
        %v3580 = vadd.f32 %v3129, %v3471
        %v3581 = vadd.f32 %v3130, %v3473
        %v3582 = vadd.f32 %v3131, %v3475
        %v3583 = vadd.f32 %v3132, %v3479
        %v3584 = vadd.f32 %v3133, %v3481
        %v3585 = vadd.f32 %v3134, %v3483
        %v3586 = vadd.f32 %v3135, %v3485
        %v3587 = vadd.f32 %v3136, %v3489
        %v3588 = vadd.f32 %v3137, %v3491
        %v3589 = vadd.f32 %v3138, %v3493
        %v3590 = vadd.f32 %v3139, %v3495
        %v3591 = vadd.f32 %v3140, %v3499
        %v3592 = vadd.f32 %v3141, %v3501
        %v3593 = vadd.f32 %v3142, %v3503
        %v3594 = vadd.f32 %v3143, %v3505
        %v3595 = vadd.f32 %v3144, %v3509
        %v3596 = vadd.f32 %v3145, %v3511
        %v3597 = vadd.f32 %v3146, %v3513
        %v3598 = vadd.f32 %v3147, %v3515
        %v3599 = vadd.f32 %v3148, %v3519
        %v3600 = vadd.f32 %v3149, %v3521
        %v3601 = vadd.f32 %v3150, %v3523
        %v3602 = vadd.f32 %v3151, %v3525
        %v3603 = vadd.f32 %v3152, %v3529
        %v3604 = vadd.f32 %v3153, %v3531
        %v3605 = vadd.f32 %v3154, %v3533
        %v3606 = vadd.f32 %v3155, %v3535
        %v3607 = vadd.f32 %v3156, %v3539
        %v3608 = vadd.f32 %v3157, %v3541
        %v3609 = vadd.f32 %v3158, %v3543
        %v3610 = vadd.f32 %v3159, %v3545
        %s3611 = scalar_lea.vmem [#allocation7], 640
        %v3612 = vld [vmem:[%s3611] sm:$0xff]
        %v3613 = vld [vmem:[%s3611 + $0x8] sm:$0xff]
        %v3614 = vld [vmem:[%s3611 + $0x10] sm:$0xff]
        %v3615 = vld [vmem:[%s3611 + $0x18] sm:$0xff]
        %v3616 = vld [vmem:[%s3611 + $0x20] sm:$0xff]
        %v3617 = vld [vmem:[%s3611 + $0x28] sm:$0xff]
        %v3618 = vld [vmem:[%s3611 + $0x30] sm:$0xff]
        %v3619 = vld [vmem:[%s3611 + $0x38] sm:$0xff]
        %v3620 = vld [vmem:[%s3611 + $0x40] sm:$0xff]
        %v3621 = vld [vmem:[%s3611 + $0x48] sm:$0xff]
        %v3622 = vld [vmem:[%s3611 + $0x50] sm:$0xff]
        %v3623 = vld [vmem:[%s3611 + $0x58] sm:$0xff]
        %v3624 = vld [vmem:[%s3611 + $0x60] sm:$0xff]
        %v3625 = vld [vmem:[%s3611 + $0x68] sm:$0xff]
        %v3626 = vld [vmem:[%s3611 + $0x70] sm:$0xff]
        %v3627 = vld [vmem:[%s3611 + $0x78] sm:$0xff]
        %v3644 = vunpack.c.l.b16 %v3612
        %v3645 = vunpack.c.h.b16 %v3612
        %v3646 = vunpack.c.l.b16 %v3613
        %v3647 = vunpack.c.h.b16 %v3613
        %v3648 = vunpack.c.l.b16 %v3614
        %v3649 = vunpack.c.h.b16 %v3614
        %v3650 = vunpack.c.l.b16 %v3615
        %v3651 = vunpack.c.h.b16 %v3615
        %v3652 = vunpack.c.l.b16 %v3616
        %v3653 = vunpack.c.h.b16 %v3616
        %v3654 = vunpack.c.l.b16 %v3617
        %v3655 = vunpack.c.h.b16 %v3617
        %v3656 = vunpack.c.l.b16 %v3618
        %v3657 = vunpack.c.h.b16 %v3618
        %v3658 = vunpack.c.l.b16 %v3619
        %v3659 = vunpack.c.h.b16 %v3619
        %v3660 = vunpack.c.l.b16 %v3620
        %v3661 = vunpack.c.h.b16 %v3620
        %v3662 = vunpack.c.l.b16 %v3621
        %v3663 = vunpack.c.h.b16 %v3621
        %v3664 = vunpack.c.l.b16 %v3622
        %v3665 = vunpack.c.h.b16 %v3622
        %v3666 = vunpack.c.l.b16 %v3623
        %v3667 = vunpack.c.h.b16 %v3623
        %v3668 = vunpack.c.l.b16 %v3624
        %v3669 = vunpack.c.h.b16 %v3624
        %v3670 = vunpack.c.l.b16 %v3625
        %v3671 = vunpack.c.h.b16 %v3625
        %v3672 = vunpack.c.l.b16 %v3626
        %v3673 = vunpack.c.h.b16 %v3626
        %v3674 = vunpack.c.l.b16 %v3627
        %v3675 = vunpack.c.h.b16 %v3627
        %v3676 = vpack.c.b16 %v3646, %v3644
        %v3677 = vpack.c.b16 %v3647, %v3645
        %v3678 = vpack.c.b16 %v3650, %v3648
        %v3679 = vpack.c.b16 %v3651, %v3649
        %v3680 = vpack.c.b16 %v3654, %v3652
        %v3681 = vpack.c.b16 %v3655, %v3653
        %v3682 = vpack.c.b16 %v3658, %v3656
        %v3683 = vpack.c.b16 %v3659, %v3657
        %v3684 = vpack.c.b16 %v3662, %v3660
        %v3685 = vpack.c.b16 %v3663, %v3661
        %v3686 = vpack.c.b16 %v3666, %v3664
        %v3687 = vpack.c.b16 %v3667, %v3665
        %v3688 = vpack.c.b16 %v3670, %v3668
        %v3689 = vpack.c.b16 %v3671, %v3669
        %v3690 = vpack.c.b16 %v3674, %v3672
        %v3691 = vpack.c.b16 %v3675, %v3673
        %3708 = vmatprep.subr.bf16.mxu0 %v3677
        %3709 = vmatpush1.bf16.msra.mxu0 %v3676
        %3710 = vmatprep.subr.bf16.mxu0 %v3679
        %3711 = vmatpush1.bf16.msra.mxu0 %v3678
        %3712 = vmatprep.subr.bf16.mxu0 %v3681
        %3713 = vmatpush1.bf16.msra.mxu0 %v3680
        %3714 = vmatprep.subr.bf16.mxu0 %v3683
        %3715 = vmatpush1.bf16.msra.mxu0 %v3682
        %3716 = vmatprep.subr.bf16.mxu0 %v3685
        %3717 = vmatpush1.bf16.msra.mxu0 %v3684
        %3718 = vmatprep.subr.bf16.mxu0 %v3687
        %3719 = vmatpush1.bf16.msra.mxu0 %v3686
        %3720 = vmatprep.subr.bf16.mxu0 %v3689
        %3721 = vmatpush1.bf16.msra.mxu0 %v3688
        %3722 = vmatprep.subr.bf16.mxu0 %v3691
        %3723 = vmatpush1.bf16.msra.mxu0 %v3690
        %3724 = vmatprep.subr.bf16.mxu0 0
        %3725 = vmatpush1.bf16.msra.mxu0 0
        %3726 = vmatprep.subr.bf16.mxu0 0
        %3727 = vmatpush1.bf16.msra.mxu0 0
        %3728 = vmatprep.subr.bf16.mxu0 0
        %3729 = vmatpush1.bf16.msra.mxu0 0
        %3730 = vmatprep.subr.bf16.mxu0 0
        %3731 = vmatpush1.bf16.msra.mxu0 0
        %3732 = vmatprep.subr.bf16.mxu0 0
        %3733 = vmatpush1.bf16.msra.mxu0 0
        %3734 = vmatprep.subr.bf16.mxu0 0
        %3735 = vmatpush1.bf16.msra.mxu0 0
        %3736 = vmatprep.subr.bf16.mxu0 0
        %3737 = vmatpush1.bf16.msra.mxu0 0
        %3738 = vmatprep.subr.bf16.mxu0 0
        %3739 = vmatpush1.bf16.msra.mxu0 0
        %3740 = vmatprep.mubr.bf16.mxu0 0
        %3741 = vmatmul.mubr.bf16.gmra.mrb[0].mxu0 %v3195
        %v3742 = vpop.f32.mrb[0].mxu0
        %v3743 = vadd.f32 0.0, %v3742
        %v3744 = vpop.f32.mrb[0].mxu0
        %v3745 = vadd.f32 0.0, %v3744
        %v3746 = vpop.f32.mrb[0].mxu0
        %v3747 = vadd.f32 0.0, %v3746
        %v3748 = vpop.f32.mrb[0].mxu0
        %v3749 = vadd.f32 0.0, %v3748
        %3750 = vmatprep.mubr.bf16.mxu0 0
        %3751 = vmatmul.mubr.bf16.gmra.mrb[0].mxu0 %v3198
        %v3752 = vpop.f32.mrb[0].mxu0
        %v3753 = vadd.f32 0.0, %v3752
        %v3754 = vpop.f32.mrb[0].mxu0
        %v3755 = vadd.f32 0.0, %v3754
        %v3756 = vpop.f32.mrb[0].mxu0
        %v3757 = vadd.f32 0.0, %v3756
        %v3758 = vpop.f32.mrb[0].mxu0
        %v3759 = vadd.f32 0.0, %v3758
        %3760 = vmatprep.mubr.bf16.mxu0 0
        %3761 = vmatmul.mubr.bf16.gmra.mrb[0].mxu0 %v3201
        %v3762 = vpop.f32.mrb[0].mxu0
        %v3763 = vadd.f32 0.0, %v3762
        %v3764 = vpop.f32.mrb[0].mxu0
        %v3765 = vadd.f32 0.0, %v3764
        %v3766 = vpop.f32.mrb[0].mxu0
        %v3767 = vadd.f32 0.0, %v3766
        %v3768 = vpop.f32.mrb[0].mxu0
        %v3769 = vadd.f32 0.0, %v3768
        %3770 = vmatprep.mubr.bf16.mxu0 0
        %3771 = vmatmul.mubr.bf16.gmra.mrb[0].mxu0 %v3204
        %v3772 = vpop.f32.mrb[0].mxu0
        %v3773 = vadd.f32 0.0, %v3772
        %v3774 = vpop.f32.mrb[0].mxu0
        %v3775 = vadd.f32 0.0, %v3774
        %v3776 = vpop.f32.mrb[0].mxu0
        %v3777 = vadd.f32 0.0, %v3776
        %v3778 = vpop.f32.mrb[0].mxu0
        %v3779 = vadd.f32 0.0, %v3778
        %3780 = vmatprep.mubr.bf16.mxu0 0
        %3781 = vmatmul.mubr.bf16.gmra.mrb[0].mxu0 %v3207
        %v3782 = vpop.f32.mrb[0].mxu0
        %v3783 = vadd.f32 0.0, %v3782
        %v3784 = vpop.f32.mrb[0].mxu0
        %v3785 = vadd.f32 0.0, %v3784
        %v3786 = vpop.f32.mrb[0].mxu0
        %v3787 = vadd.f32 0.0, %v3786
        %v3788 = vpop.f32.mrb[0].mxu0
        %v3789 = vadd.f32 0.0, %v3788
        %3790 = vmatprep.mubr.bf16.mxu0 0
        %3791 = vmatmul.mubr.bf16.gmra.mrb[0].mxu0 %v3210
        %v3792 = vpop.f32.mrb[0].mxu0
        %v3793 = vadd.f32 0.0, %v3792
        %v3794 = vpop.f32.mrb[0].mxu0
        %v3795 = vadd.f32 0.0, %v3794
        %v3796 = vpop.f32.mrb[0].mxu0
        %v3797 = vadd.f32 0.0, %v3796
        %v3798 = vpop.f32.mrb[0].mxu0
        %v3799 = vadd.f32 0.0, %v3798
        %3800 = vmatprep.mubr.bf16.mxu0 0
        %3801 = vmatmul.mubr.bf16.gmra.mrb[0].mxu0 %v3213
        %v3802 = vpop.f32.mrb[0].mxu0
        %v3803 = vadd.f32 0.0, %v3802
        %v3804 = vpop.f32.mrb[0].mxu0
        %v3805 = vadd.f32 0.0, %v3804
        %v3806 = vpop.f32.mrb[0].mxu0
        %v3807 = vadd.f32 0.0, %v3806
        %v3808 = vpop.f32.mrb[0].mxu0
        %v3809 = vadd.f32 0.0, %v3808
        %3810 = vmatprep.mubr.bf16.mxu0 0
        %3811 = vmatmul.mubr.bf16.gmra.mrb[0].mxu0 %v3216
        %v3812 = vpop.f32.mrb[0].mxu0
        %v3813 = vadd.f32 0.0, %v3812
        %v3814 = vpop.f32.mrb[0].mxu0
        %v3815 = vadd.f32 0.0, %v3814
        %v3816 = vpop.f32.mrb[0].mxu0
        %v3817 = vadd.f32 0.0, %v3816
        %v3818 = vpop.f32.mrb[0].mxu0
        %v3819 = vadd.f32 0.0, %v3818
        %3820 = vmatprep.mubr.bf16.mxu0 0
        %3821 = vmatmul.mubr.bf16.gmra.mrb[0].mxu0 %v3219
        %v3822 = vpop.f32.mrb[0].mxu0
        %v3823 = vadd.f32 0.0, %v3822
        %v3824 = vpop.f32.mrb[0].mxu0
        %v3825 = vadd.f32 0.0, %v3824
        %v3826 = vpop.f32.mrb[0].mxu0
        %v3827 = vadd.f32 0.0, %v3826
        %v3828 = vpop.f32.mrb[0].mxu0
        %v3829 = vadd.f32 0.0, %v3828
        %3830 = vmatprep.mubr.bf16.mxu0 0
        %3831 = vmatmul.mubr.bf16.gmra.mrb[0].mxu0 %v3222
        %v3832 = vpop.f32.mrb[0].mxu0
        %v3833 = vadd.f32 0.0, %v3832
        %v3834 = vpop.f32.mrb[0].mxu0
        %v3835 = vadd.f32 0.0, %v3834
        %v3836 = vpop.f32.mrb[0].mxu0
        %v3837 = vadd.f32 0.0, %v3836
        %v3838 = vpop.f32.mrb[0].mxu0
        %v3839 = vadd.f32 0.0, %v3838
        %3840 = vmatprep.mubr.bf16.mxu0 0
        %3841 = vmatmul.mubr.bf16.gmra.mrb[0].mxu0 %v3225
        %v3842 = vpop.f32.mrb[0].mxu0
        %v3843 = vadd.f32 0.0, %v3842
        %v3844 = vpop.f32.mrb[0].mxu0
        %v3845 = vadd.f32 0.0, %v3844
        %v3846 = vpop.f32.mrb[0].mxu0
        %v3847 = vadd.f32 0.0, %v3846
        %v3848 = vpop.f32.mrb[0].mxu0
        %v3849 = vadd.f32 0.0, %v3848
        %3850 = vmatprep.mubr.bf16.mxu0 0
        %3851 = vmatmul.mubr.bf16.gmra.mrb[0].mxu0 %v3228
        %v3852 = vpop.f32.mrb[0].mxu0
        %v3853 = vadd.f32 0.0, %v3852
        %v3854 = vpop.f32.mrb[0].mxu0
        %v3855 = vadd.f32 0.0, %v3854
        %v3856 = vpop.f32.mrb[0].mxu0
        %v3857 = vadd.f32 0.0, %v3856
        %v3858 = vpop.f32.mrb[0].mxu0
        %v3859 = vadd.f32 0.0, %v3858
        %3860 = vmatprep.mubr.bf16.mxu0 0
        %3861 = vmatmul.mubr.bf16.gmra.mrb[0].mxu0 %v3231
        %v3862 = vpop.f32.mrb[0].mxu0
        %v3863 = vadd.f32 0.0, %v3862
        %v3864 = vpop.f32.mrb[0].mxu0
        %v3865 = vadd.f32 0.0, %v3864
        %v3866 = vpop.f32.mrb[0].mxu0
        %v3867 = vadd.f32 0.0, %v3866
        %v3868 = vpop.f32.mrb[0].mxu0
        %v3869 = vadd.f32 0.0, %v3868
        %3870 = vmatprep.mubr.bf16.mxu0 0
        %3871 = vmatmul.mubr.bf16.gmra.mrb[0].mxu0 %v3234
        %v3872 = vpop.f32.mrb[0].mxu0
        %v3873 = vadd.f32 0.0, %v3872
        %v3874 = vpop.f32.mrb[0].mxu0
        %v3875 = vadd.f32 0.0, %v3874
        %v3876 = vpop.f32.mrb[0].mxu0
        %v3877 = vadd.f32 0.0, %v3876
        %v3878 = vpop.f32.mrb[0].mxu0
        %v3879 = vadd.f32 0.0, %v3878
        %3880 = vmatprep.mubr.bf16.mxu0 0
        %3881 = vmatmul.mubr.bf16.gmra.mrb[0].mxu0 %v3237
        %v3882 = vpop.f32.mrb[0].mxu0
        %v3883 = vadd.f32 0.0, %v3882
        %v3884 = vpop.f32.mrb[0].mxu0
        %v3885 = vadd.f32 0.0, %v3884
        %v3886 = vpop.f32.mrb[0].mxu0
        %v3887 = vadd.f32 0.0, %v3886
        %v3888 = vpop.f32.mrb[0].mxu0
        %v3889 = vadd.f32 0.0, %v3888
        %3890 = vmatprep.mubr.bf16.mxu0 0
        %3891 = vmatmul.mubr.bf16.gmra.mrb[0].mxu0 %v3240
        %v3892 = vpop.f32.mrb[0].mxu0
        %v3893 = vadd.f32 0.0, %v3892
        %v3894 = vpop.f32.mrb[0].mxu0
        %v3895 = vadd.f32 0.0, %v3894
        %v3896 = vpop.f32.mrb[0].mxu0
        %v3897 = vadd.f32 0.0, %v3896
        %v3898 = vpop.f32.mrb[0].mxu0
        %v3899 = vadd.f32 0.0, %v3898
        %3900 = vdwg.mxu0
        %v3901 = vadd.f32 %v3547, %v3743
        %v3902 = vadd.f32 %v3548, %v3745
        %v3903 = vadd.f32 %v3549, %v3747
        %v3904 = vadd.f32 %v3550, %v3749
        %v3905 = vadd.f32 %v3551, %v3753
        %v3906 = vadd.f32 %v3552, %v3755
        %v3907 = vadd.f32 %v3553, %v3757
        %v3908 = vadd.f32 %v3554, %v3759
        %v3909 = vadd.f32 %v3555, %v3763
        %v3910 = vadd.f32 %v3556, %v3765
        %v3911 = vadd.f32 %v3557, %v3767
        %v3912 = vadd.f32 %v3558, %v3769
        %v3913 = vadd.f32 %v3559, %v3773
        %v3914 = vadd.f32 %v3560, %v3775
        %v3915 = vadd.f32 %v3561, %v3777
        %v3916 = vadd.f32 %v3562, %v3779
        %v3917 = vadd.f32 %v3563, %v3783
        %v3918 = vadd.f32 %v3564, %v3785
        %v3919 = vadd.f32 %v3565, %v3787
        %v3920 = vadd.f32 %v3566, %v3789
        %v3921 = vadd.f32 %v3567, %v3793
        %v3922 = vadd.f32 %v3568, %v3795
        %v3923 = vadd.f32 %v3569, %v3797
        %v3924 = vadd.f32 %v3570, %v3799
        %v3925 = vadd.f32 %v3571, %v3803
        %v3926 = vadd.f32 %v3572, %v3805
        %v3927 = vadd.f32 %v3573, %v3807
        %v3928 = vadd.f32 %v3574, %v3809
        %v3929 = vadd.f32 %v3575, %v3813
        %v3930 = vadd.f32 %v3576, %v3815
        %v3931 = vadd.f32 %v3577, %v3817
        %v3932 = vadd.f32 %v3578, %v3819
        %v3933 = vadd.f32 %v3579, %v3823
        %v3934 = vadd.f32 %v3580, %v3825
        %v3935 = vadd.f32 %v3581, %v3827
        %v3936 = vadd.f32 %v3582, %v3829
        %v3937 = vadd.f32 %v3583, %v3833
        %v3938 = vadd.f32 %v3584, %v3835
        %v3939 = vadd.f32 %v3585, %v3837
        %v3940 = vadd.f32 %v3586, %v3839
        %v3941 = vadd.f32 %v3587, %v3843
        %v3942 = vadd.f32 %v3588, %v3845
        %v3943 = vadd.f32 %v3589, %v3847
        %v3944 = vadd.f32 %v3590, %v3849
        %v3945 = vadd.f32 %v3591, %v3853
        %v3946 = vadd.f32 %v3592, %v3855
        %v3947 = vadd.f32 %v3593, %v3857
        %v3948 = vadd.f32 %v3594, %v3859
        %v3949 = vadd.f32 %v3595, %v3863
        %v3950 = vadd.f32 %v3596, %v3865
        %v3951 = vadd.f32 %v3597, %v3867
        %v3952 = vadd.f32 %v3598, %v3869
        %v3953 = vadd.f32 %v3599, %v3873
        %v3954 = vadd.f32 %v3600, %v3875
        %v3955 = vadd.f32 %v3601, %v3877
        %v3956 = vadd.f32 %v3602, %v3879
        %v3957 = vadd.f32 %v3603, %v3883
        %v3958 = vadd.f32 %v3604, %v3885
        %v3959 = vadd.f32 %v3605, %v3887
        %v3960 = vadd.f32 %v3606, %v3889
        %v3961 = vadd.f32 %v3607, %v3893
        %v3962 = vadd.f32 %v3608, %v3895
        %v3963 = vadd.f32 %v3609, %v3897
        %v3964 = vadd.f32 %v3610, %v3899
        %s3965 = scalar_lea.vmem [#allocation7], 1024
        %v3966 = vld [vmem:[%s3965] sm:$0xff]
        %v3967 = vld [vmem:[%s3965 + $0x8] sm:$0xff]
        %v3968 = vld [vmem:[%s3965 + $0x10] sm:$0xff]
        %v3969 = vld [vmem:[%s3965 + $0x18] sm:$0xff]
        %v3970 = vld [vmem:[%s3965 + $0x20] sm:$0xff]
        %v3971 = vld [vmem:[%s3965 + $0x28] sm:$0xff]
        %v3972 = vld [vmem:[%s3965 + $0x30] sm:$0xff]
        %v3973 = vld [vmem:[%s3965 + $0x38] sm:$0xff]
        %v3974 = vld [vmem:[%s3965 + $0x40] sm:$0xff]
        %v3975 = vld [vmem:[%s3965 + $0x48] sm:$0xff]
        %v3976 = vld [vmem:[%s3965 + $0x50] sm:$0xff]
        %v3977 = vld [vmem:[%s3965 + $0x58] sm:$0xff]
        %v3978 = vld [vmem:[%s3965 + $0x60] sm:$0xff]
        %v3979 = vld [vmem:[%s3965 + $0x68] sm:$0xff]
        %v3980 = vld [vmem:[%s3965 + $0x70] sm:$0xff]
        %v3981 = vld [vmem:[%s3965 + $0x78] sm:$0xff]
        %v3998 = vunpack.c.l.b16 %v3966
        %v3999 = vunpack.c.h.b16 %v3966
        %v4000 = vunpack.c.l.b16 %v3967
        %v4001 = vunpack.c.h.b16 %v3967
        %v4002 = vunpack.c.l.b16 %v3968
        %v4003 = vunpack.c.h.b16 %v3968
        %v4004 = vunpack.c.l.b16 %v3969
        %v4005 = vunpack.c.h.b16 %v3969
        %v4006 = vunpack.c.l.b16 %v3970
        %v4007 = vunpack.c.h.b16 %v3970
        %v4008 = vunpack.c.l.b16 %v3971
        %v4009 = vunpack.c.h.b16 %v3971
        %v4010 = vunpack.c.l.b16 %v3972
        %v4011 = vunpack.c.h.b16 %v3972
        %v4012 = vunpack.c.l.b16 %v3973
        %v4013 = vunpack.c.h.b16 %v3973
        %v4014 = vunpack.c.l.b16 %v3974
        %v4015 = vunpack.c.h.b16 %v3974
        %v4016 = vunpack.c.l.b16 %v3975
        %v4017 = vunpack.c.h.b16 %v3975
        %v4018 = vunpack.c.l.b16 %v3976
        %v4019 = vunpack.c.h.b16 %v3976
        %v4020 = vunpack.c.l.b16 %v3977
        %v4021 = vunpack.c.h.b16 %v3977
        %v4022 = vunpack.c.l.b16 %v3978
        %v4023 = vunpack.c.h.b16 %v3978
        %v4024 = vunpack.c.l.b16 %v3979
        %v4025 = vunpack.c.h.b16 %v3979
        %v4026 = vunpack.c.l.b16 %v3980
        %v4027 = vunpack.c.h.b16 %v3980
        %v4028 = vunpack.c.l.b16 %v3981
        %v4029 = vunpack.c.h.b16 %v3981
        %v4030 = vpack.c.b16 %v4000, %v3998
        %v4031 = vpack.c.b16 %v4001, %v3999
        %v4032 = vpack.c.b16 %v4004, %v4002
        %v4033 = vpack.c.b16 %v4005, %v4003
        %v4034 = vpack.c.b16 %v4008, %v4006
        %v4035 = vpack.c.b16 %v4009, %v4007
        %v4036 = vpack.c.b16 %v4012, %v4010
        %v4037 = vpack.c.b16 %v4013, %v4011
        %v4038 = vpack.c.b16 %v4016, %v4014
        %v4039 = vpack.c.b16 %v4017, %v4015
        %v4040 = vpack.c.b16 %v4020, %v4018
        %v4041 = vpack.c.b16 %v4021, %v4019
        %v4042 = vpack.c.b16 %v4024, %v4022
        %v4043 = vpack.c.b16 %v4025, %v4023
        %v4044 = vpack.c.b16 %v4028, %v4026
        %v4045 = vpack.c.b16 %v4029, %v4027
        %4062 = vmatprep.subr.bf16.mxu0 %v4031
        %4063 = vmatpush1.bf16.msra.mxu0 %v4030
        %4064 = vmatprep.subr.bf16.mxu0 %v4033
        %4065 = vmatpush1.bf16.msra.mxu0 %v4032
        %4066 = vmatprep.subr.bf16.mxu0 %v4035
        %4067 = vmatpush1.bf16.msra.mxu0 %v4034
        %4068 = vmatprep.subr.bf16.mxu0 %v4037
        %4069 = vmatpush1.bf16.msra.mxu0 %v4036
        %4070 = vmatprep.subr.bf16.mxu0 %v4039
        %4071 = vmatpush1.bf16.msra.mxu0 %v4038
        %4072 = vmatprep.subr.bf16.mxu0 %v4041
        %4073 = vmatpush1.bf16.msra.mxu0 %v4040
        %4074 = vmatprep.subr.bf16.mxu0 %v4043
        %4075 = vmatpush1.bf16.msra.mxu0 %v4042
        %4076 = vmatprep.subr.bf16.mxu0 %v4045
        %4077 = vmatpush1.bf16.msra.mxu0 %v4044
        %4078 = vmatprep.subr.bf16.mxu0 0
        %4079 = vmatpush1.bf16.msra.mxu0 0
        %4080 = vmatprep.subr.bf16.mxu0 0
        %4081 = vmatpush1.bf16.msra.mxu0 0
        %4082 = vmatprep.subr.bf16.mxu0 0
        %4083 = vmatpush1.bf16.msra.mxu0 0
        %4084 = vmatprep.subr.bf16.mxu0 0
        %4085 = vmatpush1.bf16.msra.mxu0 0
        %4086 = vmatprep.subr.bf16.mxu0 0
        %4087 = vmatpush1.bf16.msra.mxu0 0
        %4088 = vmatprep.subr.bf16.mxu0 0
        %4089 = vmatpush1.bf16.msra.mxu0 0
        %4090 = vmatprep.subr.bf16.mxu0 0
        %4091 = vmatpush1.bf16.msra.mxu0 0
        %4092 = vmatprep.subr.bf16.mxu0 0
        %4093 = vmatpush1.bf16.msra.mxu0 0
        %4094 = vmatprep.mubr.bf16.mxu0 0
        %4095 = vmatmul.mubr.bf16.gmra.mrb[0].mxu0 %v3198
        %v4096 = vpop.f32.mrb[0].mxu0
        %v4097 = vadd.f32 0.0, %v4096
        %v4098 = vpop.f32.mrb[0].mxu0
        %v4099 = vadd.f32 0.0, %v4098
        %v4100 = vpop.f32.mrb[0].mxu0
        %v4101 = vadd.f32 0.0, %v4100
        %v4102 = vpop.f32.mrb[0].mxu0
        %v4103 = vadd.f32 0.0, %v4102
        %4104 = vmatprep.mubr.bf16.mxu0 0
        %4105 = vmatmul.mubr.bf16.gmra.mrb[0].mxu0 %v3201
        %v4106 = vpop.f32.mrb[0].mxu0
        %v4107 = vadd.f32 0.0, %v4106
        %v4108 = vpop.f32.mrb[0].mxu0
        %v4109 = vadd.f32 0.0, %v4108
        %v4110 = vpop.f32.mrb[0].mxu0
        %v4111 = vadd.f32 0.0, %v4110
        %v4112 = vpop.f32.mrb[0].mxu0
        %v4113 = vadd.f32 0.0, %v4112
        %4114 = vmatprep.mubr.bf16.mxu0 0
        %4115 = vmatmul.mubr.bf16.gmra.mrb[0].mxu0 %v3204
        %v4116 = vpop.f32.mrb[0].mxu0
        %v4117 = vadd.f32 0.0, %v4116
        %v4118 = vpop.f32.mrb[0].mxu0
        %v4119 = vadd.f32 0.0, %v4118
        %v4120 = vpop.f32.mrb[0].mxu0
        %v4121 = vadd.f32 0.0, %v4120
        %v4122 = vpop.f32.mrb[0].mxu0
        %v4123 = vadd.f32 0.0, %v4122
        %4124 = vmatprep.mubr.bf16.mxu0 0
        %4125 = vmatmul.mubr.bf16.gmra.mrb[0].mxu0 %v3207
        %v4126 = vpop.f32.mrb[0].mxu0
        %v4127 = vadd.f32 0.0, %v4126
        %v4128 = vpop.f32.mrb[0].mxu0
        %v4129 = vadd.f32 0.0, %v4128
        %v4130 = vpop.f32.mrb[0].mxu0
        %v4131 = vadd.f32 0.0, %v4130
        %v4132 = vpop.f32.mrb[0].mxu0
        %v4133 = vadd.f32 0.0, %v4132
        %4134 = vmatprep.mubr.bf16.mxu0 0
        %4135 = vmatmul.mubr.bf16.gmra.mrb[0].mxu0 %v3210
        %v4136 = vpop.f32.mrb[0].mxu0
        %v4137 = vadd.f32 0.0, %v4136
        %v4138 = vpop.f32.mrb[0].mxu0
        %v4139 = vadd.f32 0.0, %v4138
        %v4140 = vpop.f32.mrb[0].mxu0
        %v4141 = vadd.f32 0.0, %v4140
        %v4142 = vpop.f32.mrb[0].mxu0
        %v4143 = vadd.f32 0.0, %v4142
        %4144 = vmatprep.mubr.bf16.mxu0 0
        %4145 = vmatmul.mubr.bf16.gmra.mrb[0].mxu0 %v3213
        %v4146 = vpop.f32.mrb[0].mxu0
        %v4147 = vadd.f32 0.0, %v4146
        %v4148 = vpop.f32.mrb[0].mxu0
        %v4149 = vadd.f32 0.0, %v4148
        %v4150 = vpop.f32.mrb[0].mxu0
        %v4151 = vadd.f32 0.0, %v4150
        %v4152 = vpop.f32.mrb[0].mxu0
        %v4153 = vadd.f32 0.0, %v4152
        %4154 = vmatprep.mubr.bf16.mxu0 0
        %4155 = vmatmul.mubr.bf16.gmra.mrb[0].mxu0 %v3216
        %v4156 = vpop.f32.mrb[0].mxu0
        %v4157 = vadd.f32 0.0, %v4156
        %v4158 = vpop.f32.mrb[0].mxu0
        %v4159 = vadd.f32 0.0, %v4158
        %v4160 = vpop.f32.mrb[0].mxu0
        %v4161 = vadd.f32 0.0, %v4160
        %v4162 = vpop.f32.mrb[0].mxu0
        %v4163 = vadd.f32 0.0, %v4162
        %4164 = vmatprep.mubr.bf16.mxu0 0
        %4165 = vmatmul.mubr.bf16.gmra.mrb[0].mxu0 %v3219
        %v4166 = vpop.f32.mrb[0].mxu0
        %v4167 = vadd.f32 0.0, %v4166
        %v4168 = vpop.f32.mrb[0].mxu0
        %v4169 = vadd.f32 0.0, %v4168
        %v4170 = vpop.f32.mrb[0].mxu0
        %v4171 = vadd.f32 0.0, %v4170
        %v4172 = vpop.f32.mrb[0].mxu0
        %v4173 = vadd.f32 0.0, %v4172
        %4174 = vmatprep.mubr.bf16.mxu0 0
        %4175 = vmatmul.mubr.bf16.gmra.mrb[0].mxu0 %v3222
        %v4176 = vpop.f32.mrb[0].mxu0
        %v4177 = vadd.f32 0.0, %v4176
        %v4178 = vpop.f32.mrb[0].mxu0
        %v4179 = vadd.f32 0.0, %v4178
        %v4180 = vpop.f32.mrb[0].mxu0
        %v4181 = vadd.f32 0.0, %v4180
        %v4182 = vpop.f32.mrb[0].mxu0
        %v4183 = vadd.f32 0.0, %v4182
        %4184 = vmatprep.mubr.bf16.mxu0 0
        %4185 = vmatmul.mubr.bf16.gmra.mrb[0].mxu0 %v3225
        %v4186 = vpop.f32.mrb[0].mxu0
        %v4187 = vadd.f32 0.0, %v4186
        %v4188 = vpop.f32.mrb[0].mxu0
        %v4189 = vadd.f32 0.0, %v4188
        %v4190 = vpop.f32.mrb[0].mxu0
        %v4191 = vadd.f32 0.0, %v4190
        %v4192 = vpop.f32.mrb[0].mxu0
        %v4193 = vadd.f32 0.0, %v4192
        %4194 = vmatprep.mubr.bf16.mxu0 0
        %4195 = vmatmul.mubr.bf16.gmra.mrb[0].mxu0 %v3228
        %v4196 = vpop.f32.mrb[0].mxu0
        %v4197 = vadd.f32 0.0, %v4196
        %v4198 = vpop.f32.mrb[0].mxu0
        %v4199 = vadd.f32 0.0, %v4198
        %v4200 = vpop.f32.mrb[0].mxu0
        %v4201 = vadd.f32 0.0, %v4200
        %v4202 = vpop.f32.mrb[0].mxu0
        %v4203 = vadd.f32 0.0, %v4202
        %4204 = vmatprep.mubr.bf16.mxu0 0
        %4205 = vmatmul.mubr.bf16.gmra.mrb[0].mxu0 %v3231
        %v4206 = vpop.f32.mrb[0].mxu0
        %v4207 = vadd.f32 0.0, %v4206
        %v4208 = vpop.f32.mrb[0].mxu0
        %v4209 = vadd.f32 0.0, %v4208
        %v4210 = vpop.f32.mrb[0].mxu0
        %v4211 = vadd.f32 0.0, %v4210
        %v4212 = vpop.f32.mrb[0].mxu0
        %v4213 = vadd.f32 0.0, %v4212
        %4214 = vmatprep.mubr.bf16.mxu0 0
        %4215 = vmatmul.mubr.bf16.gmra.mrb[0].mxu0 %v3234
        %v4216 = vpop.f32.mrb[0].mxu0
        %v4217 = vadd.f32 0.0, %v4216
        %v4218 = vpop.f32.mrb[0].mxu0
        %v4219 = vadd.f32 0.0, %v4218
        %v4220 = vpop.f32.mrb[0].mxu0
        %v4221 = vadd.f32 0.0, %v4220
        %v4222 = vpop.f32.mrb[0].mxu0
        %v4223 = vadd.f32 0.0, %v4222
        %4224 = vmatprep.mubr.bf16.mxu0 0
        %4225 = vmatmul.mubr.bf16.gmra.mrb[0].mxu0 %v3237
        %v4226 = vpop.f32.mrb[0].mxu0
        %v4227 = vadd.f32 0.0, %v4226
        %v4228 = vpop.f32.mrb[0].mxu0
        %v4229 = vadd.f32 0.0, %v4228
        %v4230 = vpop.f32.mrb[0].mxu0
        %v4231 = vadd.f32 0.0, %v4230
        %v4232 = vpop.f32.mrb[0].mxu0
        %v4233 = vadd.f32 0.0, %v4232
        %4234 = vmatprep.mubr.bf16.mxu0 0
        %4235 = vmatmul.mubr.bf16.gmra.mrb[0].mxu0 %v3240
        %v4236 = vpop.f32.mrb[0].mxu0
        %v4237 = vadd.f32 0.0, %v4236
        %v4238 = vpop.f32.mrb[0].mxu0
        %v4239 = vadd.f32 0.0, %v4238
        %v4240 = vpop.f32.mrb[0].mxu0
        %v4241 = vadd.f32 0.0, %v4240
        %v4242 = vpop.f32.mrb[0].mxu0
        %v4243 = vadd.f32 0.0, %v4242
        %4244 = vmatprep.mubr.bf16.mxu0 0
        %4245 = vmatmul.mubr.bf16.gmra.mrb[0].mxu0 0
        %v4246 = vpop.f32.mrb[0].mxu0
        %v4247 = vadd.f32 0.0, %v4246
        %v4248 = vpop.f32.mrb[0].mxu0
        %v4249 = vadd.f32 0.0, %v4248
        %v4250 = vpop.f32.mrb[0].mxu0
        %v4251 = vadd.f32 0.0, %v4250
        %v4252 = vpop.f32.mrb[0].mxu0
        %v4253 = vadd.f32 0.0, %v4252
        %4254 = vdwg.mxu0
        %v4255 = vadd.f32 %v3901, %v4097
        %v4256 = vadd.f32 %v3902, %v4099
        %v4257 = vadd.f32 %v3903, %v4101
        %v4258 = vadd.f32 %v3904, %v4103
        %v4259 = vadd.f32 %v3905, %v4107
        %v4260 = vadd.f32 %v3906, %v4109
        %v4261 = vadd.f32 %v3907, %v4111
        %v4262 = vadd.f32 %v3908, %v4113
        %v4263 = vadd.f32 %v3909, %v4117
        %v4264 = vadd.f32 %v3910, %v4119
        %v4265 = vadd.f32 %v3911, %v4121
        %v4266 = vadd.f32 %v3912, %v4123
        %v4267 = vadd.f32 %v3913, %v4127
        %v4268 = vadd.f32 %v3914, %v4129
        %v4269 = vadd.f32 %v3915, %v4131
        %v4270 = vadd.f32 %v3916, %v4133
        %v4271 = vadd.f32 %v3917, %v4137
        %v4272 = vadd.f32 %v3918, %v4139
        %v4273 = vadd.f32 %v3919, %v4141
        %v4274 = vadd.f32 %v3920, %v4143
        %v4275 = vadd.f32 %v3921, %v4147
        %v4276 = vadd.f32 %v3922, %v4149
        %v4277 = vadd.f32 %v3923, %v4151
        %v4278 = vadd.f32 %v3924, %v4153
        %v4279 = vadd.f32 %v3925, %v4157
        %v4280 = vadd.f32 %v3926, %v4159
        %v4281 = vadd.f32 %v3927, %v4161
        %v4282 = vadd.f32 %v3928, %v4163
        %v4283 = vadd.f32 %v3929, %v4167
        %v4284 = vadd.f32 %v3930, %v4169
        %v4285 = vadd.f32 %v3931, %v4171
        %v4286 = vadd.f32 %v3932, %v4173
        %v4287 = vadd.f32 %v3933, %v4177
        %v4288 = vadd.f32 %v3934, %v4179
        %v4289 = vadd.f32 %v3935, %v4181
        %v4290 = vadd.f32 %v3936, %v4183
        %v4291 = vadd.f32 %v3937, %v4187
        %v4292 = vadd.f32 %v3938, %v4189
        %v4293 = vadd.f32 %v3939, %v4191
        %v4294 = vadd.f32 %v3940, %v4193
        %v4295 = vadd.f32 %v3941, %v4197
        %v4296 = vadd.f32 %v3942, %v4199
        %v4297 = vadd.f32 %v3943, %v4201
        %v4298 = vadd.f32 %v3944, %v4203
        %v4299 = vadd.f32 %v3945, %v4207
        %v4300 = vadd.f32 %v3946, %v4209
        %v4301 = vadd.f32 %v3947, %v4211
        %v4302 = vadd.f32 %v3948, %v4213
        %v4303 = vadd.f32 %v3949, %v4217
        %v4304 = vadd.f32 %v3950, %v4219
        %v4305 = vadd.f32 %v3951, %v4221
        %v4306 = vadd.f32 %v3952, %v4223
        %v4307 = vadd.f32 %v3953, %v4227
        %v4308 = vadd.f32 %v3954, %v4229
        %v4309 = vadd.f32 %v3955, %v4231
        %v4310 = vadd.f32 %v3956, %v4233
        %v4311 = vadd.f32 %v3957, %v4237
        %v4312 = vadd.f32 %v3958, %v4239
        %v4313 = vadd.f32 %v3959, %v4241
        %v4314 = vadd.f32 %v3960, %v4243
        %v4315 = vadd.f32 %v3961, %v4247
        %v4316 = vadd.f32 %v3962, %v4249
        %v4317 = vadd.f32 %v3963, %v4251
        %v4318 = vadd.f32 %v3964, %v4253
        %v4319 = vld [vmem:[%s4] sm:$0x3]
        %v4321 = vlaneseq
        %v4322 = vshrl.u32 %v4321, 7
        %v4323 = vsub.s32 0, %v4322
        %v4324 = vrot.slane %v4319, %v4323
        %v4325 = vlaneseq
        %v4326 = vshrl.u32 %v4325, 7
        %v4327 = vsub.s32 1, %v4326
        %v4328 = vrot.slane %v4319, %v4327
        %v4331 = vadd.f32 %v4255, %v4324
        %v4332 = vadd.f32 %v4256, %v4328
        %v4333 = vadd.f32 %v4257, %v4324
        %v4334 = vadd.f32 %v4258, %v4328
        %v4335 = vadd.f32 %v4259, %v4324
        %v4336 = vadd.f32 %v4260, %v4328
        %v4337 = vadd.f32 %v4261, %v4324
        %v4338 = vadd.f32 %v4262, %v4328
        %v4339 = vadd.f32 %v4263, %v4324
        %v4340 = vadd.f32 %v4264, %v4328
        %v4341 = vadd.f32 %v4265, %v4324
        %v4342 = vadd.f32 %v4266, %v4328
        %v4343 = vadd.f32 %v4267, %v4324
        %v4344 = vadd.f32 %v4268, %v4328
        %v4345 = vadd.f32 %v4269, %v4324
        %v4346 = vadd.f32 %v4270, %v4328
        %v4347 = vadd.f32 %v4271, %v4324
        %v4348 = vadd.f32 %v4272, %v4328
        %v4349 = vadd.f32 %v4273, %v4324
        %v4350 = vadd.f32 %v4274, %v4328
        %v4351 = vadd.f32 %v4275, %v4324
        %v4352 = vadd.f32 %v4276, %v4328
        %v4353 = vadd.f32 %v4277, %v4324
        %v4354 = vadd.f32 %v4278, %v4328
        %v4355 = vadd.f32 %v4279, %v4324
        %v4356 = vadd.f32 %v4280, %v4328
        %v4357 = vadd.f32 %v4281, %v4324
        %v4358 = vadd.f32 %v4282, %v4328
        %v4359 = vadd.f32 %v4283, %v4324
        %v4360 = vadd.f32 %v4284, %v4328
        %v4361 = vadd.f32 %v4285, %v4324
        %v4362 = vadd.f32 %v4286, %v4328
        %v4363 = vadd.f32 %v4287, %v4324
        %v4364 = vadd.f32 %v4288, %v4328
        %v4365 = vadd.f32 %v4289, %v4324
        %v4366 = vadd.f32 %v4290, %v4328
        %v4367 = vadd.f32 %v4291, %v4324
        %v4368 = vadd.f32 %v4292, %v4328
        %v4369 = vadd.f32 %v4293, %v4324
        %v4370 = vadd.f32 %v4294, %v4328
        %v4371 = vadd.f32 %v4295, %v4324
        %v4372 = vadd.f32 %v4296, %v4328
        %v4373 = vadd.f32 %v4297, %v4324
        %v4374 = vadd.f32 %v4298, %v4328
        %v4375 = vadd.f32 %v4299, %v4324
        %v4376 = vadd.f32 %v4300, %v4328
        %v4377 = vadd.f32 %v4301, %v4324
        %v4378 = vadd.f32 %v4302, %v4328
        %v4379 = vadd.f32 %v4303, %v4324
        %v4380 = vadd.f32 %v4304, %v4328
        %v4381 = vadd.f32 %v4305, %v4324
        %v4382 = vadd.f32 %v4306, %v4328
        %v4383 = vadd.f32 %v4307, %v4324
        %v4384 = vadd.f32 %v4308, %v4328
        %v4385 = vadd.f32 %v4309, %v4324
        %v4386 = vadd.f32 %v4310, %v4328
        %v4387 = vadd.f32 %v4311, %v4324
        %v4388 = vadd.f32 %v4312, %v4328
        %v4389 = vadd.f32 %v4313, %v4324
        %v4390 = vadd.f32 %v4314, %v4328
        %v4391 = vadd.f32 %v4315, %v4324
        %v4392 = vadd.f32 %v4316, %v4328
        %v4393 = vadd.f32 %v4317, %v4324
        %v4394 = vadd.f32 %v4318, %v4328
        %vm4395 = vcmp.ge.f32.partialorder %v4331, 0.0
        %vm4396 = vcmp.ge.f32.partialorder %v4332, 0.0
        %vm4397 = vcmp.ge.f32.partialorder %v4333, 0.0
        %vm4398 = vcmp.ge.f32.partialorder %v4334, 0.0
        %vm4399 = vcmp.ge.f32.partialorder %v4335, 0.0
        %vm4400 = vcmp.ge.f32.partialorder %v4336, 0.0
        %vm4401 = vcmp.ge.f32.partialorder %v4337, 0.0
        %vm4402 = vcmp.ge.f32.partialorder %v4338, 0.0
        %vm4403 = vcmp.ge.f32.partialorder %v4339, 0.0
        %vm4404 = vcmp.ge.f32.partialorder %v4340, 0.0
        %vm4405 = vcmp.ge.f32.partialorder %v4341, 0.0
        %vm4406 = vcmp.ge.f32.partialorder %v4342, 0.0
        %vm4407 = vcmp.ge.f32.partialorder %v4343, 0.0
        %vm4408 = vcmp.ge.f32.partialorder %v4344, 0.0
        %vm4409 = vcmp.ge.f32.partialorder %v4345, 0.0
        %vm4410 = vcmp.ge.f32.partialorder %v4346, 0.0
        %vm4411 = vcmp.ge.f32.partialorder %v4347, 0.0
        %vm4412 = vcmp.ge.f32.partialorder %v4348, 0.0
        %vm4413 = vcmp.ge.f32.partialorder %v4349, 0.0
        %vm4414 = vcmp.ge.f32.partialorder %v4350, 0.0
        %vm4415 = vcmp.ge.f32.partialorder %v4351, 0.0
        %vm4416 = vcmp.ge.f32.partialorder %v4352, 0.0
        %vm4417 = vcmp.ge.f32.partialorder %v4353, 0.0
        %vm4418 = vcmp.ge.f32.partialorder %v4354, 0.0
        %vm4419 = vcmp.ge.f32.partialorder %v4355, 0.0
        %vm4420 = vcmp.ge.f32.partialorder %v4356, 0.0
        %vm4421 = vcmp.ge.f32.partialorder %v4357, 0.0
        %vm4422 = vcmp.ge.f32.partialorder %v4358, 0.0
        %vm4423 = vcmp.ge.f32.partialorder %v4359, 0.0
        %vm4424 = vcmp.ge.f32.partialorder %v4360, 0.0
        %vm4425 = vcmp.ge.f32.partialorder %v4361, 0.0
        %vm4426 = vcmp.ge.f32.partialorder %v4362, 0.0
        %vm4427 = vcmp.ge.f32.partialorder %v4363, 0.0
        %vm4428 = vcmp.ge.f32.partialorder %v4364, 0.0
        %vm4429 = vcmp.ge.f32.partialorder %v4365, 0.0
        %vm4430 = vcmp.ge.f32.partialorder %v4366, 0.0
        %vm4431 = vcmp.ge.f32.partialorder %v4367, 0.0
        %vm4432 = vcmp.ge.f32.partialorder %v4368, 0.0
        %vm4433 = vcmp.ge.f32.partialorder %v4369, 0.0
        %vm4434 = vcmp.ge.f32.partialorder %v4370, 0.0
        %vm4435 = vcmp.ge.f32.partialorder %v4371, 0.0
        %vm4436 = vcmp.ge.f32.partialorder %v4372, 0.0
        %vm4437 = vcmp.ge.f32.partialorder %v4373, 0.0
        %vm4438 = vcmp.ge.f32.partialorder %v4374, 0.0
        %vm4439 = vcmp.ge.f32.partialorder %v4375, 0.0
        %vm4440 = vcmp.ge.f32.partialorder %v4376, 0.0
        %vm4441 = vcmp.ge.f32.partialorder %v4377, 0.0
        %vm4442 = vcmp.ge.f32.partialorder %v4378, 0.0
        %vm4443 = vcmp.ge.f32.partialorder %v4379, 0.0
        %vm4444 = vcmp.ge.f32.partialorder %v4380, 0.0
        %vm4445 = vcmp.ge.f32.partialorder %v4381, 0.0
        %vm4446 = vcmp.ge.f32.partialorder %v4382, 0.0
        %vm4447 = vcmp.ge.f32.partialorder %v4383, 0.0
        %vm4448 = vcmp.ge.f32.partialorder %v4384, 0.0
        %vm4449 = vcmp.ge.f32.partialorder %v4385, 0.0
        %vm4450 = vcmp.ge.f32.partialorder %v4386, 0.0
        %vm4451 = vcmp.ge.f32.partialorder %v4387, 0.0
        %vm4452 = vcmp.ge.f32.partialorder %v4388, 0.0
        %vm4453 = vcmp.ge.f32.partialorder %v4389, 0.0
        %vm4454 = vcmp.ge.f32.partialorder %v4390, 0.0
        %vm4455 = vcmp.ge.f32.partialorder %v4391, 0.0
        %vm4456 = vcmp.ge.f32.partialorder %v4392, 0.0
        %vm4457 = vcmp.ge.f32.partialorder %v4393, 0.0
        %vm4458 = vcmp.ge.f32.partialorder %v4394, 0.0
        %v4459 = vmul.f32 %v4331, 0.1
        %v4460 = vmul.f32 %v4332, 0.1
        %v4461 = vmul.f32 %v4333, 0.1
        %v4462 = vmul.f32 %v4334, 0.1
        %v4463 = vmul.f32 %v4335, 0.1
        %v4464 = vmul.f32 %v4336, 0.1
        %v4465 = vmul.f32 %v4337, 0.1
        %v4466 = vmul.f32 %v4338, 0.1
        %v4467 = vmul.f32 %v4339, 0.1
        %v4468 = vmul.f32 %v4340, 0.1
        %v4469 = vmul.f32 %v4341, 0.1
        %v4470 = vmul.f32 %v4342, 0.1
        %v4471 = vmul.f32 %v4343, 0.1
        %v4472 = vmul.f32 %v4344, 0.1
        %v4473 = vmul.f32 %v4345, 0.1
        %v4474 = vmul.f32 %v4346, 0.1
        %v4475 = vmul.f32 %v4347, 0.1
        %v4476 = vmul.f32 %v4348, 0.1
        %v4477 = vmul.f32 %v4349, 0.1
        %v4478 = vmul.f32 %v4350, 0.1
        %v4479 = vmul.f32 %v4351, 0.1
        %v4480 = vmul.f32 %v4352, 0.1
        %v4481 = vmul.f32 %v4353, 0.1
        %v4482 = vmul.f32 %v4354, 0.1
        %v4483 = vmul.f32 %v4355, 0.1
        %v4484 = vmul.f32 %v4356, 0.1
        %v4485 = vmul.f32 %v4357, 0.1
        %v4486 = vmul.f32 %v4358, 0.1
        %v4487 = vmul.f32 %v4359, 0.1
        %v4488 = vmul.f32 %v4360, 0.1
        %v4489 = vmul.f32 %v4361, 0.1
        %v4490 = vmul.f32 %v4362, 0.1
        %v4491 = vmul.f32 %v4363, 0.1
        %v4492 = vmul.f32 %v4364, 0.1
        %v4493 = vmul.f32 %v4365, 0.1
        %v4494 = vmul.f32 %v4366, 0.1
        %v4495 = vmul.f32 %v4367, 0.1
        %v4496 = vmul.f32 %v4368, 0.1
        %v4497 = vmul.f32 %v4369, 0.1
        %v4498 = vmul.f32 %v4370, 0.1
        %v4499 = vmul.f32 %v4371, 0.1
        %v4500 = vmul.f32 %v4372, 0.1
        %v4501 = vmul.f32 %v4373, 0.1
        %v4502 = vmul.f32 %v4374, 0.1
        %v4503 = vmul.f32 %v4375, 0.1
        %v4504 = vmul.f32 %v4376, 0.1
        %v4505 = vmul.f32 %v4377, 0.1
        %v4506 = vmul.f32 %v4378, 0.1
        %v4507 = vmul.f32 %v4379, 0.1
        %v4508 = vmul.f32 %v4380, 0.1
        %v4509 = vmul.f32 %v4381, 0.1
        %v4510 = vmul.f32 %v4382, 0.1
        %v4511 = vmul.f32 %v4383, 0.1
        %v4512 = vmul.f32 %v4384, 0.1
        %v4513 = vmul.f32 %v4385, 0.1
        %v4514 = vmul.f32 %v4386, 0.1
        %v4515 = vmul.f32 %v4387, 0.1
        %v4516 = vmul.f32 %v4388, 0.1
        %v4517 = vmul.f32 %v4389, 0.1
        %v4518 = vmul.f32 %v4390, 0.1
        %v4519 = vmul.f32 %v4391, 0.1
        %v4520 = vmul.f32 %v4392, 0.1
        %v4521 = vmul.f32 %v4393, 0.1
        %v4522 = vmul.f32 %v4394, 0.1
        %v4523 = vsel %vm4395, %v4331, %v4459
        %v4524 = vsel %vm4396, %v4332, %v4460
        %v4525 = vsel %vm4397, %v4333, %v4461
        %v4526 = vsel %vm4398, %v4334, %v4462
        %v4527 = vsel %vm4399, %v4335, %v4463
        %v4528 = vsel %vm4400, %v4336, %v4464
        %v4529 = vsel %vm4401, %v4337, %v4465
        %v4530 = vsel %vm4402, %v4338, %v4466
        %v4531 = vsel %vm4403, %v4339, %v4467
        %v4532 = vsel %vm4404, %v4340, %v4468
        %v4533 = vsel %vm4405, %v4341, %v4469
        %v4534 = vsel %vm4406, %v4342, %v4470
        %v4535 = vsel %vm4407, %v4343, %v4471
        %v4536 = vsel %vm4408, %v4344, %v4472
        %v4537 = vsel %vm4409, %v4345, %v4473
        %v4538 = vsel %vm4410, %v4346, %v4474
        %v4539 = vsel %vm4411, %v4347, %v4475
        %v4540 = vsel %vm4412, %v4348, %v4476
        %v4541 = vsel %vm4413, %v4349, %v4477
        %v4542 = vsel %vm4414, %v4350, %v4478
        %v4543 = vsel %vm4415, %v4351, %v4479
        %v4544 = vsel %vm4416, %v4352, %v4480
        %v4545 = vsel %vm4417, %v4353, %v4481
        %v4546 = vsel %vm4418, %v4354, %v4482
        %v4547 = vsel %vm4419, %v4355, %v4483
        %v4548 = vsel %vm4420, %v4356, %v4484
        %v4549 = vsel %vm4421, %v4357, %v4485
        %v4550 = vsel %vm4422, %v4358, %v4486
        %v4551 = vsel %vm4423, %v4359, %v4487
        %v4552 = vsel %vm4424, %v4360, %v4488
        %v4553 = vsel %vm4425, %v4361, %v4489
        %v4554 = vsel %vm4426, %v4362, %v4490
        %v4555 = vsel %vm4427, %v4363, %v4491
        %v4556 = vsel %vm4428, %v4364, %v4492
        %v4557 = vsel %vm4429, %v4365, %v4493
        %v4558 = vsel %vm4430, %v4366, %v4494
        %v4559 = vsel %vm4431, %v4367, %v4495
        %v4560 = vsel %vm4432, %v4368, %v4496
        %v4561 = vsel %vm4433, %v4369, %v4497
        %v4562 = vsel %vm4434, %v4370, %v4498
        %v4563 = vsel %vm4435, %v4371, %v4499
        %v4564 = vsel %vm4436, %v4372, %v4500
        %v4565 = vsel %vm4437, %v4373, %v4501
        %v4566 = vsel %vm4438, %v4374, %v4502
        %v4567 = vsel %vm4439, %v4375, %v4503
        %v4568 = vsel %vm4440, %v4376, %v4504
        %v4569 = vsel %vm4441, %v4377, %v4505
        %v4570 = vsel %vm4442, %v4378, %v4506
        %v4571 = vsel %vm4443, %v4379, %v4507
        %v4572 = vsel %vm4444, %v4380, %v4508
        %v4573 = vsel %vm4445, %v4381, %v4509
        %v4574 = vsel %vm4446, %v4382, %v4510
        %v4575 = vsel %vm4447, %v4383, %v4511
        %v4576 = vsel %vm4448, %v4384, %v4512
        %v4577 = vsel %vm4449, %v4385, %v4513
        %v4578 = vsel %vm4450, %v4386, %v4514
        %v4579 = vsel %vm4451, %v4387, %v4515
        %v4580 = vsel %vm4452, %v4388, %v4516
        %v4581 = vsel %vm4453, %v4389, %v4517
        %v4582 = vsel %vm4454, %v4390, %v4518
        %v4583 = vsel %vm4455, %v4391, %v4519
        %v4584 = vsel %vm4456, %v4392, %v4520
        %v4585 = vsel %vm4457, %v4393, %v4521
        %v4586 = vsel %vm4458, %v4394, %v4522
        %v4587 = vadd.f32 %v273, %v4523
        %v4588 = vadd.f32 %v274, %v4524
        %v4589 = vadd.f32 %v275, %v4525
        %v4590 = vadd.f32 %v276, %v4526
        %v4591 = vadd.f32 %v277, %v4527
        %v4592 = vadd.f32 %v278, %v4528
        %v4593 = vadd.f32 %v279, %v4529
        %v4594 = vadd.f32 %v280, %v4530
        %v4595 = vadd.f32 %v281, %v4531
        %v4596 = vadd.f32 %v282, %v4532
        %v4597 = vadd.f32 %v283, %v4533
        %v4598 = vadd.f32 %v284, %v4534
        %v4599 = vadd.f32 %v285, %v4535
        %v4600 = vadd.f32 %v286, %v4536
        %v4601 = vadd.f32 %v287, %v4537
        %v4602 = vadd.f32 %v288, %v4538
        %v4603 = vadd.f32 %v289, %v4539
        %v4604 = vadd.f32 %v290, %v4540
        %v4605 = vadd.f32 %v291, %v4541
        %v4606 = vadd.f32 %v292, %v4542
        %v4607 = vadd.f32 %v293, %v4543
        %v4608 = vadd.f32 %v294, %v4544
        %v4609 = vadd.f32 %v295, %v4545
        %v4610 = vadd.f32 %v296, %v4546
        %v4611 = vadd.f32 %v297, %v4547
        %v4612 = vadd.f32 %v298, %v4548
        %v4613 = vadd.f32 %v299, %v4549
        %v4614 = vadd.f32 %v300, %v4550
        %v4615 = vadd.f32 %v301, %v4551
        %v4616 = vadd.f32 %v302, %v4552
        %v4617 = vadd.f32 %v303, %v4553
        %v4618 = vadd.f32 %v304, %v4554
        %v4619 = vadd.f32 %v305, %v4555
        %v4620 = vadd.f32 %v306, %v4556
        %v4621 = vadd.f32 %v307, %v4557
        %v4622 = vadd.f32 %v308, %v4558
        %v4623 = vadd.f32 %v309, %v4559
        %v4624 = vadd.f32 %v310, %v4560
        %v4625 = vadd.f32 %v311, %v4561
        %v4626 = vadd.f32 %v312, %v4562
        %v4627 = vadd.f32 %v313, %v4563
        %v4628 = vadd.f32 %v314, %v4564
        %v4629 = vadd.f32 %v315, %v4565
        %v4630 = vadd.f32 %v316, %v4566
        %v4631 = vadd.f32 %v317, %v4567
        %v4632 = vadd.f32 %v318, %v4568
        %v4633 = vadd.f32 %v319, %v4569
        %v4634 = vadd.f32 %v320, %v4570
        %v4635 = vadd.f32 %v321, %v4571
        %v4636 = vadd.f32 %v322, %v4572
        %v4637 = vadd.f32 %v323, %v4573
        %v4638 = vadd.f32 %v324, %v4574
        %v4639 = vadd.f32 %v325, %v4575
        %v4640 = vadd.f32 %v326, %v4576
        %v4641 = vadd.f32 %v327, %v4577
        %v4642 = vadd.f32 %v328, %v4578
        %v4643 = vadd.f32 %v329, %v4579
        %v4644 = vadd.f32 %v330, %v4580
        %v4645 = vadd.f32 %v331, %v4581
        %v4646 = vadd.f32 %v332, %v4582
        %v4647 = vadd.f32 %v333, %v4583
        %v4648 = vadd.f32 %v334, %v4584
        %v4649 = vadd.f32 %v335, %v4585
        %v4650 = vadd.f32 %v336, %v4586
        %4651 = vst [vmem:[%s271] sm:$0xff] %v4587
        %4652 = vst [vmem:[%s271 + $0x8] sm:$0xff] %v4588
        %4653 = vst [vmem:[%s271 + $0x10] sm:$0xff] %v4589
        %4654 = vst [vmem:[%s271 + $0x18] sm:$0xff] %v4590
        %4655 = vst [vmem:[%s271 + $0x20] sm:$0xff] %v4591
        %4656 = vst [vmem:[%s271 + $0x28] sm:$0xff] %v4592
        %4657 = vst [vmem:[%s271 + $0x30] sm:$0xff] %v4593
        %4658 = vst [vmem:[%s271 + $0x38] sm:$0xff] %v4594
        %4659 = vst [vmem:[%s271 + $0x40] sm:$0xff] %v4595
        %4660 = vst [vmem:[%s271 + $0x48] sm:$0xff] %v4596
        %4661 = vst [vmem:[%s271 + $0x50] sm:$0xff] %v4597
        %4662 = vst [vmem:[%s271 + $0x58] sm:$0xff] %v4598
        %4663 = vst [vmem:[%s271 + $0x60] sm:$0xff] %v4599
        %4664 = vst [vmem:[%s271 + $0x68] sm:$0xff] %v4600
        %4665 = vst [vmem:[%s271 + $0x70] sm:$0xff] %v4601
        %4666 = vst [vmem:[%s271 + $0x78] sm:$0xff] %v4602
        %4667 = vst [vmem:[%s271 + $0x80] sm:$0xff] %v4603
        %4668 = vst [vmem:[%s271 + $0x88] sm:$0xff] %v4604
        %4669 = vst [vmem:[%s271 + $0x90] sm:$0xff] %v4605
        %4670 = vst [vmem:[%s271 + $0x98] sm:$0xff] %v4606
        %4671 = vst [vmem:[%s271 + $0xa0] sm:$0xff] %v4607
        %4672 = vst [vmem:[%s271 + $0xa8] sm:$0xff] %v4608
        %4673 = vst [vmem:[%s271 + $0xb0] sm:$0xff] %v4609
        %4674 = vst [vmem:[%s271 + $0xb8] sm:$0xff] %v4610
        %4675 = vst [vmem:[%s271 + $0xc0] sm:$0xff] %v4611
        %4676 = vst [vmem:[%s271 + $0xc8] sm:$0xff] %v4612
        %4677 = vst [vmem:[%s271 + $0xd0] sm:$0xff] %v4613
        %4678 = vst [vmem:[%s271 + $0xd8] sm:$0xff] %v4614
        %4679 = vst [vmem:[%s271 + $0xe0] sm:$0xff] %v4615
        %4680 = vst [vmem:[%s271 + $0xe8] sm:$0xff] %v4616
        %4681 = vst [vmem:[%s271 + $0xf0] sm:$0xff] %v4617
        %4682 = vst [vmem:[%s271 + $0xf8] sm:$0xff] %v4618
        %4683 = vst [vmem:[%s271 + $0x100] sm:$0xff] %v4619
        %4684 = vst [vmem:[%s271 + $0x108] sm:$0xff] %v4620
        %4685 = vst [vmem:[%s271 + $0x110] sm:$0xff] %v4621
        %4686 = vst [vmem:[%s271 + $0x118] sm:$0xff] %v4622
        %4687 = vst [vmem:[%s271 + $0x120] sm:$0xff] %v4623
        %4688 = vst [vmem:[%s271 + $0x128] sm:$0xff] %v4624
        %4689 = vst [vmem:[%s271 + $0x130] sm:$0xff] %v4625
        %4690 = vst [vmem:[%s271 + $0x138] sm:$0xff] %v4626
        %4691 = vst [vmem:[%s271 + $0x140] sm:$0xff] %v4627
        %4692 = vst [vmem:[%s271 + $0x148] sm:$0xff] %v4628
        %4693 = vst [vmem:[%s271 + $0x150] sm:$0xff] %v4629
        %4694 = vst [vmem:[%s271 + $0x158] sm:$0xff] %v4630
        %4695 = vst [vmem:[%s271 + $0x160] sm:$0xff] %v4631
        %4696 = vst [vmem:[%s271 + $0x168] sm:$0xff] %v4632
        %4697 = vst [vmem:[%s271 + $0x170] sm:$0xff] %v4633
        %4698 = vst [vmem:[%s271 + $0x178] sm:$0xff] %v4634
        %4699 = vst [vmem:[%s271 + $0x180] sm:$0xff] %v4635
        %4700 = vst [vmem:[%s271 + $0x188] sm:$0xff] %v4636
        %4701 = vst [vmem:[%s271 + $0x190] sm:$0xff] %v4637
        %4702 = vst [vmem:[%s271 + $0x198] sm:$0xff] %v4638
        %4703 = vst [vmem:[%s271 + $0x1a0] sm:$0xff] %v4639
        %4704 = vst [vmem:[%s271 + $0x1a8] sm:$0xff] %v4640
        %4705 = vst [vmem:[%s271 + $0x1b0] sm:$0xff] %v4641
        %4706 = vst [vmem:[%s271 + $0x1b8] sm:$0xff] %v4642
        %4707 = vst [vmem:[%s271 + $0x1c0] sm:$0xff] %v4643
        %4708 = vst [vmem:[%s271 + $0x1c8] sm:$0xff] %v4644
        %4709 = vst [vmem:[%s271 + $0x1d0] sm:$0xff] %v4645
        %4710 = vst [vmem:[%s271 + $0x1d8] sm:$0xff] %v4646
        %4711 = vst [vmem:[%s271 + $0x1e0] sm:$0xff] %v4647
        %4712 = vst [vmem:[%s271 + $0x1e8] sm:$0xff] %v4648
        %4713 = vst [vmem:[%s271 + $0x1f0] sm:$0xff] %v4649
        %4714 = vst [vmem:[%s271 + $0x1f8] sm:$0xff] %v4650
        %s4715 = sand.u32 %s141, 1
        %s4716 = scalar_lea.sflag [#allocation4], %s4715
        %s4717 = sand.u32 %s141, 1
        %s4718 = smul.addr %s4717, 512
        %s4719 = scalar_lea.vmem [#allocation8], %s4718
        // Predicated region
        $region53: #{tpu_custom_call.1} parent=39 // pred_check
          %p4720 = pneg %p151
        $region54: #{tpu_custom_call.1} parent=39 // pred_check_branch
          %4722 = sbr.rel (%p4720) target = $region56
        $region55: #{tpu_custom_call.1} parent=39 // pred_region
          %s4724 = ssub.s32 8192, 8192
          %4725 = vsyncadd %s4716, %s4724
          %s4726 = smul.addr %s23, 64
          %s4727 = smul.addr %s4726, 128
          %s4728 = scalar_lea.hbm %s5, %s4727
          %s4729 = sshll.u32 %s4719, 4
          %s4730 = int_to_ptr.vmem [resolvable:$true] %s4729
          %4735 = dma.vmem_to_hbm [thread:$0]  %s4730, 8192, %s4728, %s4716, 256, 256, 16
        $region56: #{tpu_custom_call.1} parent=39 // pred_fallthru
          _
      $region40: #{tpu_custom_call.1} parent=5 // pred_fallthru
        _
      %p4736 = scmp.le.s32.totalorder 2, %s18
      // Predicated region
      $region57: #{tpu_custom_call.1} parent=5 // pred_check
        %p4737 = pneg %p4736
      $region58: #{tpu_custom_call.1} parent=5 // pred_check_branch
        %4739 = sbr.rel (%p4737) target = $region60
      $region59: #{tpu_custom_call.1} parent=5 // pred_region
        %s4740 = ssub.s32 %s18, 2
        // Predicated region
        $region61: #{tpu_custom_call.1} parent=59 // pred_check
          %p4741 = pneg %p157
        $region62: #{tpu_custom_call.1} parent=59 // pred_check_branch
          %4743 = sbr.rel (%p4741) target = $region64
        $region63: #{tpu_custom_call.1} parent=59 // pred_region
          %s4744 = sand.u32 %s142, 1
          %s4745 = scalar_lea.sflag [#allocation4], %s4744
          %s4746 = sand.u32 %s142, 1
          %s4747 = smul.addr %s4746, 512
          %s4748 = scalar_lea.vmem [#allocation8], %s4747
          %4749 = dma.done %s4745, 8192
        $region64: #{tpu_custom_call.1} parent=59 // pred_fallthru
          _
      $region60: #{tpu_custom_call.1} parent=5 // pred_fallthru
        _
    $region6: #{tpu_custom_call.1} parent=1 // loop_footer
      %s22 = sadd.s32 1, %s18
    $region7: #{tpu_custom_call.1} parent=1 // loop_footer_branch
      %17 = sbr.rel target = $region3
    $region8: #{tpu_custom_call.1} parent=1 // loop_exit
      _
    %4750 = vsyncpa [#allocation3], 1
    %s4751 = scalar_lea.sflag [#allocation3], 1
    %4752 = vsyncpa %s4751, 1
    %4753 = vsyncpa [#allocation6], 1
    %4754 = vsyncpa [#allocation4], 1
    %s4755 = scalar_lea.sflag [#allocation4], 1
    %4756 = vsyncpa %s4755, 1

</llo_original>
